<compile_context>
chip_gen: v5e
topology: v5e:2x2
jax: 0.10.0
libtpu: 0.0.40
codegen_flags: <defaults>
</compile_context>

<pallas_src>
import functools

import jax
import jax.numpy as jnp
from jax.experimental import pallas as pl
from jax.experimental.pallas import tpu as pltpu


def _attention_kernel(x_ref, y_ref, wq_ref, wk_ref, wv_ref, wo_ref, b_ref,
                      o_ref, *, heads, dim_head):
    g, n, dim = x_ref.shape          # G episodes, N query tokens, model dim
    m = y_ref.shape[1]               # M key/value tokens

    # Flatten episodes x tokens into the row (sublane) axis; N=8 / M=16 are
    # sublane-tile multiples, so these reshapes are layout-clean.
    x2d = x_ref[...].reshape(g * n, dim).astype(jnp.bfloat16)   # [G*N, dim]
    y2d = y_ref[...].reshape(g * m, dim).astype(jnp.bfloat16)   # [G*M, dim]

    acc = jnp.zeros((g * n, dim), dtype=jnp.float32)
    for h in range(heads):           # static unroll, H is tiny
        wq_h = wq_ref[h]             # [dim, dh]  leading-axis index (no lane slicing)
        wk_h = wk_ref[h]             # [dim, dh]
        wv_h = wv_ref[h]             # [dim, dh]
        wo_h = wo_ref[h]             # [dh, dim]

        # Per-head projections (softmax scale already folded into wq).
        q_h = jnp.dot(x2d, wq_h, preferred_element_type=jnp.float32)   # [G*N, dh]
        k_h = jnp.dot(y2d, wk_h, preferred_element_type=jnp.float32)   # [G*M, dh]
        v_h = jnp.dot(y2d, wv_h, preferred_element_type=jnp.float32)   # [G*M, dh]

        q_h = q_h.astype(jnp.bfloat16).reshape(g, n, dim_head)
        k_h = k_h.astype(jnp.bfloat16).reshape(g, m, dim_head)
        v_h = v_h.astype(jnp.bfloat16).reshape(g, m, dim_head)

        # Per-episode attention, batched over the episode axis (bf16 MXU,
        # f32 accumulate).  No transpose of k is materialized.
        dots = jnp.einsum('gnd,gmd->gnm', q_h, k_h,
                          preferred_element_type=jnp.float32)           # [G, N, M]

        # Softmax in f32 (v5e VPU/EUP have no bf16).
        dots = dots - jnp.max(dots, axis=-1, keepdims=True)
        p = jnp.exp(dots)
        attn = p * pl.reciprocal(jnp.sum(p, axis=-1, keepdims=True), approx=False)

        out_h = jnp.einsum('gnm,gmd->gnd', attn.astype(jnp.bfloat16), v_h,
                           preferred_element_type=jnp.float32)          # [G, N, dh]

        # Fold output projection into the head loop (replaces the lane concat).
        acc = acc + jnp.dot(out_h.reshape(g * n, dim_head).astype(jnp.bfloat16),
                            wo_h, preferred_element_type=jnp.float32)   # [G*N, dim]

    out = acc + b_ref[...]                                              # + bias
    o_ref[...] = out.reshape(g, n, dim).astype(o_ref.dtype)


def prepare_params(wq, wk, wv, wo, bo, *, heads, dim_head):
    """One-time parameter transform (do this once, not per call):
      - fold the softmax scale (dim_head**-0.5) into wq,
      - split per-head along a LEADING axis so the kernel never lane-slices,
      - cast matmul operands to bf16.
    Inputs are in [in, out] layout: wq/wk/wv [dim, H*dh], wo [H*dh, dim], bo [dim].
    """
    dim = wq.shape[0]
    scale = dim_head ** (-0.5)
    wq_h = (wq * scale).reshape(dim, heads, dim_head).transpose(1, 0, 2).astype(jnp.bfloat16)
    wk_h = wk.reshape(dim, heads, dim_head).transpose(1, 0, 2).astype(jnp.bfloat16)
    wv_h = wv.reshape(dim, heads, dim_head).transpose(1, 0, 2).astype(jnp.bfloat16)
    wo_h = wo.reshape(heads, dim_head, dim).astype(jnp.bfloat16)
    bo_2d = bo.reshape(1, dim).astype(jnp.float32)
    return wq_h, wk_h, wv_h, wo_h, bo_2d


def attention_pallas(x, y, params, *, heads, dim_head, episodes_per_step=16):
    """Batched forward of the Attention module over B independent episodes.

    x: [B, N, dim] query tokens, y: [B, M, dim] key/value tokens.
    params: output of prepare_params().  Dropout p=0.0 -> identity.
    """
    wq_h, wk_h, wv_h, wo_h, bo_2d = params
    B, N, dim = x.shape
    M = y.shape[1]

    G = min(episodes_per_step, B)
    num_blocks = (B + G - 1) // G
    Bp = num_blocks * G
    if Bp != B:
        # Zero-pad episodes (softmax of zero logits is uniform -> no NaN);
        # padded outputs are sliced off below.
        x = jnp.concatenate([x, jnp.zeros((Bp - B, N, dim), x.dtype)], axis=0)
        y = jnp.concatenate([y, jnp.zeros((Bp - B, M, dim), y.dtype)], axis=0)

    kernel = functools.partial(_attention_kernel, heads=heads, dim_head=dim_head)
    wmap3 = lambda b: (0, 0, 0)   # constant block index -> weight DMA'd once, VMEM-resident

    out = pl.pallas_call(
        kernel,
        out_shape=jax.ShapeDtypeStruct((Bp, N, dim), x.dtype),
        grid_spec=pltpu.PrefetchScalarGridSpec(
            num_scalar_prefetch=0,
            grid=(num_blocks,),
            in_specs=[
                pl.BlockSpec((G, N, dim), lambda b: (b, 0, 0)),        # x episodes
                pl.BlockSpec((G, M, dim), lambda b: (b, 0, 0)),        # y episodes
                pl.BlockSpec((heads, dim, dim_head), wmap3),           # wq (scale folded)
                pl.BlockSpec((heads, dim, dim_head), wmap3),           # wk
                pl.BlockSpec((heads, dim, dim_head), wmap3),           # wv
                pl.BlockSpec((heads, dim_head, dim), wmap3),           # wo
                pl.BlockSpec((1, dim), lambda b: (0, 0)),              # bias
            ],
            out_specs=pl.BlockSpec((G, N, dim), lambda b: (b, 0, 0)),
        ),
        compiler_params=pltpu.CompilerParams(
            dimension_semantics=("parallel",),   # independent episodes -> megacore on v7x
        ),
    )(x, y, wq_h, wk_h, wv_h, wo_h, bo_2d)

    return out[:B] if Bp != B else out
    # TODO(synk): for a fully lane-dense (128-wide) output store, pack 4
    # episodes' dim=32 outputs along the lane axis; needs an un-interleave
    # transpose in the wrapper, skipped here since the output slab is tiny.


def attention_ref(x, y, wq, wk, wv, wo, bo, *, heads, dim_head):
    """Pure-JAX f32 reference matching the PyTorch forward, per episode."""
    scale = dim_head ** (-0.5)
    B, N, _ = x.shape
    M = y.shape[1]
    q = jnp.einsum('bnd,de->bne', x, wq).reshape(B, N, heads, dim_head)
    k = jnp.einsum('bmd,de->bme', y, wk).reshape(B, M, heads, dim_head)
    v = jnp.einsum('bmd,de->bme', y, wv).reshape(B, M, heads, dim_head)
    dots = jnp.einsum('bnhd,bmhd->bhnm', q, k) * scale
    attn = jax.nn.softmax(dots, axis=-1)
    out = jnp.einsum('bhnm,bmhd->bnhd', attn, v).reshape(B, N, heads * dim_head)
    return out @ wo + bo                     # dropout(p=0) = identity


if __name__ == "__main__":
    # Small shapes consistent with the module's forward (few-shot episodes).
    dim = 32
    heads = 4
    dim_head = 16
    inner_dim = heads * dim_head
    B = 64          # independent episodes batched into one pallas_call
    N, M = 8, 16    # query tokens, key/value tokens per episode

    key = jax.random.PRNGKey(0)
    kx, ky, kq, kk, kv, ko, kb = jax.random.split(key, 7)

    x = jax.random.normal(kx, (B, N, dim), dtype=jnp.float32)
    y = jax.random.normal(ky, (B, M, dim), dtype=jnp.float32)

    # Deterministic parameter init (torch Linear weight is [out, in]; we store
    # the transposed [in, out] form directly).
    s = 0.05
    wq = s * jax.random.normal(kq, (dim, inner_dim), dtype=jnp.float32)
    wk = s * jax.random.normal(kk, (dim, inner_dim), dtype=jnp.float32)
    wv = s * jax.random.normal(kv, (dim, inner_dim), dtype=jnp.float32)
    wo = s * jax.random.normal(ko, (inner_dim, dim), dtype=jnp.float32)
    bo = s * jax.random.normal(kb, (dim,), dtype=jnp.float32)

    params = prepare_params(wq, wk, wv, wo, bo, heads=heads, dim_head=dim_head)

    out = attention_pallas(x, y, params, heads=heads, dim_head=dim_head,
                           episodes_per_step=16)
    out = jax.block_until_ready(out)

    ref = attention_ref(x, y, wq, wk, wv, wo, bo, heads=heads, dim_head=dim_head)
    assert out.shape == (B, N, dim)
    # bf16 MXU operands (f32 accumulation / f32 softmax) -> small drift vs f32 ref.
    assert jnp.allclose(out, ref, atol=1e-2, rtol=1e-2), (
        "mismatch vs reference, max abs diff = %r" % float(jnp.max(jnp.abs(out - ref))))

    print("KERNEL_OK")
</pallas_src>

<mosaic_0001>
module attributes {stable_mosaic.version = 11 : i64} {
  func.func @_attention_kernel(%arg0: i32, %arg1: memref<16x8x32xf32, #tpu.memory_space<vmem>>, %arg2: memref<16x16x32xf32, #tpu.memory_space<vmem>>, %arg3: memref<4x32x16xbf16, #tpu.memory_space<vmem>>, %arg4: memref<4x32x16xbf16, #tpu.memory_space<vmem>>, %arg5: memref<4x32x16xbf16, #tpu.memory_space<vmem>>, %arg6: memref<4x16x32xbf16, #tpu.memory_space<vmem>>, %arg7: memref<1x32xf32, #tpu.memory_space<vmem>>, %arg8: memref<16x8x32xf32, #tpu.memory_space<vmem>>) attributes {dimension_semantics = [#tpu.dimension_semantics<parallel>], iteration_bounds = array<i64: 4>, scalar_prefetch = 0 : i64, scratch_operands = 0 : i64, tpu.core_type = #tpu.core_type<tc>, window_params = [{transform_indices = @transform_0, window_bounds = array<i64: 16, 8, 32>}, {transform_indices = @transform_1, window_bounds = array<i64: 16, 16, 32>}, {pipeline_mode = #tpu.pipeline_mode<synchronous>, transform_indices = @transform_2, window_bounds = array<i64: 4, 32, 16>}, {pipeline_mode = #tpu.pipeline_mode<synchronous>, transform_indices = @transform_3, window_bounds = array<i64: 4, 32, 16>}, {pipeline_mode = #tpu.pipeline_mode<synchronous>, transform_indices = @transform_4, window_bounds = array<i64: 4, 32, 16>}, {pipeline_mode = #tpu.pipeline_mode<synchronous>, transform_indices = @transform_5, window_bounds = array<i64: 4, 16, 32>}, {pipeline_mode = #tpu.pipeline_mode<synchronous>, transform_indices = @transform_6, window_bounds = array<i64: 1, 32>}, {transform_indices = @transform_7, window_bounds = array<i64: 16, 8, 32>}]} {
    %c0 = arith.constant 0 : index
    %c0_0 = arith.constant 0 : index
    %c0_1 = arith.constant 0 : index
    %0 = vector.load %arg1[%c0, %c0_0, %c0_1] : memref<16x8x32xf32, #tpu.memory_space<vmem>>, vector<16x8x32xf32>
    %1 = vector.shape_cast %0 : vector<16x8x32xf32> to vector<128x32xf32>
    %2 = arith.truncf %1 : vector<128x32xf32> to vector<128x32xbf16>
    %c0_2 = arith.constant 0 : index
    %c0_3 = arith.constant 0 : index
    %c0_4 = arith.constant 0 : index
    %3 = vector.load %arg2[%c0_2, %c0_3, %c0_4] : memref<16x16x32xf32, #tpu.memory_space<vmem>>, vector<16x16x32xf32>
    %4 = vector.shape_cast %3 : vector<16x16x32xf32> to vector<256x32xf32>
    %5 = arith.truncf %4 : vector<256x32xf32> to vector<256x32xbf16>
    %cst = arith.constant 0.000000e+00 : f32
    %6 = vector.broadcast %cst : f32 to vector<128x32xf32>
    %c0_5 = arith.constant 0 : index
    %c0_6 = arith.constant 0 : index
    %c0_7 = arith.constant 0 : index
    %7 = vector.load %arg3[%c0_5, %c0_6, %c0_7] : memref<4x32x16xbf16, #tpu.memory_space<vmem>>, vector<1x32x16xbf16>
    %8 = vector.shape_cast %7 : vector<1x32x16xbf16> to vector<32x16xbf16>
    %c0_8 = arith.constant 0 : index
    %c0_9 = arith.constant 0 : index
    %c0_10 = arith.constant 0 : index
    %9 = vector.load %arg4[%c0_8, %c0_9, %c0_10] : memref<4x32x16xbf16, #tpu.memory_space<vmem>>, vector<1x32x16xbf16>
    %10 = vector.shape_cast %9 : vector<1x32x16xbf16> to vector<32x16xbf16>
    %c0_11 = arith.constant 0 : index
    %c0_12 = arith.constant 0 : index
    %c0_13 = arith.constant 0 : index
    %11 = vector.load %arg5[%c0_11, %c0_12, %c0_13] : memref<4x32x16xbf16, #tpu.memory_space<vmem>>, vector<1x32x16xbf16>
    %12 = vector.shape_cast %11 : vector<1x32x16xbf16> to vector<32x16xbf16>
    %c0_14 = arith.constant 0 : index
    %c0_15 = arith.constant 0 : index
    %c0_16 = arith.constant 0 : index
    %13 = vector.load %arg6[%c0_14, %c0_15, %c0_16] : memref<4x16x32xbf16, #tpu.memory_space<vmem>>, vector<1x16x32xbf16>
    %14 = vector.shape_cast %13 : vector<1x16x32xbf16> to vector<16x32xbf16>
    %cst_17 = arith.constant dense<0.000000e+00> : vector<128x16xf32>
    %15 = tpu.matmul %2, %8, %cst_17 {dimension_numbers = #tpu.dot_dimension_numbers<[1], [0], [0], [1], [0, 0, 1, 1], [], []>} : vector<128x32xbf16>, vector<32x16xbf16>, vector<128x16xf32> -> vector<128x16xf32>
    %cst_18 = arith.constant dense<0.000000e+00> : vector<256x16xf32>
    %16 = tpu.matmul %5, %10, %cst_18 {dimension_numbers = #tpu.dot_dimension_numbers<[1], [0], [0], [1], [0, 0, 1, 1], [], []>} : vector<256x32xbf16>, vector<32x16xbf16>, vector<256x16xf32> -> vector<256x16xf32>
    %cst_19 = arith.constant dense<0.000000e+00> : vector<256x16xf32>
    %17 = tpu.matmul %5, %12, %cst_19 {dimension_numbers = #tpu.dot_dimension_numbers<[1], [0], [0], [1], [0, 0, 1, 1], [], []>} : vector<256x32xbf16>, vector<32x16xbf16>, vector<256x16xf32> -> vector<256x16xf32>
    %18 = arith.truncf %15 : vector<128x16xf32> to vector<128x16xbf16>
    %19 = vector.shape_cast %18 : vector<128x16xbf16> to vector<16x8x16xbf16>
    %20 = arith.truncf %16 : vector<256x16xf32> to vector<256x16xbf16>
    %21 = vector.shape_cast %20 : vector<256x16xbf16> to vector<16x16x16xbf16>
    %22 = arith.truncf %17 : vector<256x16xf32> to vector<256x16xbf16>
    %23 = vector.shape_cast %22 : vector<256x16xbf16> to vector<16x16x16xbf16>
    "tpu.trace_start"() <{level = 10 : i32, message = "gnd,gmd->gnm"}> : () -> ()
    %cst_20 = arith.constant dense<0.000000e+00> : vector<16x8x16xf32>
    %24 = tpu.matmul %19, %21, %cst_20 {dimension_numbers = #tpu.dot_dimension_numbers<[2], [2], [1], [1], [0, 0, 0, 1, 1, 1], [0], [0]>} : vector<16x8x16xbf16>, vector<16x16x16xbf16>, vector<16x8x16xf32> -> vector<16x8x16xf32>
    "tpu.trace_stop"() : () -> ()
    %cst_21 = arith.constant dense<0xFF800000> : vector<16x8xf32>
    %25 = vector.multi_reduction <maximumf>, %24, %cst_21 [2] : vector<16x8x16xf32> to vector<16x8xf32>
    %26 = vector.shape_cast %25 : vector<16x8xf32> to vector<16x8x1xf32>
    %27 = vector.broadcast %26 : vector<16x8x1xf32> to vector<16x8x16xf32>
    %28 = arith.subf %24, %27 : vector<16x8x16xf32>
    %29 = math.exp %28 : vector<16x8x16xf32>
    %cst_22 = arith.constant dense<0.000000e+00> : vector<16x8xf32>
    %30 = vector.multi_reduction <add>, %29, %cst_22 [2] : vector<16x8x16xf32> to vector<16x8xf32>
    %31 = vector.shape_cast %30 : vector<16x8xf32> to vector<16x8x1xf32>
    %32 = tpu.reciprocal %31 : vector<16x8x1xf32> -> vector<16x8x1xf32>
    %33 = vector.broadcast %32 : vector<16x8x1xf32> to vector<16x8x16xf32>
    %34 = arith.mulf %29, %33 : vector<16x8x16xf32>
    %35 = arith.truncf %34 : vector<16x8x16xf32> to vector<16x8x16xbf16>
    "tpu.trace_start"() <{level = 10 : i32, message = "gnm,gmd->gnd"}> : () -> ()
    %cst_23 = arith.constant dense<0.000000e+00> : vector<16x8x16xf32>
    %36 = tpu.matmul %35, %23, %cst_23 {dimension_numbers = #tpu.dot_dimension_numbers<[2], [1], [1], [2], [0, 0, 0, 1, 1, 2], [0], [0]>} : vector<16x8x16xbf16>, vector<16x16x16xbf16>, vector<16x8x16xf32> -> vector<16x8x16xf32>
    "tpu.trace_stop"() : () -> ()
    %37 = vector.shape_cast %36 : vector<16x8x16xf32> to vector<128x16xf32>
    %38 = arith.truncf %37 : vector<128x16xf32> to vector<128x16xbf16>
    %cst_24 = arith.constant dense<0.000000e+00> : vector<128x32xf32>
    %39 = tpu.matmul %38, %14, %cst_24 {dimension_numbers = #tpu.dot_dimension_numbers<[1], [0], [0], [1], [0, 0, 1, 1], [], []>} : vector<128x16xbf16>, vector<16x32xbf16>, vector<128x32xf32> -> vector<128x32xf32>
    %40 = arith.addf %6, %39 : vector<128x32xf32>
    %c1 = arith.constant 1 : index
    %c0_25 = arith.constant 0 : index
    %c0_26 = arith.constant 0 : index
    %41 = vector.load %arg3[%c1, %c0_25, %c0_26] : memref<4x32x16xbf16, #tpu.memory_space<vmem>>, vector<1x32x16xbf16>
    %42 = vector.shape_cast %41 : vector<1x32x16xbf16> to vector<32x16xbf16>
    %c1_27 = arith.constant 1 : index
    %c0_28 = arith.constant 0 : index
    %c0_29 = arith.constant 0 : index
    %43 = vector.load %arg4[%c1_27, %c0_28, %c0_29] : memref<4x32x16xbf16, #tpu.memory_space<vmem>>, vector<1x32x16xbf16>
    %44 = vector.shape_cast %43 : vector<1x32x16xbf16> to vector<32x16xbf16>
    %c1_30 = arith.constant 1 : index
    %c0_31 = arith.constant 0 : index
    %c0_32 = arith.constant 0 : index
    %45 = vector.load %arg5[%c1_30, %c0_31, %c0_32] : memref<4x32x16xbf16, #tpu.memory_space<vmem>>, vector<1x32x16xbf16>
    %46 = vector.shape_cast %45 : vector<1x32x16xbf16> to vector<32x16xbf16>
    %c1_33 = arith.constant 1 : index
    %c0_34 = arith.constant 0 : index
    %c0_35 = arith.constant 0 : index
    %47 = vector.load %arg6[%c1_33, %c0_34, %c0_35] : memref<4x16x32xbf16, #tpu.memory_space<vmem>>, vector<1x16x32xbf16>
    %48 = vector.shape_cast %47 : vector<1x16x32xbf16> to vector<16x32xbf16>
    %cst_36 = arith.constant dense<0.000000e+00> : vector<128x16xf32>
    %49 = tpu.matmul %2, %42, %cst_36 {dimension_numbers = #tpu.dot_dimension_numbers<[1], [0], [0], [1], [0, 0, 1, 1], [], []>} : vector<128x32xbf16>, vector<32x16xbf16>, vector<128x16xf32> -> vector<128x16xf32>
    %cst_37 = arith.constant dense<0.000000e+00> : vector<256x16xf32>
    %50 = tpu.matmul %5, %44, %cst_37 {dimension_numbers = #tpu.dot_dimension_numbers<[1], [0], [0], [1], [0, 0, 1, 1], [], []>} : vector<256x32xbf16>, vector<32x16xbf16>, vector<256x16xf32> -> vector<256x16xf32>
    %cst_38 = arith.constant dense<0.000000e+00> : vector<256x16xf32>
    %51 = tpu.matmul %5, %46, %cst_38 {dimension_numbers = #tpu.dot_dimension_numbers<[1], [0], [0], [1], [0, 0, 1, 1], [], []>} : vector<256x32xbf16>, vector<32x16xbf16>, vector<256x16xf32> -> vector<256x16xf32>
    %52 = arith.truncf %49 : vector<128x16xf32> to vector<128x16xbf16>
    %53 = vector.shape_cast %52 : vector<128x16xbf16> to vector<16x8x16xbf16>
    %54 = arith.truncf %50 : vector<256x16xf32> to vector<256x16xbf16>
    %55 = vector.shape_cast %54 : vector<256x16xbf16> to vector<16x16x16xbf16>
    %56 = arith.truncf %51 : vector<256x16xf32> to vector<256x16xbf16>
    %57 = vector.shape_cast %56 : vector<256x16xbf16> to vector<16x16x16xbf16>
    "tpu.trace_start"() <{level = 10 : i32, message = "gnd,gmd->gnm"}> : () -> ()
    %cst_39 = arith.constant dense<0.000000e+00> : vector<16x8x16xf32>
    %58 = tpu.matmul %53, %55, %cst_39 {dimension_numbers = #tpu.dot_dimension_numbers<[2], [2], [1], [1], [0, 0, 0, 1, 1, 1], [0], [0]>} : vector<16x8x16xbf16>, vector<16x16x16xbf16>, vector<16x8x16xf32> -> vector<16x8x16xf32>
    "tpu.trace_stop"() : () -> ()
    %cst_40 = arith.constant dense<0xFF800000> : vector<16x8xf32>
    %59 = vector.multi_reduction <maximumf>, %58, %cst_40 [2] : vector<16x8x16xf32> to vector<16x8xf32>
    %60 = vector.shape_cast %59 : vector<16x8xf32> to vector<16x8x1xf32>
    %61 = vector.broadcast %60 : vector<16x8x1xf32> to vector<16x8x16xf32>
    %62 = arith.subf %58, %61 : vector<16x8x16xf32>
    %63 = math.exp %62 : vector<16x8x16xf32>
    %cst_41 = arith.constant dense<0.000000e+00> : vector<16x8xf32>
    %64 = vector.multi_reduction <add>, %63, %cst_41 [2] : vector<16x8x16xf32> to vector<16x8xf32>
    %65 = vector.shape_cast %64 : vector<16x8xf32> to vector<16x8x1xf32>
    %66 = tpu.reciprocal %65 : vector<16x8x1xf32> -> vector<16x8x1xf32>
    %67 = vector.broadcast %66 : vector<16x8x1xf32> to vector<16x8x16xf32>
    %68 = arith.mulf %63, %67 : vector<16x8x16xf32>
    %69 = arith.truncf %68 : vector<16x8x16xf32> to vector<16x8x16xbf16>
    "tpu.trace_start"() <{level = 10 : i32, message = "gnm,gmd->gnd"}> : () -> ()
    %cst_42 = arith.constant dense<0.000000e+00> : vector<16x8x16xf32>
    %70 = tpu.matmul %69, %57, %cst_42 {dimension_numbers = #tpu.dot_dimension_numbers<[2], [1], [1], [2], [0, 0, 0, 1, 1, 2], [0], [0]>} : vector<16x8x16xbf16>, vector<16x16x16xbf16>, vector<16x8x16xf32> -> vector<16x8x16xf32>
    "tpu.trace_stop"() : () -> ()
    %71 = vector.shape_cast %70 : vector<16x8x16xf32> to vector<128x16xf32>
    %72 = arith.truncf %71 : vector<128x16xf32> to vector<128x16xbf16>
    %cst_43 = arith.constant dense<0.000000e+00> : vector<128x32xf32>
    %73 = tpu.matmul %72, %48, %cst_43 {dimension_numbers = #tpu.dot_dimension_numbers<[1], [0], [0], [1], [0, 0, 1, 1], [], []>} : vector<128x16xbf16>, vector<16x32xbf16>, vector<128x32xf32> -> vector<128x32xf32>
    %74 = arith.addf %40, %73 : vector<128x32xf32>
    %c2 = arith.constant 2 : index
    %c0_44 = arith.constant 0 : index
    %c0_45 = arith.constant 0 : index
    %75 = vector.load %arg3[%c2, %c0_44, %c0_45] : memref<4x32x16xbf16, #tpu.memory_space<vmem>>, vector<1x32x16xbf16>
    %76 = vector.shape_cast %75 : vector<1x32x16xbf16> to vector<32x16xbf16>
    %c2_46 = arith.constant 2 : index
    %c0_47 = arith.constant 0 : index
    %c0_48 = arith.constant 0 : index
    %77 = vector.load %arg4[%c2_46, %c0_47, %c0_48] : memref<4x32x16xbf16, #tpu.memory_space<vmem>>, vector<1x32x16xbf16>
    %78 = vector.shape_cast %77 : vector<1x32x16xbf16> to vector<32x16xbf16>
    %c2_49 = arith.constant 2 : index
    %c0_50 = arith.constant 0 : index
    %c0_51 = arith.constant 0 : index
    %79 = vector.load %arg5[%c2_49, %c0_50, %c0_51] : memref<4x32x16xbf16, #tpu.memory_space<vmem>>, vector<1x32x16xbf16>
    %80 = vector.shape_cast %79 : vector<1x32x16xbf16> to vector<32x16xbf16>
    %c2_52 = arith.constant 2 : index
    %c0_53 = arith.constant 0 : index
    %c0_54 = arith.constant 0 : index
    %81 = vector.load %arg6[%c2_52, %c0_53, %c0_54] : memref<4x16x32xbf16, #tpu.memory_space<vmem>>, vector<1x16x32xbf16>
    %82 = vector.shape_cast %81 : vector<1x16x32xbf16> to vector<16x32xbf16>
    %cst_55 = arith.constant dense<0.000000e+00> : vector<128x16xf32>
    %83 = tpu.matmul %2, %76, %cst_55 {dimension_numbers = #tpu.dot_dimension_numbers<[1], [0], [0], [1], [0, 0, 1, 1], [], []>} : vector<128x32xbf16>, vector<32x16xbf16>, vector<128x16xf32> -> vector<128x16xf32>
    %cst_56 = arith.constant dense<0.000000e+00> : vector<256x16xf32>
    %84 = tpu.matmul %5, %78, %cst_56 {dimension_numbers = #tpu.dot_dimension_numbers<[1], [0], [0], [1], [0, 0, 1, 1], [], []>} : vector<256x32xbf16>, vector<32x16xbf16>, vector<256x16xf32> -> vector<256x16xf32>
    %cst_57 = arith.constant dense<0.000000e+00> : vector<256x16xf32>
    %85 = tpu.matmul %5, %80, %cst_57 {dimension_numbers = #tpu.dot_dimension_numbers<[1], [0], [0], [1], [0, 0, 1, 1], [], []>} : vector<256x32xbf16>, vector<32x16xbf16>, vector<256x16xf32> -> vector<256x16xf32>
    %86 = arith.truncf %83 : vector<128x16xf32> to vector<128x16xbf16>
    %87 = vector.shape_cast %86 : vector<128x16xbf16> to vector<16x8x16xbf16>
    %88 = arith.truncf %84 : vector<256x16xf32> to vector<256x16xbf16>
    %89 = vector.shape_cast %88 : vector<256x16xbf16> to vector<16x16x16xbf16>
    %90 = arith.truncf %85 : vector<256x16xf32> to vector<256x16xbf16>
    %91 = vector.shape_cast %90 : vector<256x16xbf16> to vector<16x16x16xbf16>
    "tpu.trace_start"() <{level = 10 : i32, message = "gnd,gmd->gnm"}> : () -> ()
    %cst_58 = arith.constant dense<0.000000e+00> : vector<16x8x16xf32>
    %92 = tpu.matmul %87, %89, %cst_58 {dimension_numbers = #tpu.dot_dimension_numbers<[2], [2], [1], [1], [0, 0, 0, 1, 1, 1], [0], [0]>} : vector<16x8x16xbf16>, vector<16x16x16xbf16>, vector<16x8x16xf32> -> vector<16x8x16xf32>
    "tpu.trace_stop"() : () -> ()
    %cst_59 = arith.constant dense<0xFF800000> : vector<16x8xf32>
    %93 = vector.multi_reduction <maximumf>, %92, %cst_59 [2] : vector<16x8x16xf32> to vector<16x8xf32>
    %94 = vector.shape_cast %93 : vector<16x8xf32> to vector<16x8x1xf32>
    %95 = vector.broadcast %94 : vector<16x8x1xf32> to vector<16x8x16xf32>
    %96 = arith.subf %92, %95 : vector<16x8x16xf32>
    %97 = math.exp %96 : vector<16x8x16xf32>
    %cst_60 = arith.constant dense<0.000000e+00> : vector<16x8xf32>
    %98 = vector.multi_reduction <add>, %97, %cst_60 [2] : vector<16x8x16xf32> to vector<16x8xf32>
    %99 = vector.shape_cast %98 : vector<16x8xf32> to vector<16x8x1xf32>
    %100 = tpu.reciprocal %99 : vector<16x8x1xf32> -> vector<16x8x1xf32>
    %101 = vector.broadcast %100 : vector<16x8x1xf32> to vector<16x8x16xf32>
    %102 = arith.mulf %97, %101 : vector<16x8x16xf32>
    %103 = arith.truncf %102 : vector<16x8x16xf32> to vector<16x8x16xbf16>
    "tpu.trace_start"() <{level = 10 : i32, message = "gnm,gmd->gnd"}> : () -> ()
    %cst_61 = arith.constant dense<0.000000e+00> : vector<16x8x16xf32>
    %104 = tpu.matmul %103, %91, %cst_61 {dimension_numbers = #tpu.dot_dimension_numbers<[2], [1], [1], [2], [0, 0, 0, 1, 1, 2], [0], [0]>} : vector<16x8x16xbf16>, vector<16x16x16xbf16>, vector<16x8x16xf32> -> vector<16x8x16xf32>
    "tpu.trace_stop"() : () -> ()
    %105 = vector.shape_cast %104 : vector<16x8x16xf32> to vector<128x16xf32>
    %106 = arith.truncf %105 : vector<128x16xf32> to vector<128x16xbf16>
    %cst_62 = arith.constant dense<0.000000e+00> : vector<128x32xf32>
    %107 = tpu.matmul %106, %82, %cst_62 {dimension_numbers = #tpu.dot_dimension_numbers<[1], [0], [0], [1], [0, 0, 1, 1], [], []>} : vector<128x16xbf16>, vector<16x32xbf16>, vector<128x32xf32> -> vector<128x32xf32>
    %108 = arith.addf %74, %107 : vector<128x32xf32>
    %c3 = arith.constant 3 : index
    %c0_63 = arith.constant 0 : index
    %c0_64 = arith.constant 0 : index
    %109 = vector.load %arg3[%c3, %c0_63, %c0_64] : memref<4x32x16xbf16, #tpu.memory_space<vmem>>, vector<1x32x16xbf16>
    %110 = vector.shape_cast %109 : vector<1x32x16xbf16> to vector<32x16xbf16>
    %c3_65 = arith.constant 3 : index
    %c0_66 = arith.constant 0 : index
    %c0_67 = arith.constant 0 : index
    %111 = vector.load %arg4[%c3_65, %c0_66, %c0_67] : memref<4x32x16xbf16, #tpu.memory_space<vmem>>, vector<1x32x16xbf16>
    %112 = vector.shape_cast %111 : vector<1x32x16xbf16> to vector<32x16xbf16>
    %c3_68 = arith.constant 3 : index
    %c0_69 = arith.constant 0 : index
    %c0_70 = arith.constant 0 : index
    %113 = vector.load %arg5[%c3_68, %c0_69, %c0_70] : memref<4x32x16xbf16, #tpu.memory_space<vmem>>, vector<1x32x16xbf16>
    %114 = vector.shape_cast %113 : vector<1x32x16xbf16> to vector<32x16xbf16>
    %c3_71 = arith.constant 3 : index
    %c0_72 = arith.constant 0 : index
    %c0_73 = arith.constant 0 : index
    %115 = vector.load %arg6[%c3_71, %c0_72, %c0_73] : memref<4x16x32xbf16, #tpu.memory_space<vmem>>, vector<1x16x32xbf16>
    %116 = vector.shape_cast %115 : vector<1x16x32xbf16> to vector<16x32xbf16>
    %cst_74 = arith.constant dense<0.000000e+00> : vector<128x16xf32>
    %117 = tpu.matmul %2, %110, %cst_74 {dimension_numbers = #tpu.dot_dimension_numbers<[1], [0], [0], [1], [0, 0, 1, 1], [], []>} : vector<128x32xbf16>, vector<32x16xbf16>, vector<128x16xf32> -> vector<128x16xf32>
    %cst_75 = arith.constant dense<0.000000e+00> : vector<256x16xf32>
    %118 = tpu.matmul %5, %112, %cst_75 {dimension_numbers = #tpu.dot_dimension_numbers<[1], [0], [0], [1], [0, 0, 1, 1], [], []>} : vector<256x32xbf16>, vector<32x16xbf16>, vector<256x16xf32> -> vector<256x16xf32>
    %cst_76 = arith.constant dense<0.000000e+00> : vector<256x16xf32>
    %119 = tpu.matmul %5, %114, %cst_76 {dimension_numbers = #tpu.dot_dimension_numbers<[1], [0], [0], [1], [0, 0, 1, 1], [], []>} : vector<256x32xbf16>, vector<32x16xbf16>, vector<256x16xf32> -> vector<256x16xf32>
    %120 = arith.truncf %117 : vector<128x16xf32> to vector<128x16xbf16>
    %121 = vector.shape_cast %120 : vector<128x16xbf16> to vector<16x8x16xbf16>
    %122 = arith.truncf %118 : vector<256x16xf32> to vector<256x16xbf16>
    %123 = vector.shape_cast %122 : vector<256x16xbf16> to vector<16x16x16xbf16>
    %124 = arith.truncf %119 : vector<256x16xf32> to vector<256x16xbf16>
    %125 = vector.shape_cast %124 : vector<256x16xbf16> to vector<16x16x16xbf16>
    "tpu.trace_start"() <{level = 10 : i32, message = "gnd,gmd->gnm"}> : () -> ()
    %cst_77 = arith.constant dense<0.000000e+00> : vector<16x8x16xf32>
    %126 = tpu.matmul %121, %123, %cst_77 {dimension_numbers = #tpu.dot_dimension_numbers<[2], [2], [1], [1], [0, 0, 0, 1, 1, 1], [0], [0]>} : vector<16x8x16xbf16>, vector<16x16x16xbf16>, vector<16x8x16xf32> -> vector<16x8x16xf32>
    "tpu.trace_stop"() : () -> ()
    %cst_78 = arith.constant dense<0xFF800000> : vector<16x8xf32>
    %127 = vector.multi_reduction <maximumf>, %126, %cst_78 [2] : vector<16x8x16xf32> to vector<16x8xf32>
    %128 = vector.shape_cast %127 : vector<16x8xf32> to vector<16x8x1xf32>
    %129 = vector.broadcast %128 : vector<16x8x1xf32> to vector<16x8x16xf32>
    %130 = arith.subf %126, %129 : vector<16x8x16xf32>
    %131 = math.exp %130 : vector<16x8x16xf32>
    %cst_79 = arith.constant dense<0.000000e+00> : vector<16x8xf32>
    %132 = vector.multi_reduction <add>, %131, %cst_79 [2] : vector<16x8x16xf32> to vector<16x8xf32>
    %133 = vector.shape_cast %132 : vector<16x8xf32> to vector<16x8x1xf32>
    %134 = tpu.reciprocal %133 : vector<16x8x1xf32> -> vector<16x8x1xf32>
    %135 = vector.broadcast %134 : vector<16x8x1xf32> to vector<16x8x16xf32>
    %136 = arith.mulf %131, %135 : vector<16x8x16xf32>
    %137 = arith.truncf %136 : vector<16x8x16xf32> to vector<16x8x16xbf16>
    "tpu.trace_start"() <{level = 10 : i32, message = "gnm,gmd->gnd"}> : () -> ()
    %cst_80 = arith.constant dense<0.000000e+00> : vector<16x8x16xf32>
    %138 = tpu.matmul %137, %125, %cst_80 {dimension_numbers = #tpu.dot_dimension_numbers<[2], [1], [1], [2], [0, 0, 0, 1, 1, 2], [0], [0]>} : vector<16x8x16xbf16>, vector<16x16x16xbf16>, vector<16x8x16xf32> -> vector<16x8x16xf32>
    "tpu.trace_stop"() : () -> ()
    %139 = vector.shape_cast %138 : vector<16x8x16xf32> to vector<128x16xf32>
    %140 = arith.truncf %139 : vector<128x16xf32> to vector<128x16xbf16>
    %cst_81 = arith.constant dense<0.000000e+00> : vector<128x32xf32>
    %141 = tpu.matmul %140, %116, %cst_81 {dimension_numbers = #tpu.dot_dimension_numbers<[1], [0], [0], [1], [0, 0, 1, 1], [], []>} : vector<128x16xbf16>, vector<16x32xbf16>, vector<128x32xf32> -> vector<128x32xf32>
    %142 = arith.addf %108, %141 : vector<128x32xf32>
    %c0_82 = arith.constant 0 : index
    %c0_83 = arith.constant 0 : index
    %143 = vector.load %arg7[%c0_82, %c0_83] : memref<1x32xf32, #tpu.memory_space<vmem>>, vector<1x32xf32>
    %144 = vector.broadcast %143 : vector<1x32xf32> to vector<128x32xf32>
    %145 = arith.addf %142, %144 : vector<128x32xf32>
    %146 = vector.shape_cast %145 : vector<128x32xf32> to vector<16x8x32xf32>
    %c0_84 = arith.constant 0 : index
    %c0_85 = arith.constant 0 : index
    %c0_86 = arith.constant 0 : index
    %147 = vector.load %arg8[%c0_84, %c0_85, %c0_86] : memref<16x8x32xf32, #tpu.memory_space<vmem>>, vector<16x8x32xf32>
    tpu.vector_store %arg8[%c0_84, %c0_85, %c0_86], %146 {strides = array<i32>} : memref<16x8x32xf32, #tpu.memory_space<vmem>>, vector<16x8x32xf32>,
    return
  }
  func.func @transform_0(%arg0: i32) -> (i32, i32, i32) {
    %c0_i32 = arith.constant 0 : i32
    %c0_i32_0 = arith.constant 0 : i32
    %c0_i32_1 = arith.constant 0 : i32
    return %arg0, %c0_i32, %c0_i32_0 : i32, i32, i32
  }
  func.func @transform_1(%arg0: i32) -> (i32, i32, i32) {
    %c0_i32 = arith.constant 0 : i32
    %c0_i32_0 = arith.constant 0 : i32
    %c0_i32_1 = arith.constant 0 : i32
    return %arg0, %c0_i32, %c0_i32_0 : i32, i32, i32
  }
  func.func @transform_2(%arg0: i32) -> (i32, i32, i32) {
    %c0_i32 = arith.constant 0 : i32
    %c0_i32_0 = arith.constant 0 : i32
    %c0_i32_1 = arith.constant 0 : i32
    %c0_i32_2 = arith.constant 0 : i32
    return %c0_i32, %c0_i32_0, %c0_i32_1 : i32, i32, i32
  }
  func.func @transform_3(%arg0: i32) -> (i32, i32, i32) {
    %c0_i32 = arith.constant 0 : i32
    %c0_i32_0 = arith.constant 0 : i32
    %c0_i32_1 = arith.constant 0 : i32
    %c0_i32_2 = arith.constant 0 : i32
    return %c0_i32, %c0_i32_0, %c0_i32_1 : i32, i32, i32
  }
  func.func @transform_4(%arg0: i32) -> (i32, i32, i32) {
    %c0_i32 = arith.constant 0 : i32
    %c0_i32_0 = arith.constant 0 : i32
    %c0_i32_1 = arith.constant 0 : i32
    %c0_i32_2 = arith.constant 0 : i32
    return %c0_i32, %c0_i32_0, %c0_i32_1 : i32, i32, i32
  }
  func.func @transform_5(%arg0: i32) -> (i32, i32, i32) {
    %c0_i32 = arith.constant 0 : i32
    %c0_i32_0 = arith.constant 0 : i32
    %c0_i32_1 = arith.constant 0 : i32
    %c0_i32_2 = arith.constant 0 : i32
    return %c0_i32, %c0_i32_0, %c0_i32_1 : i32, i32, i32
  }
  func.func @transform_6(%arg0: i32) -> (i32, i32) {
    %c0_i32 = arith.constant 0 : i32
    %c0_i32_0 = arith.constant 0 : i32
    %c0_i32_1 = arith.constant 0 : i32
    return %c0_i32, %c0_i32_0 : i32, i32
  }
  func.func @transform_7(%arg0: i32) -> (i32, i32, i32) {
    %c0_i32 = arith.constant 0 : i32
    %c0_i32_0 = arith.constant 0 : i32
    %c0_i32_1 = arith.constant 0 : i32
    return %arg0, %c0_i32, %c0_i32_0 : i32, i32, i32
  }
}

</mosaic_0001>

<llo_original>
// kernel: tpu_custom_call.1
$region0: #{tpu_custom_call.1}
  #allocation0 [shape = 'u32[]', space=smem, size = 0x4, offset = 0x4, fixed_abs, tag = 'smem constant byte address 0x4 - core index']
  #allocation1 [shape = 'u32[72,128]{1,0:T(1,128)}', space=vmem, size = 0x9000, scoped, tag = 'internal scratch']
  %s0 = inlined_call_operand.vmem [shape: f32[64,8,32], index: 0, kind: input, shape index: {}]
  %s1 = inlined_call_operand.vmem [shape: f32[64,16,32], index: 1, kind: input, shape index: {}]
  %s2 = inlined_call_operand.vmem [shape: bf16[4,32,16], index: 2, kind: input, shape index: {}]
  %s3 = inlined_call_operand.vmem [shape: bf16[4,32,16], index: 3, kind: input, shape index: {}]
  %s4 = inlined_call_operand.vmem [shape: bf16[4,32,16], index: 4, kind: input, shape index: {}]
  %s5 = inlined_call_operand.vmem [shape: bf16[4,16,32], index: 5, kind: input, shape index: {}]
  %s6 = inlined_call_operand.vmem [shape: f32[1,32], index: 6, kind: input, shape index: {}]
  %s7 = inlined_call_operand.vmem [shape: f32[64,8,32], index: 7, kind: output, shape index: {}]
  %s8 = sld [smem:[#allocation0]]
  $region61: #{tpu_custom_call.1} parent=0
    _
  %s10 = ssub.s32 1, %s8
  %s11 = scalar_select 0, %s10, %s8
  loop: start=0, step=1, limit=6
  $region2: #{tpu_custom_call.1} parent=0 // loop_pre_header
    _
  $region3: #{tpu_custom_call.1} parent=0 // loop_header
    %s13 = sphi 0, %s17
    %p14 = scmp.ge.s32.totalorder %s13, 6
    %s23 = sphi 0, %s25
    %s26 = sphi 0, %s23
    %s27 = sphi 0, %s26
    %s43 = sphi 0, %s27
    %s49 = sphi 0, %s51
    %s52 = sphi 0, %s49
    %s53 = sphi 0, %s52
    %s69 = sphi 0, %s53
    %s73 = sphi 0, %s73
    %s75 = sphi 0, %s73
    %s76 = sphi 0, %s75
    %s90 = sphi 0, %s76
    %s94 = sphi 0, %s94
    %s96 = sphi 0, %s94
    %s97 = sphi 0, %s96
    %s111 = sphi 0, %s97
    %s115 = sphi 0, %s115
    %s117 = sphi 0, %s115
    %s118 = sphi 0, %s117
    %s132 = sphi 0, %s118
    %s136 = sphi 0, %s136
    %s138 = sphi 0, %s136
    %s139 = sphi 0, %s138
    %s153 = sphi 0, %s139
    %s157 = sphi 0, %s157
    %s159 = sphi 0, %s157
    %s160 = sphi 0, %s159
    %s174 = sphi 0, %s160
    %s180 = sphi 0, %s182
    %s183 = sphi 0, %s180
    %s184 = sphi 0, %s183
    %s200 = sphi 0, %s184
  $region4: #{tpu_custom_call.1} parent=0 // loop_header_branch
    %16 = sbr.rel (%p14) target = $region8
  $region5: #{tpu_custom_call.1} parent=0 // loop_body
    %s18 = ssub.s32 %s13, 1
    %s19 = ssub.s32 %s13, 2
    %s20 = sadd.s32 %s13, 1
    %s21 = ssub.s32 %s13, %s20
    %p22 = scmp.eq.s32.totalorder %s21, 0
    %s24 = sadd.s32 %s23, 1
    %s25 = scalar_select %p22, %s23, %s24
    %p28 = pneg %p22
    %p29 = scmp.eq.s32.totalorder %s13, 3
    %p30 = por %p28, %p29
    %p31 = scmp.ne.s32.totalorder %s23, %s26
    %p32 = scmp.eq.s32.totalorder %s13, 0
    %p33 = por %p31, %p32
    %p34 = scmp.ne.s32.totalorder %s23, %s26
    %p35 = scmp.eq.s32.totalorder %s18, 3
    %p36 = por %p34, %p35
    %p37 = scmp.ne.s32.totalorder %s26, %s27
    %p38 = scmp.eq.s32.totalorder %s18, 0
    %p39 = por %p37, %p38
    %p40 = scmp.ne.s32.totalorder %s26, %s27
    %p41 = scmp.eq.s32.totalorder %s19, 3
    %p42 = por %p40, %p41
    %p44 = scmp.ne.s32.totalorder %s27, %s43
    %p45 = scmp.eq.s32.totalorder %s19, 0
    %p46 = por %p44, %p45
    %s47 = ssub.s32 %s13, %s20
    %p48 = scmp.eq.s32.totalorder %s47, 0
    %s50 = sadd.s32 %s49, 1
    %s51 = scalar_select %p48, %s49, %s50
    %p54 = pneg %p48
    %p55 = scmp.eq.s32.totalorder %s13, 3
    %p56 = por %p54, %p55
    %p57 = scmp.ne.s32.totalorder %s49, %s52
    %p58 = scmp.eq.s32.totalorder %s13, 0
    %p59 = por %p57, %p58
    %p60 = scmp.ne.s32.totalorder %s49, %s52
    %p61 = scmp.eq.s32.totalorder %s18, 3
    %p62 = por %p60, %p61
    %p63 = scmp.ne.s32.totalorder %s52, %s53
    %p64 = scmp.eq.s32.totalorder %s18, 0
    %p65 = por %p63, %p64
    %p66 = scmp.ne.s32.totalorder %s52, %s53
    %p67 = scmp.eq.s32.totalorder %s19, 3
    %p68 = por %p66, %p67
    %p70 = scmp.ne.s32.totalorder %s53, %s69
    %p71 = scmp.eq.s32.totalorder %s19, 0
    %p72 = por %p70, %p71
    %s74 = sadd.s32 %s73, 1
    %p77 = scmp.eq.s32.totalorder %s13, 3
    %p78 = scmp.ne.s32.totalorder %s73, %s75
    %p79 = scmp.eq.s32.totalorder %s13, 0
    %p80 = por %p78, %p79
    %p81 = scmp.ne.s32.totalorder %s73, %s75
    %p82 = scmp.eq.s32.totalorder %s18, 3
    %p83 = por %p81, %p82
    %p84 = scmp.ne.s32.totalorder %s75, %s76
    %p85 = scmp.eq.s32.totalorder %s18, 0
    %p86 = por %p84, %p85
    %p87 = scmp.ne.s32.totalorder %s75, %s76
    %p88 = scmp.eq.s32.totalorder %s19, 3
    %p89 = por %p87, %p88
    %p91 = scmp.ne.s32.totalorder %s76, %s90
    %p92 = scmp.eq.s32.totalorder %s19, 0
    %p93 = por %p91, %p92
    %s95 = sadd.s32 %s94, 1
    %p98 = scmp.eq.s32.totalorder %s13, 3
    %p99 = scmp.ne.s32.totalorder %s94, %s96
    %p100 = scmp.eq.s32.totalorder %s13, 0
    %p101 = por %p99, %p100
    %p102 = scmp.ne.s32.totalorder %s94, %s96
    %p103 = scmp.eq.s32.totalorder %s18, 3
    %p104 = por %p102, %p103
    %p105 = scmp.ne.s32.totalorder %s96, %s97
    %p106 = scmp.eq.s32.totalorder %s18, 0
    %p107 = por %p105, %p106
    %p108 = scmp.ne.s32.totalorder %s96, %s97
    %p109 = scmp.eq.s32.totalorder %s19, 3
    %p110 = por %p108, %p109
    %p112 = scmp.ne.s32.totalorder %s97, %s111
    %p113 = scmp.eq.s32.totalorder %s19, 0
    %p114 = por %p112, %p113
    %s116 = sadd.s32 %s115, 1
    %p119 = scmp.eq.s32.totalorder %s13, 3
    %p120 = scmp.ne.s32.totalorder %s115, %s117
    %p121 = scmp.eq.s32.totalorder %s13, 0
    %p122 = por %p120, %p121
    %p123 = scmp.ne.s32.totalorder %s115, %s117
    %p124 = scmp.eq.s32.totalorder %s18, 3
    %p125 = por %p123, %p124
    %p126 = scmp.ne.s32.totalorder %s117, %s118
    %p127 = scmp.eq.s32.totalorder %s18, 0
    %p128 = por %p126, %p127
    %p129 = scmp.ne.s32.totalorder %s117, %s118
    %p130 = scmp.eq.s32.totalorder %s19, 3
    %p131 = por %p129, %p130
    %p133 = scmp.ne.s32.totalorder %s118, %s132
    %p134 = scmp.eq.s32.totalorder %s19, 0
    %p135 = por %p133, %p134
    %s137 = sadd.s32 %s136, 1
    %p140 = scmp.eq.s32.totalorder %s13, 3
    %p141 = scmp.ne.s32.totalorder %s136, %s138
    %p142 = scmp.eq.s32.totalorder %s13, 0
    %p143 = por %p141, %p142
    %p144 = scmp.ne.s32.totalorder %s136, %s138
    %p145 = scmp.eq.s32.totalorder %s18, 3
    %p146 = por %p144, %p145
    %p147 = scmp.ne.s32.totalorder %s138, %s139
    %p148 = scmp.eq.s32.totalorder %s18, 0
    %p149 = por %p147, %p148
    %p150 = scmp.ne.s32.totalorder %s138, %s139
    %p151 = scmp.eq.s32.totalorder %s19, 3
    %p152 = por %p150, %p151
    %p154 = scmp.ne.s32.totalorder %s139, %s153
    %p155 = scmp.eq.s32.totalorder %s19, 0
    %p156 = por %p154, %p155
    %s158 = sadd.s32 %s157, 1
    %p161 = scmp.eq.s32.totalorder %s13, 3
    %p162 = scmp.ne.s32.totalorder %s157, %s159
    %p163 = scmp.eq.s32.totalorder %s13, 0
    %p164 = por %p162, %p163
    %p165 = scmp.ne.s32.totalorder %s157, %s159
    %p166 = scmp.eq.s32.totalorder %s18, 3
    %p167 = por %p165, %p166
    %p168 = scmp.ne.s32.totalorder %s159, %s160
    %p169 = scmp.eq.s32.totalorder %s18, 0
    %p170 = por %p168, %p169
    %p171 = scmp.ne.s32.totalorder %s159, %s160
    %p172 = scmp.eq.s32.totalorder %s19, 3
    %p173 = por %p171, %p172
    %p175 = scmp.ne.s32.totalorder %s160, %s174
    %p176 = scmp.eq.s32.totalorder %s19, 0
    %p177 = por %p175, %p176
    %s178 = ssub.s32 %s13, %s20
    %p179 = scmp.eq.s32.totalorder %s178, 0
    %s181 = sadd.s32 %s180, 1
    %s182 = scalar_select %p179, %s180, %s181
    %p185 = pneg %p179
    %p186 = scmp.eq.s32.totalorder %s13, 3
    %p187 = por %p185, %p186
    %p188 = scmp.ne.s32.totalorder %s180, %s183
    %p189 = scmp.eq.s32.totalorder %s13, 0
    %p190 = por %p188, %p189
    %p191 = scmp.ne.s32.totalorder %s180, %s183
    %p192 = scmp.eq.s32.totalorder %s18, 3
    %p193 = por %p191, %p192
    %p194 = scmp.ne.s32.totalorder %s183, %s184
    %p195 = scmp.eq.s32.totalorder %s18, 0
    %p196 = por %p194, %p195
    %p197 = scmp.ne.s32.totalorder %s183, %s184
    %p198 = scmp.eq.s32.totalorder %s19, 3
    %p199 = por %p197, %p198
    %p201 = scmp.ne.s32.totalorder %s184, %s200
    %p202 = scmp.eq.s32.totalorder %s19, 0
    %p203 = por %p201, %p202
    %p204 = scmp.le.s32.totalorder 1, %s13
    %p205 = scmp.lt.s32.totalorder %s13, 5
    %p206 = pnand %p204, %p205
    %p207 = pneg %p206
    // Predicated region
    $region9: #{tpu_custom_call.1} parent=5 // pred_check
      _
    $region10: #{tpu_custom_call.1} parent=5 // pred_check_branch
      %209 = sbr.rel (%p206) target = $region12
    $region11: #{tpu_custom_call.1} parent=5 // pred_region
      %s210 = ssub.s32 %s13, 1
      // Predicated region
      $region13: #{tpu_custom_call.1} parent=11 // pred_check
        %p211 = pneg %p86
      $region14: #{tpu_custom_call.1} parent=11 // pred_check_branch
        %213 = sbr.rel (%p211) target = $region16
      $region15: #{tpu_custom_call.1} parent=11 // pred_region
        _
      $region16: #{tpu_custom_call.1} parent=11 // pred_fallthru
        _
      // Predicated region
      $region17: #{tpu_custom_call.1} parent=11 // pred_check
        %p214 = pneg %p107
      $region18: #{tpu_custom_call.1} parent=11 // pred_check_branch
        %216 = sbr.rel (%p214) target = $region20
      $region19: #{tpu_custom_call.1} parent=11 // pred_region
        _
      $region20: #{tpu_custom_call.1} parent=11 // pred_fallthru
        _
      // Predicated region
      $region21: #{tpu_custom_call.1} parent=11 // pred_check
        %p217 = pneg %p128
      $region22: #{tpu_custom_call.1} parent=11 // pred_check_branch
        %219 = sbr.rel (%p217) target = $region24
      $region23: #{tpu_custom_call.1} parent=11 // pred_region
        _
      $region24: #{tpu_custom_call.1} parent=11 // pred_fallthru
        _
      // Predicated region
      $region25: #{tpu_custom_call.1} parent=11 // pred_check
        %p220 = pneg %p149
      $region26: #{tpu_custom_call.1} parent=11 // pred_check_branch
        %222 = sbr.rel (%p220) target = $region28
      $region27: #{tpu_custom_call.1} parent=11 // pred_region
        _
      $region28: #{tpu_custom_call.1} parent=11 // pred_fallthru
        _
      // Predicated region
      $region29: #{tpu_custom_call.1} parent=11 // pred_check
        %p223 = pneg %p170
      $region30: #{tpu_custom_call.1} parent=11 // pred_check_branch
        %225 = sbr.rel (%p223) target = $region32
      $region31: #{tpu_custom_call.1} parent=11 // pred_region
        _
      $region32: #{tpu_custom_call.1} parent=11 // pred_fallthru
        _
    $region12: #{tpu_custom_call.1} parent=5 // pred_fallthru
      _
    %p226 = scmp.lt.s32.totalorder %s13, 4
    // Predicated region
    $region33: #{tpu_custom_call.1} parent=5 // pred_check
      %p227 = pneg %p226
    $region34: #{tpu_custom_call.1} parent=5 // pred_check_branch
      %229 = sbr.rel (%p227) target = $region36
    $region35: #{tpu_custom_call.1} parent=5 // pred_region
      // Predicated region
      $region37: #{tpu_custom_call.1} parent=35 // pred_check
        %p230 = pneg %p33
      $region38: #{tpu_custom_call.1} parent=35 // pred_check_branch
        %232 = sbr.rel (%p230) target = $region40
      $region39: #{tpu_custom_call.1} parent=35 // pred_region
        %s233 = smul.u32 16, %s13
        %p234 = scmp.lt.s32.totalorder %s233, 63
        %s235 = scalar_select %p234, %s233, 63
        %s236 = smul.addr %s235, 8
        %s237 = scalar_lea.vmem %s0, %s236
        %s238 = smul.u32 16, %s13
      $region40: #{tpu_custom_call.1} parent=35 // pred_fallthru
        _
      // Predicated region
      $region41: #{tpu_custom_call.1} parent=35 // pred_check
        %p239 = pneg %p59
      $region42: #{tpu_custom_call.1} parent=35 // pred_check_branch
        %241 = sbr.rel (%p239) target = $region44
      $region43: #{tpu_custom_call.1} parent=35 // pred_region
        %s242 = smul.u32 16, %s13
        %p243 = scmp.lt.s32.totalorder %s242, 63
        %s244 = scalar_select %p243, %s242, 63
        %s245 = smul.addr %s244, 2
        %s246 = smul.addr %s245, 8
        %s247 = scalar_lea.vmem %s1, %s246
        %s248 = smul.u32 16, %s13
      $region44: #{tpu_custom_call.1} parent=35 // pred_fallthru
        _
    $region36: #{tpu_custom_call.1} parent=5 // pred_fallthru
      _
    %p249 = scmp.le.s32.totalorder 1, %s13
    %p250 = scmp.lt.s32.totalorder %s13, 5
    %p251 = pnand %p249, %p250
    %p252 = pneg %p251
    // Predicated region
    $region45: #{tpu_custom_call.1} parent=5 // pred_check
      _
    $region46: #{tpu_custom_call.1} parent=5 // pred_check_branch
      %254 = sbr.rel (%p251) target = $region48
    $region47: #{tpu_custom_call.1} parent=5 // pred_region
      %s255 = ssub.s32 %s13, 1
      %s256 = smul.u32 16, %s18
      %p257 = scmp.lt.s32.totalorder %s256, 63
      %s258 = scalar_select %p257, %s256, 63
      %s259 = smul.addr %s258, 8
      %s260 = scalar_lea.vmem %s0, %s259
      %p261 = pneg %p39
      %p262 = pneg %p36
      %s263 = smul.u32 16, %s18
      %p264 = scmp.lt.s32.totalorder %s263, 63
      %s265 = scalar_select %p264, %s263, 63
      %s266 = smul.addr %s265, 2
      %s267 = smul.addr %s266, 8
      %s268 = scalar_lea.vmem %s1, %s267
      %p269 = pneg %p65
      %p270 = pneg %p62
      %p271 = pneg %p86
      %p272 = pneg %p83
      %p273 = pneg %p107
      %p274 = pneg %p104
      %p275 = pneg %p128
      %p276 = pneg %p125
      %p277 = pneg %p149
      %p278 = pneg %p146
      %p279 = pneg %p170
      %p280 = pneg %p167
      %p281 = pneg %p196
      %p282 = pneg %p193
      %s283 = smul.u32 16, %s18
      %p284 = scmp.lt.s32.totalorder %s283, 63
      %s285 = scalar_select %p284, %s283, 63
      %s286 = smul.addr %s285, 8
      %s287 = scalar_lea.vmem %s7, %s286
      %s288 = smul.u32 16, %s18
      %p289 = scmp.lt.s32.totalorder %s288, 63
      %s290 = scalar_select %p289, %s288, 63
      %s291 = smul.addr %s290, 8
      %s292 = scalar_lea.vmem %s0, %s291
      %s293 = smul.u32 16, %s18
      %s294 = smul.u32 16, %s18
      %p295 = scmp.lt.s32.totalorder %s294, 63
      %s296 = scalar_select %p295, %s294, 63
      %s297 = smul.addr %s296, 2
      %s298 = smul.addr %s297, 8
      %s299 = scalar_lea.vmem %s1, %s298
      %s300 = smul.u32 16, %s18
      %s301 = smul.u32 16, %s18
      %p302 = scmp.lt.s32.totalorder %s301, 63
      %s303 = scalar_select %p302, %s301, 63
      %s304 = smul.addr %s303, 8
      %s305 = scalar_lea.vmem %s7, %s304
      %s306 = smul.u32 16, %s18
      %v308 = vld [vmem:[%s292] sm:$0xff]
      %v309 = vld [vmem:[%s292 + $0x8] sm:$0xff]
      %v310 = vld [vmem:[%s292 + $0x10] sm:$0xff]
      %v311 = vld [vmem:[%s292 + $0x18] sm:$0xff]
      %v312 = vld [vmem:[%s292 + $0x20] sm:$0xff]
      %v313 = vld [vmem:[%s292 + $0x28] sm:$0xff]
      %v314 = vld [vmem:[%s292 + $0x30] sm:$0xff]
      %v315 = vld [vmem:[%s292 + $0x38] sm:$0xff]
      %v316 = vld [vmem:[%s292 + $0x40] sm:$0xff]
      %v317 = vld [vmem:[%s292 + $0x48] sm:$0xff]
      %v318 = vld [vmem:[%s292 + $0x50] sm:$0xff]
      %v319 = vld [vmem:[%s292 + $0x58] sm:$0xff]
      %v320 = vld [vmem:[%s292 + $0x60] sm:$0xff]
      %v321 = vld [vmem:[%s292 + $0x68] sm:$0xff]
      %v322 = vld [vmem:[%s292 + $0x70] sm:$0xff]
      %v323 = vld [vmem:[%s292 + $0x78] sm:$0xff]
      %v324 = vpack.c.bf16 %v309, %v308
      %v325 = vpack.c.bf16 %v311, %v310
      %v326 = vpack.c.bf16 %v313, %v312
      %v327 = vpack.c.bf16 %v315, %v314
      %v328 = vpack.c.bf16 %v317, %v316
      %v329 = vpack.c.bf16 %v319, %v318
      %v330 = vpack.c.bf16 %v321, %v320
      %v331 = vpack.c.bf16 %v323, %v322
      %v332 = vld [vmem:[%s299] sm:$0xff]
      %v333 = vld [vmem:[%s299 + $0x8] sm:$0xff]
      %v334 = vld [vmem:[%s299 + $0x10] sm:$0xff]
      %v335 = vld [vmem:[%s299 + $0x18] sm:$0xff]
      %v336 = vld [vmem:[%s299 + $0x20] sm:$0xff]
      %v337 = vld [vmem:[%s299 + $0x28] sm:$0xff]
      %v338 = vld [vmem:[%s299 + $0x30] sm:$0xff]
      %v339 = vld [vmem:[%s299 + $0x38] sm:$0xff]
      %v340 = vld [vmem:[%s299 + $0x40] sm:$0xff]
      %v341 = vld [vmem:[%s299 + $0x48] sm:$0xff]
      %v342 = vld [vmem:[%s299 + $0x50] sm:$0xff]
      %v343 = vld [vmem:[%s299 + $0x58] sm:$0xff]
      %v344 = vld [vmem:[%s299 + $0x60] sm:$0xff]
      %v345 = vld [vmem:[%s299 + $0x68] sm:$0xff]
      %v346 = vld [vmem:[%s299 + $0x70] sm:$0xff]
      %v347 = vld [vmem:[%s299 + $0x78] sm:$0xff]
      %v348 = vld [vmem:[%s299 + $0x80] sm:$0xff]
      %v349 = vld [vmem:[%s299 + $0x88] sm:$0xff]
      %v350 = vld [vmem:[%s299 + $0x90] sm:$0xff]
      %v351 = vld [vmem:[%s299 + $0x98] sm:$0xff]
      %v352 = vld [vmem:[%s299 + $0xa0] sm:$0xff]
      %v353 = vld [vmem:[%s299 + $0xa8] sm:$0xff]
      %v354 = vld [vmem:[%s299 + $0xb0] sm:$0xff]
      %v355 = vld [vmem:[%s299 + $0xb8] sm:$0xff]
      %v356 = vld [vmem:[%s299 + $0xc0] sm:$0xff]
      %v357 = vld [vmem:[%s299 + $0xc8] sm:$0xff]
      %v358 = vld [vmem:[%s299 + $0xd0] sm:$0xff]
      %v359 = vld [vmem:[%s299 + $0xd8] sm:$0xff]
      %v360 = vld [vmem:[%s299 + $0xe0] sm:$0xff]
      %v361 = vld [vmem:[%s299 + $0xe8] sm:$0xff]
      %v362 = vld [vmem:[%s299 + $0xf0] sm:$0xff]
      %v363 = vld [vmem:[%s299 + $0xf8] sm:$0xff]
      %v364 = vpack.c.bf16 %v333, %v332
      %v365 = vpack.c.bf16 %v335, %v334
      %v366 = vpack.c.bf16 %v337, %v336
      %v367 = vpack.c.bf16 %v339, %v338
      %v368 = vpack.c.bf16 %v341, %v340
      %v369 = vpack.c.bf16 %v343, %v342
      %v370 = vpack.c.bf16 %v345, %v344
      %v371 = vpack.c.bf16 %v347, %v346
      %v372 = vpack.c.bf16 %v349, %v348
      %v373 = vpack.c.bf16 %v351, %v350
      %v374 = vpack.c.bf16 %v353, %v352
      %v375 = vpack.c.bf16 %v355, %v354
      %v376 = vpack.c.bf16 %v357, %v356
      %v377 = vpack.c.bf16 %v359, %v358
      %v378 = vpack.c.bf16 %v361, %v360
      %v379 = vpack.c.bf16 %v363, %v362
      %v380 = vld [vmem:[%s2] sm:$0xf]
      %v381 = vld [vmem:[%s2 + $0x4] sm:$0xf]
      %v382 = vld [vmem:[%s2 + $0x8] sm:$0xf]
      %v383 = vld [vmem:[%s2 + $0xc] sm:$0xf]
      %v384 = vld [vmem:[%s3] sm:$0xf]
      %v385 = vld [vmem:[%s3 + $0x4] sm:$0xf]
      %v386 = vld [vmem:[%s3 + $0x8] sm:$0xf]
      %v387 = vld [vmem:[%s3 + $0xc] sm:$0xf]
      %v388 = vld [vmem:[%s4] sm:$0xf]
      %v389 = vld [vmem:[%s4 + $0x4] sm:$0xf]
      %v390 = vld [vmem:[%s4 + $0x8] sm:$0xf]
      %v391 = vld [vmem:[%s4 + $0xc] sm:$0xf]
      %v392 = vld [vmem:[%s5] sm:$0xf]
      %v393 = vld [vmem:[%s5 + $0x4] sm:$0xf]
      %v398 = vunpack.c.l.b16 %v380
      %v399 = vunpack.c.l.b16 %v381
      %v400 = vunpack.c.l.b16 %v382
      %v401 = vunpack.c.l.b16 %v383
      %v402 = vpack.c.b16 %v399, %v398
      %v403 = vpack.c.b16 %v401, %v400
      %vm406 = vcmask 261120
      %v408 = vsel %vm406, %v324, 0
      %v411 = vsel %vm406, %v325, 0
      %v414 = vsel %vm406, %v326, 0
      %v417 = vsel %vm406, %v327, 0
      %v420 = vsel %vm406, %v328, 0
      %v423 = vsel %vm406, %v329, 0
      %v426 = vsel %vm406, %v330, 0
      %v429 = vsel %vm406, %v331, 0
      %431 = vmatpush.bf16.msra.mxu0 0
      %432 = vmatpush.bf16.msra.mxu0 0
      %433 = vmatpush.bf16.msra.mxu0 0
      %434 = vmatpush.bf16.msra.mxu0 0
      %435 = vmatpush.bf16.msra.mxu0 0
      %436 = vmatpush.bf16.msra.mxu0 0
      %437 = vmatpush.bf16.msra.mxu0 %v403
      %438 = vmatpush.bf16.msra.mxu0 %v402
      %439 = vmatmul.bf16.gmra.mxu0 %v408
      %v440 = vpop.f32.mrf.mxu0
      %v441 = vadd.f32 0.0, %v440
      %v442 = vpop.f32.mrf.mxu0
      %v443 = vadd.f32 0.0, %v442
      %444 = vmatmul.bf16.gmra.mxu0 %v411
      %v445 = vpop.f32.mrf.mxu0
      %v446 = vadd.f32 0.0, %v445
      %v447 = vpop.f32.mrf.mxu0
      %v448 = vadd.f32 0.0, %v447
      %449 = vmatmul.bf16.gmra.mxu0 %v414
      %v450 = vpop.f32.mrf.mxu0
      %v451 = vadd.f32 0.0, %v450
      %v452 = vpop.f32.mrf.mxu0
      %v453 = vadd.f32 0.0, %v452
      %454 = vmatmul.bf16.gmra.mxu0 %v417
      %v455 = vpop.f32.mrf.mxu0
      %v456 = vadd.f32 0.0, %v455
      %v457 = vpop.f32.mrf.mxu0
      %v458 = vadd.f32 0.0, %v457
      %459 = vmatmul.bf16.gmra.mxu0 %v420
      %v460 = vpop.f32.mrf.mxu0
      %v461 = vadd.f32 0.0, %v460
      %v462 = vpop.f32.mrf.mxu0
      %v463 = vadd.f32 0.0, %v462
      %464 = vmatmul.bf16.gmra.mxu0 %v423
      %v465 = vpop.f32.mrf.mxu0
      %v466 = vadd.f32 0.0, %v465
      %v467 = vpop.f32.mrf.mxu0
      %v468 = vadd.f32 0.0, %v467
      %469 = vmatmul.bf16.gmra.mxu0 %v426
      %v470 = vpop.f32.mrf.mxu0
      %v471 = vadd.f32 0.0, %v470
      %v472 = vpop.f32.mrf.mxu0
      %v473 = vadd.f32 0.0, %v472
      %474 = vmatmul.bf16.gmra.mxu0 %v429
      %v475 = vpop.f32.mrf.mxu0
      %v476 = vadd.f32 0.0, %v475
      %v477 = vpop.f32.mrf.mxu0
      %v478 = vadd.f32 0.0, %v477
      %479 = vdwg.mxu0
      %v484 = vunpack.c.l.b16 %v384
      %v485 = vunpack.c.l.b16 %v385
      %v486 = vunpack.c.l.b16 %v386
      %v487 = vunpack.c.l.b16 %v387
      %v488 = vpack.c.b16 %v485, %v484
      %v489 = vpack.c.b16 %v487, %v486
      %v493 = vsel %vm406, %v364, 0
      %v496 = vsel %vm406, %v365, 0
      %v499 = vsel %vm406, %v366, 0
      %v502 = vsel %vm406, %v367, 0
      %v505 = vsel %vm406, %v368, 0
      %v508 = vsel %vm406, %v369, 0
      %v511 = vsel %vm406, %v370, 0
      %v514 = vsel %vm406, %v371, 0
      %v517 = vsel %vm406, %v372, 0
      %v520 = vsel %vm406, %v373, 0
      %v523 = vsel %vm406, %v374, 0
      %v526 = vsel %vm406, %v375, 0
      %v529 = vsel %vm406, %v376, 0
      %v532 = vsel %vm406, %v377, 0
      %v535 = vsel %vm406, %v378, 0
      %v538 = vsel %vm406, %v379, 0
      %540 = vmatpush.bf16.msra.mxu0 0
      %541 = vmatpush.bf16.msra.mxu0 0
      %542 = vmatpush.bf16.msra.mxu0 0
      %543 = vmatpush.bf16.msra.mxu0 0
      %544 = vmatpush.bf16.msra.mxu0 0
      %545 = vmatpush.bf16.msra.mxu0 0
      %546 = vmatpush.bf16.msra.mxu0 %v489
      %547 = vmatpush.bf16.msra.mxu0 %v488
      %548 = vmatmul.bf16.gmra.mxu0 %v493
      %v549 = vpop.f32.mrf.mxu0
      %v550 = vadd.f32 0.0, %v549
      %v551 = vpop.f32.mrf.mxu0
      %v552 = vadd.f32 0.0, %v551
      %553 = vmatmul.bf16.gmra.mxu0 %v496
      %v554 = vpop.f32.mrf.mxu0
      %v555 = vadd.f32 0.0, %v554
      %v556 = vpop.f32.mrf.mxu0
      %v557 = vadd.f32 0.0, %v556
      %558 = vmatmul.bf16.gmra.mxu0 %v499
      %v559 = vpop.f32.mrf.mxu0
      %v560 = vadd.f32 0.0, %v559
      %v561 = vpop.f32.mrf.mxu0
      %v562 = vadd.f32 0.0, %v561
      %563 = vmatmul.bf16.gmra.mxu0 %v502
      %v564 = vpop.f32.mrf.mxu0
      %v565 = vadd.f32 0.0, %v564
      %v566 = vpop.f32.mrf.mxu0
      %v567 = vadd.f32 0.0, %v566
      %568 = vmatmul.bf16.gmra.mxu0 %v505
      %v569 = vpop.f32.mrf.mxu0
      %v570 = vadd.f32 0.0, %v569
      %v571 = vpop.f32.mrf.mxu0
      %v572 = vadd.f32 0.0, %v571
      %573 = vmatmul.bf16.gmra.mxu0 %v508
      %v574 = vpop.f32.mrf.mxu0
      %v575 = vadd.f32 0.0, %v574
      %v576 = vpop.f32.mrf.mxu0
      %v577 = vadd.f32 0.0, %v576
      %578 = vmatmul.bf16.gmra.mxu0 %v511
      %v579 = vpop.f32.mrf.mxu0
      %v580 = vadd.f32 0.0, %v579
      %v581 = vpop.f32.mrf.mxu0
      %v582 = vadd.f32 0.0, %v581
      %583 = vmatmul.bf16.gmra.mxu0 %v514
      %v584 = vpop.f32.mrf.mxu0
      %v585 = vadd.f32 0.0, %v584
      %v586 = vpop.f32.mrf.mxu0
      %v587 = vadd.f32 0.0, %v586
      %588 = vmatmul.bf16.gmra.mxu0 %v517
      %v589 = vpop.f32.mrf.mxu0
      %v590 = vadd.f32 0.0, %v589
      %v591 = vpop.f32.mrf.mxu0
      %v592 = vadd.f32 0.0, %v591
      %593 = vmatmul.bf16.gmra.mxu0 %v520
      %v594 = vpop.f32.mrf.mxu0
      %v595 = vadd.f32 0.0, %v594
      %v596 = vpop.f32.mrf.mxu0
      %v597 = vadd.f32 0.0, %v596
      %598 = vmatmul.bf16.gmra.mxu0 %v523
      %v599 = vpop.f32.mrf.mxu0
      %v600 = vadd.f32 0.0, %v599
      %v601 = vpop.f32.mrf.mxu0
      %v602 = vadd.f32 0.0, %v601
      %603 = vmatmul.bf16.gmra.mxu0 %v526
      %v604 = vpop.f32.mrf.mxu0
      %v605 = vadd.f32 0.0, %v604
      %v606 = vpop.f32.mrf.mxu0
      %v607 = vadd.f32 0.0, %v606
      %608 = vmatmul.bf16.gmra.mxu0 %v529
      %v609 = vpop.f32.mrf.mxu0
      %v610 = vadd.f32 0.0, %v609
      %v611 = vpop.f32.mrf.mxu0
      %v612 = vadd.f32 0.0, %v611
      %613 = vmatmul.bf16.gmra.mxu0 %v532
      %v614 = vpop.f32.mrf.mxu0
      %v615 = vadd.f32 0.0, %v614
      %v616 = vpop.f32.mrf.mxu0
      %v617 = vadd.f32 0.0, %v616
      %618 = vmatmul.bf16.gmra.mxu0 %v535
      %v619 = vpop.f32.mrf.mxu0
      %v620 = vadd.f32 0.0, %v619
      %v621 = vpop.f32.mrf.mxu0
      %v622 = vadd.f32 0.0, %v621
      %623 = vmatmul.bf16.gmra.mxu0 %v538
      %v624 = vpop.f32.mrf.mxu0
      %v625 = vadd.f32 0.0, %v624
      %v626 = vpop.f32.mrf.mxu0
      %v627 = vadd.f32 0.0, %v626
      %628 = vdwg.mxu0
      %v633 = vunpack.c.l.b16 %v388
      %v634 = vunpack.c.l.b16 %v389
      %v635 = vunpack.c.l.b16 %v390
      %v636 = vunpack.c.l.b16 %v391
      %v637 = vpack.c.b16 %v634, %v633
      %v638 = vpack.c.b16 %v636, %v635
      %641 = vmatpush.bf16.msra.mxu0 0
      %642 = vmatpush.bf16.msra.mxu0 0
      %643 = vmatpush.bf16.msra.mxu0 0
      %644 = vmatpush.bf16.msra.mxu0 0
      %645 = vmatpush.bf16.msra.mxu0 0
      %646 = vmatpush.bf16.msra.mxu0 0
      %647 = vmatpush.bf16.msra.mxu0 %v638
      %648 = vmatpush.bf16.msra.mxu0 %v637
      %649 = vmatmul.bf16.gmra.mxu0 %v493
      %v650 = vpop.f32.mrf.mxu0
      %v651 = vadd.f32 0.0, %v650
      %v652 = vpop.f32.mrf.mxu0
      %v653 = vadd.f32 0.0, %v652
      %654 = vmatmul.bf16.gmra.mxu0 %v496
      %v655 = vpop.f32.mrf.mxu0
      %v656 = vadd.f32 0.0, %v655
      %v657 = vpop.f32.mrf.mxu0
      %v658 = vadd.f32 0.0, %v657
      %659 = vmatmul.bf16.gmra.mxu0 %v499
      %v660 = vpop.f32.mrf.mxu0
      %v661 = vadd.f32 0.0, %v660
      %v662 = vpop.f32.mrf.mxu0
      %v663 = vadd.f32 0.0, %v662
      %664 = vmatmul.bf16.gmra.mxu0 %v502
      %v665 = vpop.f32.mrf.mxu0
      %v666 = vadd.f32 0.0, %v665
      %v667 = vpop.f32.mrf.mxu0
      %v668 = vadd.f32 0.0, %v667
      %669 = vmatmul.bf16.gmra.mxu0 %v505
      %v670 = vpop.f32.mrf.mxu0
      %v671 = vadd.f32 0.0, %v670
      %v672 = vpop.f32.mrf.mxu0
      %v673 = vadd.f32 0.0, %v672
      %674 = vmatmul.bf16.gmra.mxu0 %v508
      %v675 = vpop.f32.mrf.mxu0
      %v676 = vadd.f32 0.0, %v675
      %v677 = vpop.f32.mrf.mxu0
      %v678 = vadd.f32 0.0, %v677
      %679 = vmatmul.bf16.gmra.mxu0 %v511
      %v680 = vpop.f32.mrf.mxu0
      %v681 = vadd.f32 0.0, %v680
      %v682 = vpop.f32.mrf.mxu0
      %v683 = vadd.f32 0.0, %v682
      %684 = vmatmul.bf16.gmra.mxu0 %v514
      %v685 = vpop.f32.mrf.mxu0
      %v686 = vadd.f32 0.0, %v685
      %v687 = vpop.f32.mrf.mxu0
      %v688 = vadd.f32 0.0, %v687
      %689 = vmatmul.bf16.gmra.mxu0 %v517
      %v690 = vpop.f32.mrf.mxu0
      %v691 = vadd.f32 0.0, %v690
      %v692 = vpop.f32.mrf.mxu0
      %v693 = vadd.f32 0.0, %v692
      %694 = vmatmul.bf16.gmra.mxu0 %v520
      %v695 = vpop.f32.mrf.mxu0
      %v696 = vadd.f32 0.0, %v695
      %v697 = vpop.f32.mrf.mxu0
      %v698 = vadd.f32 0.0, %v697
      %699 = vmatmul.bf16.gmra.mxu0 %v523
      %v700 = vpop.f32.mrf.mxu0
      %v701 = vadd.f32 0.0, %v700
      %v702 = vpop.f32.mrf.mxu0
      %v703 = vadd.f32 0.0, %v702
      %704 = vmatmul.bf16.gmra.mxu0 %v526
      %v705 = vpop.f32.mrf.mxu0
      %v706 = vadd.f32 0.0, %v705
      %v707 = vpop.f32.mrf.mxu0
      %v708 = vadd.f32 0.0, %v707
      %709 = vmatmul.bf16.gmra.mxu0 %v529
      %v710 = vpop.f32.mrf.mxu0
      %v711 = vadd.f32 0.0, %v710
      %v712 = vpop.f32.mrf.mxu0
      %v713 = vadd.f32 0.0, %v712
      %714 = vmatmul.bf16.gmra.mxu0 %v532
      %v715 = vpop.f32.mrf.mxu0
      %v716 = vadd.f32 0.0, %v715
      %v717 = vpop.f32.mrf.mxu0
      %v718 = vadd.f32 0.0, %v717
      %719 = vmatmul.bf16.gmra.mxu0 %v535
      %v720 = vpop.f32.mrf.mxu0
      %v721 = vadd.f32 0.0, %v720
      %v722 = vpop.f32.mrf.mxu0
      %v723 = vadd.f32 0.0, %v722
      %724 = vmatmul.bf16.gmra.mxu0 %v538
      %v725 = vpop.f32.mrf.mxu0
      %v726 = vadd.f32 0.0, %v725
      %v727 = vpop.f32.mrf.mxu0
      %v728 = vadd.f32 0.0, %v727
      %729 = vdwg.mxu0
      %v730 = vpack.c.bf16 %v441, %v441
      %v731 = vpack.c.bf16 %v443, %v443
      %v732 = vpack.c.bf16 %v446, %v446
      %v733 = vpack.c.bf16 %v448, %v448
      %v734 = vpack.c.bf16 %v451, %v451
      %v735 = vpack.c.bf16 %v453, %v453
      %v736 = vpack.c.bf16 %v456, %v456
      %v737 = vpack.c.bf16 %v458, %v458
      %v738 = vpack.c.bf16 %v461, %v461
      %v739 = vpack.c.bf16 %v463, %v463
      %v740 = vpack.c.bf16 %v466, %v466
      %v741 = vpack.c.bf16 %v468, %v468
      %v742 = vpack.c.bf16 %v471, %v471
      %v743 = vpack.c.bf16 %v473, %v473
      %v744 = vpack.c.bf16 %v476, %v476
      %v745 = vpack.c.bf16 %v478, %v478
      %v746 = vpack.c.bf16 %v550, %v550
      %v747 = vpack.c.bf16 %v552, %v552
      %v748 = vpack.c.bf16 %v555, %v555
      %v749 = vpack.c.bf16 %v557, %v557
      %v750 = vpack.c.bf16 %v560, %v560
      %v751 = vpack.c.bf16 %v562, %v562
      %v752 = vpack.c.bf16 %v565, %v565
      %v753 = vpack.c.bf16 %v567, %v567
      %v754 = vpack.c.bf16 %v570, %v570
      %v755 = vpack.c.bf16 %v572, %v572
      %v756 = vpack.c.bf16 %v575, %v575
      %v757 = vpack.c.bf16 %v577, %v577
      %v758 = vpack.c.bf16 %v580, %v580
      %v759 = vpack.c.bf16 %v582, %v582
      %v760 = vpack.c.bf16 %v585, %v585
      %v761 = vpack.c.bf16 %v587, %v587
      %v762 = vpack.c.bf16 %v590, %v590
      %v763 = vpack.c.bf16 %v592, %v592
      %v764 = vpack.c.bf16 %v595, %v595
      %v765 = vpack.c.bf16 %v597, %v597
      %v766 = vpack.c.bf16 %v600, %v600
      %v767 = vpack.c.bf16 %v602, %v602
      %v768 = vpack.c.bf16 %v605, %v605
      %v769 = vpack.c.bf16 %v607, %v607
      %v770 = vpack.c.bf16 %v610, %v610
      %v771 = vpack.c.bf16 %v612, %v612
      %v772 = vpack.c.bf16 %v615, %v615
      %v773 = vpack.c.bf16 %v617, %v617
      %v774 = vpack.c.bf16 %v620, %v620
      %v775 = vpack.c.bf16 %v622, %v622
      %v776 = vpack.c.bf16 %v625, %v625
      %v777 = vpack.c.bf16 %v627, %v627
      %v778 = vpack.c.bf16 %v651, %v651
      %v779 = vpack.c.bf16 %v653, %v653
      %v780 = vpack.c.bf16 %v656, %v656
      %v781 = vpack.c.bf16 %v658, %v658
      %v782 = vpack.c.bf16 %v661, %v661
      %v783 = vpack.c.bf16 %v663, %v663
      %v784 = vpack.c.bf16 %v666, %v666
      %v785 = vpack.c.bf16 %v668, %v668
      %v786 = vpack.c.bf16 %v671, %v671
      %v787 = vpack.c.bf16 %v673, %v673
      %v788 = vpack.c.bf16 %v676, %v676
      %v789 = vpack.c.bf16 %v678, %v678
      %v790 = vpack.c.bf16 %v681, %v681
      %v791 = vpack.c.bf16 %v683, %v683
      %v792 = vpack.c.bf16 %v686, %v686
      %v793 = vpack.c.bf16 %v688, %v688
      %v794 = vpack.c.bf16 %v691, %v691
      %v795 = vpack.c.bf16 %v693, %v693
      %v796 = vpack.c.bf16 %v696, %v696
      %v797 = vpack.c.bf16 %v698, %v698
      %v798 = vpack.c.bf16 %v701, %v701
      %v799 = vpack.c.bf16 %v703, %v703
      %v800 = vpack.c.bf16 %v706, %v706
      %v801 = vpack.c.bf16 %v708, %v708
      %v802 = vpack.c.bf16 %v711, %v711
      %v803 = vpack.c.bf16 %v713, %v713
      %v804 = vpack.c.bf16 %v716, %v716
      %v805 = vpack.c.bf16 %v718, %v718
      %v806 = vpack.c.bf16 %v721, %v721
      %v807 = vpack.c.bf16 %v723, %v723
      %v808 = vpack.c.bf16 %v726, %v726
      %v809 = vpack.c.bf16 %v728, %v728
      %v812 = vunpack.c.l.b16 %v746
      %v813 = vunpack.c.l.b16 %v747
      %v814 = vpack.c.b16 %v813, %v812
      %vm815 = vcmask 130048
      %v817 = vsel %vm815, %v730, 0
      %v820 = vsel %vm815, %v814, 0
      %822 = vmatpush.bf16.xpose.msra.mxu0 0
      %823 = vmatpush.bf16.xpose.msra.mxu0 0
      %824 = vmatpush.bf16.xpose.msra.mxu0 0
      %825 = vmatpush.bf16.xpose.msra.mxu0 0
      %826 = vmatpush.bf16.xpose.msra.mxu0 0
      %827 = vmatpush.bf16.xpose.msra.mxu0 0
      %828 = vmatpush.bf16.xpose.msra.mxu0 0
      %829 = vmatpush.bf16.xpose.msra.mxu0 %v820
      %830 = vmatmul.bf16.gmra.mxu0 %v817
      %v831 = vpop.f32.mrf.mxu0
      %v832 = vadd.f32 0.0, %v831
      %v833 = vpop.f32.mrf.mxu0
      %834 = vdwg.mxu0
      %v837 = vunpack.c.l.b16 %v748
      %v838 = vunpack.c.l.b16 %v749
      %v839 = vpack.c.b16 %v838, %v837
      %v841 = vsel %vm815, %v731, 0
      %v844 = vsel %vm815, %v839, 0
      %846 = vmatpush.bf16.xpose.msra.mxu0 0
      %847 = vmatpush.bf16.xpose.msra.mxu0 0
      %848 = vmatpush.bf16.xpose.msra.mxu0 0
      %849 = vmatpush.bf16.xpose.msra.mxu0 0
      %850 = vmatpush.bf16.xpose.msra.mxu0 0
      %851 = vmatpush.bf16.xpose.msra.mxu0 0
      %852 = vmatpush.bf16.xpose.msra.mxu0 0
      %853 = vmatpush.bf16.xpose.msra.mxu0 %v844
      %854 = vmatmul.bf16.gmra.mxu0 %v841
      %v855 = vpop.f32.mrf.mxu0
      %v856 = vadd.f32 0.0, %v855
      %v857 = vpop.f32.mrf.mxu0
      %858 = vdwg.mxu0
      %v861 = vunpack.c.l.b16 %v750
      %v862 = vunpack.c.l.b16 %v751
      %v863 = vpack.c.b16 %v862, %v861
      %v865 = vsel %vm815, %v732, 0
      %v868 = vsel %vm815, %v863, 0
      %870 = vmatpush.bf16.xpose.msra.mxu0 0
      %871 = vmatpush.bf16.xpose.msra.mxu0 0
      %872 = vmatpush.bf16.xpose.msra.mxu0 0
      %873 = vmatpush.bf16.xpose.msra.mxu0 0
      %874 = vmatpush.bf16.xpose.msra.mxu0 0
      %875 = vmatpush.bf16.xpose.msra.mxu0 0
      %876 = vmatpush.bf16.xpose.msra.mxu0 0
      %877 = vmatpush.bf16.xpose.msra.mxu0 %v868
      %878 = vmatmul.bf16.gmra.mxu0 %v865
      %v879 = vpop.f32.mrf.mxu0
      %v880 = vadd.f32 0.0, %v879
      %v881 = vpop.f32.mrf.mxu0
      %882 = vdwg.mxu0
      %v885 = vunpack.c.l.b16 %v752
      %v886 = vunpack.c.l.b16 %v753
      %v887 = vpack.c.b16 %v886, %v885
      %v889 = vsel %vm815, %v733, 0
      %v892 = vsel %vm815, %v887, 0
      %894 = vmatpush.bf16.xpose.msra.mxu0 0
      %895 = vmatpush.bf16.xpose.msra.mxu0 0
      %896 = vmatpush.bf16.xpose.msra.mxu0 0
      %897 = vmatpush.bf16.xpose.msra.mxu0 0
      %898 = vmatpush.bf16.xpose.msra.mxu0 0
      %899 = vmatpush.bf16.xpose.msra.mxu0 0
      %900 = vmatpush.bf16.xpose.msra.mxu0 0
      %901 = vmatpush.bf16.xpose.msra.mxu0 %v892
      %902 = vmatmul.bf16.gmra.mxu0 %v889
      %v903 = vpop.f32.mrf.mxu0
      %v904 = vadd.f32 0.0, %v903
      %v905 = vpop.f32.mrf.mxu0
      %906 = vdwg.mxu0
      %v909 = vunpack.c.l.b16 %v754
      %v910 = vunpack.c.l.b16 %v755
      %v911 = vpack.c.b16 %v910, %v909
      %v913 = vsel %vm815, %v734, 0
      %v916 = vsel %vm815, %v911, 0
      %918 = vmatpush.bf16.xpose.msra.mxu0 0
      %919 = vmatpush.bf16.xpose.msra.mxu0 0
      %920 = vmatpush.bf16.xpose.msra.mxu0 0
      %921 = vmatpush.bf16.xpose.msra.mxu0 0
      %922 = vmatpush.bf16.xpose.msra.mxu0 0
      %923 = vmatpush.bf16.xpose.msra.mxu0 0
      %924 = vmatpush.bf16.xpose.msra.mxu0 0
      %925 = vmatpush.bf16.xpose.msra.mxu0 %v916
      %926 = vmatmul.bf16.gmra.mxu0 %v913
      %v927 = vpop.f32.mrf.mxu0
      %v928 = vadd.f32 0.0, %v927
      %v929 = vpop.f32.mrf.mxu0
      %930 = vdwg.mxu0
      %v933 = vunpack.c.l.b16 %v756
      %v934 = vunpack.c.l.b16 %v757
      %v935 = vpack.c.b16 %v934, %v933
      %v937 = vsel %vm815, %v735, 0
      %v940 = vsel %vm815, %v935, 0
      %942 = vmatpush.bf16.xpose.msra.mxu0 0
      %943 = vmatpush.bf16.xpose.msra.mxu0 0
      %944 = vmatpush.bf16.xpose.msra.mxu0 0
      %945 = vmatpush.bf16.xpose.msra.mxu0 0
      %946 = vmatpush.bf16.xpose.msra.mxu0 0
      %947 = vmatpush.bf16.xpose.msra.mxu0 0
      %948 = vmatpush.bf16.xpose.msra.mxu0 0
      %949 = vmatpush.bf16.xpose.msra.mxu0 %v940
      %950 = vmatmul.bf16.gmra.mxu0 %v937
      %v951 = vpop.f32.mrf.mxu0
      %v952 = vadd.f32 0.0, %v951
      %v953 = vpop.f32.mrf.mxu0
      %954 = vdwg.mxu0
      %v957 = vunpack.c.l.b16 %v758
      %v958 = vunpack.c.l.b16 %v759
      %v959 = vpack.c.b16 %v958, %v957
      %v961 = vsel %vm815, %v736, 0
      %v964 = vsel %vm815, %v959, 0
      %966 = vmatpush.bf16.xpose.msra.mxu0 0
      %967 = vmatpush.bf16.xpose.msra.mxu0 0
      %968 = vmatpush.bf16.xpose.msra.mxu0 0
      %969 = vmatpush.bf16.xpose.msra.mxu0 0
      %970 = vmatpush.bf16.xpose.msra.mxu0 0
      %971 = vmatpush.bf16.xpose.msra.mxu0 0
      %972 = vmatpush.bf16.xpose.msra.mxu0 0
      %973 = vmatpush.bf16.xpose.msra.mxu0 %v964
      %974 = vmatmul.bf16.gmra.mxu0 %v961
      %v975 = vpop.f32.mrf.mxu0
      %v976 = vadd.f32 0.0, %v975
      %v977 = vpop.f32.mrf.mxu0
      %978 = vdwg.mxu0
      %v981 = vunpack.c.l.b16 %v760
      %v982 = vunpack.c.l.b16 %v761
      %v983 = vpack.c.b16 %v982, %v981
      %v985 = vsel %vm815, %v737, 0
      %v988 = vsel %vm815, %v983, 0
      %990 = vmatpush.bf16.xpose.msra.mxu0 0
      %991 = vmatpush.bf16.xpose.msra.mxu0 0
      %992 = vmatpush.bf16.xpose.msra.mxu0 0
      %993 = vmatpush.bf16.xpose.msra.mxu0 0
      %994 = vmatpush.bf16.xpose.msra.mxu0 0
      %995 = vmatpush.bf16.xpose.msra.mxu0 0
      %996 = vmatpush.bf16.xpose.msra.mxu0 0
      %997 = vmatpush.bf16.xpose.msra.mxu0 %v988
      %998 = vmatmul.bf16.gmra.mxu0 %v985
      %v999 = vpop.f32.mrf.mxu0
      %v1000 = vadd.f32 0.0, %v999
      %v1001 = vpop.f32.mrf.mxu0
      %1002 = vdwg.mxu0
      %v1005 = vunpack.c.l.b16 %v762
      %v1006 = vunpack.c.l.b16 %v763
      %v1007 = vpack.c.b16 %v1006, %v1005
      %v1009 = vsel %vm815, %v738, 0
      %v1012 = vsel %vm815, %v1007, 0
      %1014 = vmatpush.bf16.xpose.msra.mxu0 0
      %1015 = vmatpush.bf16.xpose.msra.mxu0 0
      %1016 = vmatpush.bf16.xpose.msra.mxu0 0
      %1017 = vmatpush.bf16.xpose.msra.mxu0 0
      %1018 = vmatpush.bf16.xpose.msra.mxu0 0
      %1019 = vmatpush.bf16.xpose.msra.mxu0 0
      %1020 = vmatpush.bf16.xpose.msra.mxu0 0
      %1021 = vmatpush.bf16.xpose.msra.mxu0 %v1012
      %1022 = vmatmul.bf16.gmra.mxu0 %v1009
      %v1023 = vpop.f32.mrf.mxu0
      %v1024 = vadd.f32 0.0, %v1023
      %v1025 = vpop.f32.mrf.mxu0
      %1026 = vdwg.mxu0
      %v1029 = vunpack.c.l.b16 %v764
      %v1030 = vunpack.c.l.b16 %v765
      %v1031 = vpack.c.b16 %v1030, %v1029
      %v1033 = vsel %vm815, %v739, 0
      %v1036 = vsel %vm815, %v1031, 0
      %1038 = vmatpush.bf16.xpose.msra.mxu0 0
      %1039 = vmatpush.bf16.xpose.msra.mxu0 0
      %1040 = vmatpush.bf16.xpose.msra.mxu0 0
      %1041 = vmatpush.bf16.xpose.msra.mxu0 0
      %1042 = vmatpush.bf16.xpose.msra.mxu0 0
      %1043 = vmatpush.bf16.xpose.msra.mxu0 0
      %1044 = vmatpush.bf16.xpose.msra.mxu0 0
      %1045 = vmatpush.bf16.xpose.msra.mxu0 %v1036
      %1046 = vmatmul.bf16.gmra.mxu0 %v1033
      %v1047 = vpop.f32.mrf.mxu0
      %v1048 = vadd.f32 0.0, %v1047
      %v1049 = vpop.f32.mrf.mxu0
      %1050 = vdwg.mxu0
      %v1053 = vunpack.c.l.b16 %v766
      %v1054 = vunpack.c.l.b16 %v767
      %v1055 = vpack.c.b16 %v1054, %v1053
      %v1057 = vsel %vm815, %v740, 0
      %v1060 = vsel %vm815, %v1055, 0
      %1062 = vmatpush.bf16.xpose.msra.mxu0 0
      %1063 = vmatpush.bf16.xpose.msra.mxu0 0
      %1064 = vmatpush.bf16.xpose.msra.mxu0 0
      %1065 = vmatpush.bf16.xpose.msra.mxu0 0
      %1066 = vmatpush.bf16.xpose.msra.mxu0 0
      %1067 = vmatpush.bf16.xpose.msra.mxu0 0
      %1068 = vmatpush.bf16.xpose.msra.mxu0 0
      %1069 = vmatpush.bf16.xpose.msra.mxu0 %v1060
      %1070 = vmatmul.bf16.gmra.mxu0 %v1057
      %v1071 = vpop.f32.mrf.mxu0
      %v1072 = vadd.f32 0.0, %v1071
      %v1073 = vpop.f32.mrf.mxu0
      %1074 = vdwg.mxu0
      %v1077 = vunpack.c.l.b16 %v768
      %v1078 = vunpack.c.l.b16 %v769
      %v1079 = vpack.c.b16 %v1078, %v1077
      %v1081 = vsel %vm815, %v741, 0
      %v1084 = vsel %vm815, %v1079, 0
      %1086 = vmatpush.bf16.xpose.msra.mxu0 0
      %1087 = vmatpush.bf16.xpose.msra.mxu0 0
      %1088 = vmatpush.bf16.xpose.msra.mxu0 0
      %1089 = vmatpush.bf16.xpose.msra.mxu0 0
      %1090 = vmatpush.bf16.xpose.msra.mxu0 0
      %1091 = vmatpush.bf16.xpose.msra.mxu0 0
      %1092 = vmatpush.bf16.xpose.msra.mxu0 0
      %1093 = vmatpush.bf16.xpose.msra.mxu0 %v1084
      %1094 = vmatmul.bf16.gmra.mxu0 %v1081
      %v1095 = vpop.f32.mrf.mxu0
      %v1096 = vadd.f32 0.0, %v1095
      %v1097 = vpop.f32.mrf.mxu0
      %1098 = vdwg.mxu0
      %v1101 = vunpack.c.l.b16 %v770
      %v1102 = vunpack.c.l.b16 %v771
      %v1103 = vpack.c.b16 %v1102, %v1101
      %v1105 = vsel %vm815, %v742, 0
      %v1108 = vsel %vm815, %v1103, 0
      %1110 = vmatpush.bf16.xpose.msra.mxu0 0
      %1111 = vmatpush.bf16.xpose.msra.mxu0 0
      %1112 = vmatpush.bf16.xpose.msra.mxu0 0
      %1113 = vmatpush.bf16.xpose.msra.mxu0 0
      %1114 = vmatpush.bf16.xpose.msra.mxu0 0
      %1115 = vmatpush.bf16.xpose.msra.mxu0 0
      %1116 = vmatpush.bf16.xpose.msra.mxu0 0
      %1117 = vmatpush.bf16.xpose.msra.mxu0 %v1108
      %1118 = vmatmul.bf16.gmra.mxu0 %v1105
      %v1119 = vpop.f32.mrf.mxu0
      %v1120 = vadd.f32 0.0, %v1119
      %v1121 = vpop.f32.mrf.mxu0
      %1122 = vdwg.mxu0
      %v1125 = vunpack.c.l.b16 %v772
      %v1126 = vunpack.c.l.b16 %v773
      %v1127 = vpack.c.b16 %v1126, %v1125
      %v1129 = vsel %vm815, %v743, 0
      %v1132 = vsel %vm815, %v1127, 0
      %1134 = vmatpush.bf16.xpose.msra.mxu0 0
      %1135 = vmatpush.bf16.xpose.msra.mxu0 0
      %1136 = vmatpush.bf16.xpose.msra.mxu0 0
      %1137 = vmatpush.bf16.xpose.msra.mxu0 0
      %1138 = vmatpush.bf16.xpose.msra.mxu0 0
      %1139 = vmatpush.bf16.xpose.msra.mxu0 0
      %1140 = vmatpush.bf16.xpose.msra.mxu0 0
      %1141 = vmatpush.bf16.xpose.msra.mxu0 %v1132
      %1142 = vmatmul.bf16.gmra.mxu0 %v1129
      %v1143 = vpop.f32.mrf.mxu0
      %v1144 = vadd.f32 0.0, %v1143
      %v1145 = vpop.f32.mrf.mxu0
      %1146 = vdwg.mxu0
      %v1149 = vunpack.c.l.b16 %v774
      %v1150 = vunpack.c.l.b16 %v775
      %v1151 = vpack.c.b16 %v1150, %v1149
      %v1153 = vsel %vm815, %v744, 0
      %v1156 = vsel %vm815, %v1151, 0
      %1158 = vmatpush.bf16.xpose.msra.mxu0 0
      %1159 = vmatpush.bf16.xpose.msra.mxu0 0
      %1160 = vmatpush.bf16.xpose.msra.mxu0 0
      %1161 = vmatpush.bf16.xpose.msra.mxu0 0
      %1162 = vmatpush.bf16.xpose.msra.mxu0 0
      %1163 = vmatpush.bf16.xpose.msra.mxu0 0
      %1164 = vmatpush.bf16.xpose.msra.mxu0 0
      %1165 = vmatpush.bf16.xpose.msra.mxu0 %v1156
      %1166 = vmatmul.bf16.gmra.mxu0 %v1153
      %v1167 = vpop.f32.mrf.mxu0
      %v1168 = vadd.f32 0.0, %v1167
      %v1169 = vpop.f32.mrf.mxu0
      %1170 = vdwg.mxu0
      %v1173 = vunpack.c.l.b16 %v776
      %v1174 = vunpack.c.l.b16 %v777
      %v1175 = vpack.c.b16 %v1174, %v1173
      %v1177 = vsel %vm815, %v745, 0
      %v1180 = vsel %vm815, %v1175, 0
      %1182 = vmatpush.bf16.xpose.msra.mxu0 0
      %1183 = vmatpush.bf16.xpose.msra.mxu0 0
      %1184 = vmatpush.bf16.xpose.msra.mxu0 0
      %1185 = vmatpush.bf16.xpose.msra.mxu0 0
      %1186 = vmatpush.bf16.xpose.msra.mxu0 0
      %1187 = vmatpush.bf16.xpose.msra.mxu0 0
      %1188 = vmatpush.bf16.xpose.msra.mxu0 0
      %1189 = vmatpush.bf16.xpose.msra.mxu0 %v1180
      %1190 = vmatmul.bf16.gmra.mxu0 %v1177
      %v1191 = vpop.f32.mrf.mxu0
      %v1192 = vadd.f32 0.0, %v1191
      %v1193 = vpop.f32.mrf.mxu0
      %1194 = vdwg.mxu0
      %v1195 = vsel %vm815, %v832, -inf
      %1196 = vmax.xlane.f32.xlu0 %v1195
      %v1197 = vpop.xlane.xlu0 %1196
      %v1198 = vsel %vm815, %v856, -inf
      %1199 = vmax.xlane.f32.xlu0 %v1198
      %v1200 = vpop.xlane.xlu0 %1199
      %v1201 = vsel %vm815, %v880, -inf
      %1202 = vmax.xlane.f32.xlu0 %v1201
      %v1203 = vpop.xlane.xlu0 %1202
      %v1204 = vsel %vm815, %v904, -inf
      %1205 = vmax.xlane.f32.xlu0 %v1204
      %v1206 = vpop.xlane.xlu0 %1205
      %v1207 = vsel %vm815, %v928, -inf
      %1208 = vmax.xlane.f32.xlu0 %v1207
      %v1209 = vpop.xlane.xlu0 %1208
      %v1210 = vsel %vm815, %v952, -inf
      %1211 = vmax.xlane.f32.xlu0 %v1210
      %v1212 = vpop.xlane.xlu0 %1211
      %v1213 = vsel %vm815, %v976, -inf
      %1214 = vmax.xlane.f32.xlu0 %v1213
      %v1215 = vpop.xlane.xlu0 %1214
      %v1216 = vsel %vm815, %v1000, -inf
      %1217 = vmax.xlane.f32.xlu0 %v1216
      %v1218 = vpop.xlane.xlu0 %1217
      %v1219 = vsel %vm815, %v1024, -inf
      %1220 = vmax.xlane.f32.xlu0 %v1219
      %v1221 = vpop.xlane.xlu0 %1220
      %v1222 = vsel %vm815, %v1048, -inf
      %1223 = vmax.xlane.f32.xlu0 %v1222
      %v1224 = vpop.xlane.xlu0 %1223
      %v1225 = vsel %vm815, %v1072, -inf
      %1226 = vmax.xlane.f32.xlu0 %v1225
      %v1227 = vpop.xlane.xlu0 %1226
      %v1228 = vsel %vm815, %v1096, -inf
      %1229 = vmax.xlane.f32.xlu0 %v1228
      %v1230 = vpop.xlane.xlu0 %1229
      %v1231 = vsel %vm815, %v1120, -inf
      %1232 = vmax.xlane.f32.xlu0 %v1231
      %v1233 = vpop.xlane.xlu0 %1232
      %v1234 = vsel %vm815, %v1144, -inf
      %1235 = vmax.xlane.f32.xlu0 %v1234
      %v1236 = vpop.xlane.xlu0 %1235
      %v1237 = vsel %vm815, %v1168, -inf
      %1238 = vmax.xlane.f32.xlu0 %v1237
      %v1239 = vpop.xlane.xlu0 %1238
      %v1240 = vsel %vm815, %v1192, -inf
      %1241 = vmax.xlane.f32.xlu0 %v1240
      %v1242 = vpop.xlane.xlu0 %1241
      %v1243 = vsub.f32 %v832, %v1197
      %v1244 = vsub.f32 %v856, %v1200
      %v1245 = vsub.f32 %v880, %v1203
      %v1246 = vsub.f32 %v904, %v1206
      %v1247 = vsub.f32 %v928, %v1209
      %v1248 = vsub.f32 %v952, %v1212
      %v1249 = vsub.f32 %v976, %v1215
      %v1250 = vsub.f32 %v1000, %v1218
      %v1251 = vsub.f32 %v1024, %v1221
      %v1252 = vsub.f32 %v1048, %v1224
      %v1253 = vsub.f32 %v1072, %v1227
      %v1254 = vsub.f32 %v1096, %v1230
      %v1255 = vsub.f32 %v1120, %v1233
      %v1256 = vsub.f32 %v1144, %v1236
      %v1257 = vsub.f32 %v1168, %v1239
      %v1258 = vsub.f32 %v1192, %v1242
      %v1259 = vmul.f32 %v1243, 1.442695
      %v1260 = vpow.pop %v1259
      %v1261 = vmul.f32 %v1244, 1.442695
      %v1262 = vpow.pop %v1261
      %v1263 = vmul.f32 %v1245, 1.442695
      %v1264 = vpow.pop %v1263
      %v1265 = vmul.f32 %v1246, 1.442695
      %v1266 = vpow.pop %v1265
      %v1267 = vmul.f32 %v1247, 1.442695
      %v1268 = vpow.pop %v1267
      %v1269 = vmul.f32 %v1248, 1.442695
      %v1270 = vpow.pop %v1269
      %v1271 = vmul.f32 %v1249, 1.442695
      %v1272 = vpow.pop %v1271
      %v1273 = vmul.f32 %v1250, 1.442695
      %v1274 = vpow.pop %v1273
      %v1275 = vmul.f32 %v1251, 1.442695
      %v1276 = vpow.pop %v1275
      %v1277 = vmul.f32 %v1252, 1.442695
      %v1278 = vpow.pop %v1277
      %v1279 = vmul.f32 %v1253, 1.442695
      %v1280 = vpow.pop %v1279
      %v1281 = vmul.f32 %v1254, 1.442695
      %v1282 = vpow.pop %v1281
      %v1283 = vmul.f32 %v1255, 1.442695
      %v1284 = vpow.pop %v1283
      %v1285 = vmul.f32 %v1256, 1.442695
      %v1286 = vpow.pop %v1285
      %v1287 = vmul.f32 %v1257, 1.442695
      %v1288 = vpow.pop %v1287
      %v1289 = vmul.f32 %v1258, 1.442695
      %v1290 = vpow.pop %v1289
      %v1291 = vsel %vm815, %v1260, 0.0
      %1292 = vadd.xlane.f32.xlu0 %v1291
      %v1293 = vpop.xlane.xlu0 %1292
      %v1294 = vsel %vm815, %v1262, 0.0
      %1295 = vadd.xlane.f32.xlu0 %v1294
      %v1296 = vpop.xlane.xlu0 %1295
      %v1297 = vsel %vm815, %v1264, 0.0
      %1298 = vadd.xlane.f32.xlu0 %v1297
      %v1299 = vpop.xlane.xlu0 %1298
      %v1300 = vsel %vm815, %v1266, 0.0
      %1301 = vadd.xlane.f32.xlu0 %v1300
      %v1302 = vpop.xlane.xlu0 %1301
      %v1303 = vsel %vm815, %v1268, 0.0
      %1304 = vadd.xlane.f32.xlu0 %v1303
      %v1305 = vpop.xlane.xlu0 %1304
      %v1306 = vsel %vm815, %v1270, 0.0
      %1307 = vadd.xlane.f32.xlu0 %v1306
      %v1308 = vpop.xlane.xlu0 %1307
      %v1309 = vsel %vm815, %v1272, 0.0
      %1310 = vadd.xlane.f32.xlu0 %v1309
      %v1311 = vpop.xlane.xlu0 %1310
      %v1312 = vsel %vm815, %v1274, 0.0
      %1313 = vadd.xlane.f32.xlu0 %v1312
      %v1314 = vpop.xlane.xlu0 %1313
      %v1315 = vsel %vm815, %v1276, 0.0
      %1316 = vadd.xlane.f32.xlu0 %v1315
      %v1317 = vpop.xlane.xlu0 %1316
      %v1318 = vsel %vm815, %v1278, 0.0
      %1319 = vadd.xlane.f32.xlu0 %v1318
      %v1320 = vpop.xlane.xlu0 %1319
      %v1321 = vsel %vm815, %v1280, 0.0
      %1322 = vadd.xlane.f32.xlu0 %v1321
      %v1323 = vpop.xlane.xlu0 %1322
      %v1324 = vsel %vm815, %v1282, 0.0
      %1325 = vadd.xlane.f32.xlu0 %v1324
      %v1326 = vpop.xlane.xlu0 %1325
      %v1327 = vsel %vm815, %v1284, 0.0
      %1328 = vadd.xlane.f32.xlu0 %v1327
      %v1329 = vpop.xlane.xlu0 %1328
      %v1330 = vsel %vm815, %v1286, 0.0
      %1331 = vadd.xlane.f32.xlu0 %v1330
      %v1332 = vpop.xlane.xlu0 %1331
      %v1333 = vsel %vm815, %v1288, 0.0
      %1334 = vadd.xlane.f32.xlu0 %v1333
      %v1335 = vpop.xlane.xlu0 %1334
      %v1336 = vsel %vm815, %v1290, 0.0
      %1337 = vadd.xlane.f32.xlu0 %v1336
      %v1338 = vpop.xlane.xlu0 %1337
      %v1339 = vrcp.pop %v1293
      %v1340 = vmul.f32 %v1293, %v1339
      %v1341 = vsub.f32 1.0, %v1340
      %v1342 = vmul.f32 %v1339, %v1341
      %v1343 = vadd.f32 %v1339, %v1342
      %vm1344 = vweird.f32 %v1293
      %vm1345 = vweird.f32 %v1339
      %vm1346 = vmor %vm1344, %vm1345
      %v1347 = vsel %vm1346, %v1339, %v1343
      %v1348 = vand.u32 2147483647, %v1293
      %vm1349 = vcmp.eq.f32.partialorder %v1348, 8.507059e+37
      %v1350 = vand.u32 %v1293, 2147483648
      %v1351 = vor.u32 1.1754944e-38, %v1350
      %v1352 = vsel %vm1349, %v1351, %v1347
      %v1353 = vrcp.pop %v1296
      %v1354 = vmul.f32 %v1296, %v1353
      %v1355 = vsub.f32 1.0, %v1354
      %v1356 = vmul.f32 %v1353, %v1355
      %v1357 = vadd.f32 %v1353, %v1356
      %vm1358 = vweird.f32 %v1296
      %vm1359 = vweird.f32 %v1353
      %vm1360 = vmor %vm1358, %vm1359
      %v1361 = vsel %vm1360, %v1353, %v1357
      %v1362 = vand.u32 2147483647, %v1296
      %vm1363 = vcmp.eq.f32.partialorder %v1362, 8.507059e+37
      %v1364 = vand.u32 %v1296, 2147483648
      %v1365 = vor.u32 1.1754944e-38, %v1364
      %v1366 = vsel %vm1363, %v1365, %v1361
      %v1367 = vrcp.pop %v1299
      %v1368 = vmul.f32 %v1299, %v1367
      %v1369 = vsub.f32 1.0, %v1368
      %v1370 = vmul.f32 %v1367, %v1369
      %v1371 = vadd.f32 %v1367, %v1370
      %vm1372 = vweird.f32 %v1299
      %vm1373 = vweird.f32 %v1367
      %vm1374 = vmor %vm1372, %vm1373
      %v1375 = vsel %vm1374, %v1367, %v1371
      %v1376 = vand.u32 2147483647, %v1299
      %vm1377 = vcmp.eq.f32.partialorder %v1376, 8.507059e+37
      %v1378 = vand.u32 %v1299, 2147483648
      %v1379 = vor.u32 1.1754944e-38, %v1378
      %v1380 = vsel %vm1377, %v1379, %v1375
      %v1381 = vrcp.pop %v1302
      %v1382 = vmul.f32 %v1302, %v1381
      %v1383 = vsub.f32 1.0, %v1382
      %v1384 = vmul.f32 %v1381, %v1383
      %v1385 = vadd.f32 %v1381, %v1384
      %vm1386 = vweird.f32 %v1302
      %vm1387 = vweird.f32 %v1381
      %vm1388 = vmor %vm1386, %vm1387
      %v1389 = vsel %vm1388, %v1381, %v1385
      %v1390 = vand.u32 2147483647, %v1302
      %vm1391 = vcmp.eq.f32.partialorder %v1390, 8.507059e+37
      %v1392 = vand.u32 %v1302, 2147483648
      %v1393 = vor.u32 1.1754944e-38, %v1392
      %v1394 = vsel %vm1391, %v1393, %v1389
      %v1395 = vrcp.pop %v1305
      %v1396 = vmul.f32 %v1305, %v1395
      %v1397 = vsub.f32 1.0, %v1396
      %v1398 = vmul.f32 %v1395, %v1397
      %v1399 = vadd.f32 %v1395, %v1398
      %vm1400 = vweird.f32 %v1305
      %vm1401 = vweird.f32 %v1395
      %vm1402 = vmor %vm1400, %vm1401
      %v1403 = vsel %vm1402, %v1395, %v1399
      %v1404 = vand.u32 2147483647, %v1305
      %vm1405 = vcmp.eq.f32.partialorder %v1404, 8.507059e+37
      %v1406 = vand.u32 %v1305, 2147483648
      %v1407 = vor.u32 1.1754944e-38, %v1406
      %v1408 = vsel %vm1405, %v1407, %v1403
      %v1409 = vrcp.pop %v1308
      %v1410 = vmul.f32 %v1308, %v1409
      %v1411 = vsub.f32 1.0, %v1410
      %v1412 = vmul.f32 %v1409, %v1411
      %v1413 = vadd.f32 %v1409, %v1412
      %vm1414 = vweird.f32 %v1308
      %vm1415 = vweird.f32 %v1409
      %vm1416 = vmor %vm1414, %vm1415
      %v1417 = vsel %vm1416, %v1409, %v1413
      %v1418 = vand.u32 2147483647, %v1308
      %vm1419 = vcmp.eq.f32.partialorder %v1418, 8.507059e+37
      %v1420 = vand.u32 %v1308, 2147483648
      %v1421 = vor.u32 1.1754944e-38, %v1420
      %v1422 = vsel %vm1419, %v1421, %v1417
      %v1423 = vrcp.pop %v1311
      %v1424 = vmul.f32 %v1311, %v1423
      %v1425 = vsub.f32 1.0, %v1424
      %v1426 = vmul.f32 %v1423, %v1425
      %v1427 = vadd.f32 %v1423, %v1426
      %vm1428 = vweird.f32 %v1311
      %vm1429 = vweird.f32 %v1423
      %vm1430 = vmor %vm1428, %vm1429
      %v1431 = vsel %vm1430, %v1423, %v1427
      %v1432 = vand.u32 2147483647, %v1311
      %vm1433 = vcmp.eq.f32.partialorder %v1432, 8.507059e+37
      %v1434 = vand.u32 %v1311, 2147483648
      %v1435 = vor.u32 1.1754944e-38, %v1434
      %v1436 = vsel %vm1433, %v1435, %v1431
      %v1437 = vrcp.pop %v1314
      %v1438 = vmul.f32 %v1314, %v1437
      %v1439 = vsub.f32 1.0, %v1438
      %v1440 = vmul.f32 %v1437, %v1439
      %v1441 = vadd.f32 %v1437, %v1440
      %vm1442 = vweird.f32 %v1314
      %vm1443 = vweird.f32 %v1437
      %vm1444 = vmor %vm1442, %vm1443
      %v1445 = vsel %vm1444, %v1437, %v1441
      %v1446 = vand.u32 2147483647, %v1314
      %vm1447 = vcmp.eq.f32.partialorder %v1446, 8.507059e+37
      %v1448 = vand.u32 %v1314, 2147483648
      %v1449 = vor.u32 1.1754944e-38, %v1448
      %v1450 = vsel %vm1447, %v1449, %v1445
      %v1451 = vrcp.pop %v1317
      %v1452 = vmul.f32 %v1317, %v1451
      %v1453 = vsub.f32 1.0, %v1452
      %v1454 = vmul.f32 %v1451, %v1453
      %v1455 = vadd.f32 %v1451, %v1454
      %vm1456 = vweird.f32 %v1317
      %vm1457 = vweird.f32 %v1451
      %vm1458 = vmor %vm1456, %vm1457
      %v1459 = vsel %vm1458, %v1451, %v1455
      %v1460 = vand.u32 2147483647, %v1317
      %vm1461 = vcmp.eq.f32.partialorder %v1460, 8.507059e+37
      %v1462 = vand.u32 %v1317, 2147483648
      %v1463 = vor.u32 1.1754944e-38, %v1462
      %v1464 = vsel %vm1461, %v1463, %v1459
      %v1465 = vrcp.pop %v1320
      %v1466 = vmul.f32 %v1320, %v1465
      %v1467 = vsub.f32 1.0, %v1466
      %v1468 = vmul.f32 %v1465, %v1467
      %v1469 = vadd.f32 %v1465, %v1468
      %vm1470 = vweird.f32 %v1320
      %vm1471 = vweird.f32 %v1465
      %vm1472 = vmor %vm1470, %vm1471
      %v1473 = vsel %vm1472, %v1465, %v1469
      %v1474 = vand.u32 2147483647, %v1320
      %vm1475 = vcmp.eq.f32.partialorder %v1474, 8.507059e+37
      %v1476 = vand.u32 %v1320, 2147483648
      %v1477 = vor.u32 1.1754944e-38, %v1476
      %v1478 = vsel %vm1475, %v1477, %v1473
      %v1479 = vrcp.pop %v1323
      %v1480 = vmul.f32 %v1323, %v1479
      %v1481 = vsub.f32 1.0, %v1480
      %v1482 = vmul.f32 %v1479, %v1481
      %v1483 = vadd.f32 %v1479, %v1482
      %vm1484 = vweird.f32 %v1323
      %vm1485 = vweird.f32 %v1479
      %vm1486 = vmor %vm1484, %vm1485
      %v1487 = vsel %vm1486, %v1479, %v1483
      %v1488 = vand.u32 2147483647, %v1323
      %vm1489 = vcmp.eq.f32.partialorder %v1488, 8.507059e+37
      %v1490 = vand.u32 %v1323, 2147483648
      %v1491 = vor.u32 1.1754944e-38, %v1490
      %v1492 = vsel %vm1489, %v1491, %v1487
      %v1493 = vrcp.pop %v1326
      %v1494 = vmul.f32 %v1326, %v1493
      %v1495 = vsub.f32 1.0, %v1494
      %v1496 = vmul.f32 %v1493, %v1495
      %v1497 = vadd.f32 %v1493, %v1496
      %vm1498 = vweird.f32 %v1326
      %vm1499 = vweird.f32 %v1493
      %vm1500 = vmor %vm1498, %vm1499
      %v1501 = vsel %vm1500, %v1493, %v1497
      %v1502 = vand.u32 2147483647, %v1326
      %vm1503 = vcmp.eq.f32.partialorder %v1502, 8.507059e+37
      %v1504 = vand.u32 %v1326, 2147483648
      %v1505 = vor.u32 1.1754944e-38, %v1504
      %v1506 = vsel %vm1503, %v1505, %v1501
      %v1507 = vrcp.pop %v1329
      %v1508 = vmul.f32 %v1329, %v1507
      %v1509 = vsub.f32 1.0, %v1508
      %v1510 = vmul.f32 %v1507, %v1509
      %v1511 = vadd.f32 %v1507, %v1510
      %vm1512 = vweird.f32 %v1329
      %vm1513 = vweird.f32 %v1507
      %vm1514 = vmor %vm1512, %vm1513
      %v1515 = vsel %vm1514, %v1507, %v1511
      %v1516 = vand.u32 2147483647, %v1329
      %vm1517 = vcmp.eq.f32.partialorder %v1516, 8.507059e+37
      %v1518 = vand.u32 %v1329, 2147483648
      %v1519 = vor.u32 1.1754944e-38, %v1518
      %v1520 = vsel %vm1517, %v1519, %v1515
      %v1521 = vrcp.pop %v1332
      %v1522 = vmul.f32 %v1332, %v1521
      %v1523 = vsub.f32 1.0, %v1522
      %v1524 = vmul.f32 %v1521, %v1523
      %v1525 = vadd.f32 %v1521, %v1524
      %vm1526 = vweird.f32 %v1332
      %vm1527 = vweird.f32 %v1521
      %vm1528 = vmor %vm1526, %vm1527
      %v1529 = vsel %vm1528, %v1521, %v1525
      %v1530 = vand.u32 2147483647, %v1332
      %vm1531 = vcmp.eq.f32.partialorder %v1530, 8.507059e+37
      %v1532 = vand.u32 %v1332, 2147483648
      %v1533 = vor.u32 1.1754944e-38, %v1532
      %v1534 = vsel %vm1531, %v1533, %v1529
      %v1535 = vrcp.pop %v1335
      %v1536 = vmul.f32 %v1335, %v1535
      %v1537 = vsub.f32 1.0, %v1536
      %v1538 = vmul.f32 %v1535, %v1537
      %v1539 = vadd.f32 %v1535, %v1538
      %vm1540 = vweird.f32 %v1335
      %vm1541 = vweird.f32 %v1535
      %vm1542 = vmor %vm1540, %vm1541
      %v1543 = vsel %vm1542, %v1535, %v1539
      %v1544 = vand.u32 2147483647, %v1335
      %vm1545 = vcmp.eq.f32.partialorder %v1544, 8.507059e+37
      %v1546 = vand.u32 %v1335, 2147483648
      %v1547 = vor.u32 1.1754944e-38, %v1546
      %v1548 = vsel %vm1545, %v1547, %v1543
      %v1549 = vrcp.pop %v1338
      %v1550 = vmul.f32 %v1338, %v1549
      %v1551 = vsub.f32 1.0, %v1550
      %v1552 = vmul.f32 %v1549, %v1551
      %v1553 = vadd.f32 %v1549, %v1552
      %vm1554 = vweird.f32 %v1338
      %vm1555 = vweird.f32 %v1549
      %vm1556 = vmor %vm1554, %vm1555
      %v1557 = vsel %vm1556, %v1549, %v1553
      %v1558 = vand.u32 2147483647, %v1338
      %vm1559 = vcmp.eq.f32.partialorder %v1558, 8.507059e+37
      %v1560 = vand.u32 %v1338, 2147483648
      %v1561 = vor.u32 1.1754944e-38, %v1560
      %v1562 = vsel %vm1559, %v1561, %v1557
      %v1563 = vmul.f32 %v1260, %v1352
      %v1564 = vmul.f32 %v1262, %v1366
      %v1565 = vmul.f32 %v1264, %v1380
      %v1566 = vmul.f32 %v1266, %v1394
      %v1567 = vmul.f32 %v1268, %v1408
      %v1568 = vmul.f32 %v1270, %v1422
      %v1569 = vmul.f32 %v1272, %v1436
      %v1570 = vmul.f32 %v1274, %v1450
      %v1571 = vmul.f32 %v1276, %v1464
      %v1572 = vmul.f32 %v1278, %v1478
      %v1573 = vmul.f32 %v1280, %v1492
      %v1574 = vmul.f32 %v1282, %v1506
      %v1575 = vmul.f32 %v1284, %v1520
      %v1576 = vmul.f32 %v1286, %v1534
      %v1577 = vmul.f32 %v1288, %v1548
      %v1578 = vmul.f32 %v1290, %v1562
      %v1579 = vpack.c.bf16 %v1563, %v1563
      %v1580 = vpack.c.bf16 %v1564, %v1564
      %v1581 = vpack.c.bf16 %v1565, %v1565
      %v1582 = vpack.c.bf16 %v1566, %v1566
      %v1583 = vpack.c.bf16 %v1567, %v1567
      %v1584 = vpack.c.bf16 %v1568, %v1568
      %v1585 = vpack.c.bf16 %v1569, %v1569
      %v1586 = vpack.c.bf16 %v1570, %v1570
      %v1587 = vpack.c.bf16 %v1571, %v1571
      %v1588 = vpack.c.bf16 %v1572, %v1572
      %v1589 = vpack.c.bf16 %v1573, %v1573
      %v1590 = vpack.c.bf16 %v1574, %v1574
      %v1591 = vpack.c.bf16 %v1575, %v1575
      %v1592 = vpack.c.bf16 %v1576, %v1576
      %v1593 = vpack.c.bf16 %v1577, %v1577
      %v1594 = vpack.c.bf16 %v1578, %v1578
      %v1597 = vunpack.c.l.b16 %v778
      %v1598 = vunpack.c.l.b16 %v779
      %v1599 = vpack.c.b16 %v1598, %v1597
      %v1602 = vsel %vm815, %v1579, 0
      %1604 = vmatpush.bf16.msra.mxu0 0
      %1605 = vmatpush.bf16.msra.mxu0 0
      %1606 = vmatpush.bf16.msra.mxu0 0
      %1607 = vmatpush.bf16.msra.mxu0 0
      %1608 = vmatpush.bf16.msra.mxu0 0
      %1609 = vmatpush.bf16.msra.mxu0 0
      %1610 = vmatpush.bf16.msra.mxu0 0
      %1611 = vmatpush.bf16.msra.mxu0 %v1599
      %1612 = vmatmul.bf16.gmra.mxu0 %v1602
      %v1613 = vpop.f32.mrf.mxu0
      %v1614 = vadd.f32 0.0, %v1613
      %v1615 = vpop.f32.mrf.mxu0
      %1616 = vdwg.mxu0
      %v1619 = vunpack.c.l.b16 %v780
      %v1620 = vunpack.c.l.b16 %v781
      %v1621 = vpack.c.b16 %v1620, %v1619
      %v1624 = vsel %vm815, %v1580, 0
      %1626 = vmatpush.bf16.msra.mxu0 0
      %1627 = vmatpush.bf16.msra.mxu0 0
      %1628 = vmatpush.bf16.msra.mxu0 0
      %1629 = vmatpush.bf16.msra.mxu0 0
      %1630 = vmatpush.bf16.msra.mxu0 0
      %1631 = vmatpush.bf16.msra.mxu0 0
      %1632 = vmatpush.bf16.msra.mxu0 0
      %1633 = vmatpush.bf16.msra.mxu0 %v1621
      %1634 = vmatmul.bf16.gmra.mxu0 %v1624
      %v1635 = vpop.f32.mrf.mxu0
      %v1636 = vadd.f32 0.0, %v1635
      %v1637 = vpop.f32.mrf.mxu0
      %1638 = vdwg.mxu0
      %v1641 = vunpack.c.l.b16 %v782
      %v1642 = vunpack.c.l.b16 %v783
      %v1643 = vpack.c.b16 %v1642, %v1641
      %v1646 = vsel %vm815, %v1581, 0
      %1648 = vmatpush.bf16.msra.mxu0 0
      %1649 = vmatpush.bf16.msra.mxu0 0
      %1650 = vmatpush.bf16.msra.mxu0 0
      %1651 = vmatpush.bf16.msra.mxu0 0
      %1652 = vmatpush.bf16.msra.mxu0 0
      %1653 = vmatpush.bf16.msra.mxu0 0
      %1654 = vmatpush.bf16.msra.mxu0 0
      %1655 = vmatpush.bf16.msra.mxu0 %v1643
      %1656 = vmatmul.bf16.gmra.mxu0 %v1646
      %v1657 = vpop.f32.mrf.mxu0
      %v1658 = vadd.f32 0.0, %v1657
      %v1659 = vpop.f32.mrf.mxu0
      %1660 = vdwg.mxu0
      %v1663 = vunpack.c.l.b16 %v784
      %v1664 = vunpack.c.l.b16 %v785
      %v1665 = vpack.c.b16 %v1664, %v1663
      %v1668 = vsel %vm815, %v1582, 0
      %1670 = vmatpush.bf16.msra.mxu0 0
      %1671 = vmatpush.bf16.msra.mxu0 0
      %1672 = vmatpush.bf16.msra.mxu0 0
      %1673 = vmatpush.bf16.msra.mxu0 0
      %1674 = vmatpush.bf16.msra.mxu0 0
      %1675 = vmatpush.bf16.msra.mxu0 0
      %1676 = vmatpush.bf16.msra.mxu0 0
      %1677 = vmatpush.bf16.msra.mxu0 %v1665
      %1678 = vmatmul.bf16.gmra.mxu0 %v1668
      %v1679 = vpop.f32.mrf.mxu0
      %v1680 = vadd.f32 0.0, %v1679
      %v1681 = vpop.f32.mrf.mxu0
      %1682 = vdwg.mxu0
      %v1685 = vunpack.c.l.b16 %v786
      %v1686 = vunpack.c.l.b16 %v787
      %v1687 = vpack.c.b16 %v1686, %v1685
      %v1690 = vsel %vm815, %v1583, 0
      %1692 = vmatpush.bf16.msra.mxu0 0
      %1693 = vmatpush.bf16.msra.mxu0 0
      %1694 = vmatpush.bf16.msra.mxu0 0
      %1695 = vmatpush.bf16.msra.mxu0 0
      %1696 = vmatpush.bf16.msra.mxu0 0
      %1697 = vmatpush.bf16.msra.mxu0 0
      %1698 = vmatpush.bf16.msra.mxu0 0
      %1699 = vmatpush.bf16.msra.mxu0 %v1687
      %1700 = vmatmul.bf16.gmra.mxu0 %v1690
      %v1701 = vpop.f32.mrf.mxu0
      %v1702 = vadd.f32 0.0, %v1701
      %v1703 = vpop.f32.mrf.mxu0
      %1704 = vdwg.mxu0
      %v1707 = vunpack.c.l.b16 %v788
      %v1708 = vunpack.c.l.b16 %v789
      %v1709 = vpack.c.b16 %v1708, %v1707
      %v1712 = vsel %vm815, %v1584, 0
      %1714 = vmatpush.bf16.msra.mxu0 0
      %1715 = vmatpush.bf16.msra.mxu0 0
      %1716 = vmatpush.bf16.msra.mxu0 0
      %1717 = vmatpush.bf16.msra.mxu0 0
      %1718 = vmatpush.bf16.msra.mxu0 0
      %1719 = vmatpush.bf16.msra.mxu0 0
      %1720 = vmatpush.bf16.msra.mxu0 0
      %1721 = vmatpush.bf16.msra.mxu0 %v1709
      %1722 = vmatmul.bf16.gmra.mxu0 %v1712
      %v1723 = vpop.f32.mrf.mxu0
      %v1724 = vadd.f32 0.0, %v1723
      %v1725 = vpop.f32.mrf.mxu0
      %1726 = vdwg.mxu0
      %v1729 = vunpack.c.l.b16 %v790
      %v1730 = vunpack.c.l.b16 %v791
      %v1731 = vpack.c.b16 %v1730, %v1729
      %v1734 = vsel %vm815, %v1585, 0
      %1736 = vmatpush.bf16.msra.mxu0 0
      %1737 = vmatpush.bf16.msra.mxu0 0
      %1738 = vmatpush.bf16.msra.mxu0 0
      %1739 = vmatpush.bf16.msra.mxu0 0
      %1740 = vmatpush.bf16.msra.mxu0 0
      %1741 = vmatpush.bf16.msra.mxu0 0
      %1742 = vmatpush.bf16.msra.mxu0 0
      %1743 = vmatpush.bf16.msra.mxu0 %v1731
      %1744 = vmatmul.bf16.gmra.mxu0 %v1734
      %v1745 = vpop.f32.mrf.mxu0
      %v1746 = vadd.f32 0.0, %v1745
      %v1747 = vpop.f32.mrf.mxu0
      %1748 = vdwg.mxu0
      %v1751 = vunpack.c.l.b16 %v792
      %v1752 = vunpack.c.l.b16 %v793
      %v1753 = vpack.c.b16 %v1752, %v1751
      %v1756 = vsel %vm815, %v1586, 0
      %1758 = vmatpush.bf16.msra.mxu0 0
      %1759 = vmatpush.bf16.msra.mxu0 0
      %1760 = vmatpush.bf16.msra.mxu0 0
      %1761 = vmatpush.bf16.msra.mxu0 0
      %1762 = vmatpush.bf16.msra.mxu0 0
      %1763 = vmatpush.bf16.msra.mxu0 0
      %1764 = vmatpush.bf16.msra.mxu0 0
      %1765 = vmatpush.bf16.msra.mxu0 %v1753
      %1766 = vmatmul.bf16.gmra.mxu0 %v1756
      %v1767 = vpop.f32.mrf.mxu0
      %v1768 = vadd.f32 0.0, %v1767
      %v1769 = vpop.f32.mrf.mxu0
      %1770 = vdwg.mxu0
      %v1773 = vunpack.c.l.b16 %v794
      %v1774 = vunpack.c.l.b16 %v795
      %v1775 = vpack.c.b16 %v1774, %v1773
      %v1778 = vsel %vm815, %v1587, 0
      %1780 = vmatpush.bf16.msra.mxu0 0
      %1781 = vmatpush.bf16.msra.mxu0 0
      %1782 = vmatpush.bf16.msra.mxu0 0
      %1783 = vmatpush.bf16.msra.mxu0 0
      %1784 = vmatpush.bf16.msra.mxu0 0
      %1785 = vmatpush.bf16.msra.mxu0 0
      %1786 = vmatpush.bf16.msra.mxu0 0
      %1787 = vmatpush.bf16.msra.mxu0 %v1775
      %1788 = vmatmul.bf16.gmra.mxu0 %v1778
      %v1789 = vpop.f32.mrf.mxu0
      %v1790 = vadd.f32 0.0, %v1789
      %v1791 = vpop.f32.mrf.mxu0
      %1792 = vdwg.mxu0
      %v1795 = vunpack.c.l.b16 %v796
      %v1796 = vunpack.c.l.b16 %v797
      %v1797 = vpack.c.b16 %v1796, %v1795
      %v1800 = vsel %vm815, %v1588, 0
      %1802 = vmatpush.bf16.msra.mxu0 0
      %1803 = vmatpush.bf16.msra.mxu0 0
      %1804 = vmatpush.bf16.msra.mxu0 0
      %1805 = vmatpush.bf16.msra.mxu0 0
      %1806 = vmatpush.bf16.msra.mxu0 0
      %1807 = vmatpush.bf16.msra.mxu0 0
      %1808 = vmatpush.bf16.msra.mxu0 0
      %1809 = vmatpush.bf16.msra.mxu0 %v1797
      %1810 = vmatmul.bf16.gmra.mxu0 %v1800
      %v1811 = vpop.f32.mrf.mxu0
      %v1812 = vadd.f32 0.0, %v1811
      %v1813 = vpop.f32.mrf.mxu0
      %1814 = vdwg.mxu0
      %v1817 = vunpack.c.l.b16 %v798
      %v1818 = vunpack.c.l.b16 %v799
      %v1819 = vpack.c.b16 %v1818, %v1817
      %v1822 = vsel %vm815, %v1589, 0
      %1824 = vmatpush.bf16.msra.mxu0 0
      %1825 = vmatpush.bf16.msra.mxu0 0
      %1826 = vmatpush.bf16.msra.mxu0 0
      %1827 = vmatpush.bf16.msra.mxu0 0
      %1828 = vmatpush.bf16.msra.mxu0 0
      %1829 = vmatpush.bf16.msra.mxu0 0
      %1830 = vmatpush.bf16.msra.mxu0 0
      %1831 = vmatpush.bf16.msra.mxu0 %v1819
      %1832 = vmatmul.bf16.gmra.mxu0 %v1822
      %v1833 = vpop.f32.mrf.mxu0
      %v1834 = vadd.f32 0.0, %v1833
      %v1835 = vpop.f32.mrf.mxu0
      %1836 = vdwg.mxu0
      %v1839 = vunpack.c.l.b16 %v800
      %v1840 = vunpack.c.l.b16 %v801
      %v1841 = vpack.c.b16 %v1840, %v1839
      %v1844 = vsel %vm815, %v1590, 0
      %1846 = vmatpush.bf16.msra.mxu0 0
      %1847 = vmatpush.bf16.msra.mxu0 0
      %1848 = vmatpush.bf16.msra.mxu0 0
      %1849 = vmatpush.bf16.msra.mxu0 0
      %1850 = vmatpush.bf16.msra.mxu0 0
      %1851 = vmatpush.bf16.msra.mxu0 0
      %1852 = vmatpush.bf16.msra.mxu0 0
      %1853 = vmatpush.bf16.msra.mxu0 %v1841
      %1854 = vmatmul.bf16.gmra.mxu0 %v1844
      %v1855 = vpop.f32.mrf.mxu0
      %v1856 = vadd.f32 0.0, %v1855
      %v1857 = vpop.f32.mrf.mxu0
      %1858 = vdwg.mxu0
      %v1861 = vunpack.c.l.b16 %v802
      %v1862 = vunpack.c.l.b16 %v803
      %v1863 = vpack.c.b16 %v1862, %v1861
      %v1866 = vsel %vm815, %v1591, 0
      %1868 = vmatpush.bf16.msra.mxu0 0
      %1869 = vmatpush.bf16.msra.mxu0 0
      %1870 = vmatpush.bf16.msra.mxu0 0
      %1871 = vmatpush.bf16.msra.mxu0 0
      %1872 = vmatpush.bf16.msra.mxu0 0
      %1873 = vmatpush.bf16.msra.mxu0 0
      %1874 = vmatpush.bf16.msra.mxu0 0
      %1875 = vmatpush.bf16.msra.mxu0 %v1863
      %1876 = vmatmul.bf16.gmra.mxu0 %v1866
      %v1877 = vpop.f32.mrf.mxu0
      %v1878 = vadd.f32 0.0, %v1877
      %v1879 = vpop.f32.mrf.mxu0
      %1880 = vdwg.mxu0
      %v1883 = vunpack.c.l.b16 %v804
      %v1884 = vunpack.c.l.b16 %v805
      %v1885 = vpack.c.b16 %v1884, %v1883
      %v1888 = vsel %vm815, %v1592, 0
      %1890 = vmatpush.bf16.msra.mxu0 0
      %1891 = vmatpush.bf16.msra.mxu0 0
      %1892 = vmatpush.bf16.msra.mxu0 0
      %1893 = vmatpush.bf16.msra.mxu0 0
      %1894 = vmatpush.bf16.msra.mxu0 0
      %1895 = vmatpush.bf16.msra.mxu0 0
      %1896 = vmatpush.bf16.msra.mxu0 0
      %1897 = vmatpush.bf16.msra.mxu0 %v1885
      %1898 = vmatmul.bf16.gmra.mxu0 %v1888
      %v1899 = vpop.f32.mrf.mxu0
      %v1900 = vadd.f32 0.0, %v1899
      %v1901 = vpop.f32.mrf.mxu0
      %1902 = vdwg.mxu0
      %v1905 = vunpack.c.l.b16 %v806
      %v1906 = vunpack.c.l.b16 %v807
      %v1907 = vpack.c.b16 %v1906, %v1905
      %v1910 = vsel %vm815, %v1593, 0
      %1912 = vmatpush.bf16.msra.mxu0 0
      %1913 = vmatpush.bf16.msra.mxu0 0
      %1914 = vmatpush.bf16.msra.mxu0 0
      %1915 = vmatpush.bf16.msra.mxu0 0
      %1916 = vmatpush.bf16.msra.mxu0 0
      %1917 = vmatpush.bf16.msra.mxu0 0
      %1918 = vmatpush.bf16.msra.mxu0 0
      %1919 = vmatpush.bf16.msra.mxu0 %v1907
      %1920 = vmatmul.bf16.gmra.mxu0 %v1910
      %v1921 = vpop.f32.mrf.mxu0
      %v1922 = vadd.f32 0.0, %v1921
      %v1923 = vpop.f32.mrf.mxu0
      %1924 = vdwg.mxu0
      %v1927 = vunpack.c.l.b16 %v808
      %v1928 = vunpack.c.l.b16 %v809
      %v1929 = vpack.c.b16 %v1928, %v1927
      %v1932 = vsel %vm815, %v1594, 0
      %1934 = vmatpush.bf16.msra.mxu0 0
      %1935 = vmatpush.bf16.msra.mxu0 0
      %1936 = vmatpush.bf16.msra.mxu0 0
      %1937 = vmatpush.bf16.msra.mxu0 0
      %1938 = vmatpush.bf16.msra.mxu0 0
      %1939 = vmatpush.bf16.msra.mxu0 0
      %1940 = vmatpush.bf16.msra.mxu0 0
      %1941 = vmatpush.bf16.msra.mxu0 %v1929
      %1942 = vmatmul.bf16.gmra.mxu0 %v1932
      %v1943 = vpop.f32.mrf.mxu0
      %v1944 = vadd.f32 0.0, %v1943
      %v1945 = vpop.f32.mrf.mxu0
      %1946 = vdwg.mxu0
      %v1947 = vpack.c.bf16 %v1636, %v1614
      %v1948 = vpack.c.bf16 %v1680, %v1658
      %v1949 = vpack.c.bf16 %v1724, %v1702
      %v1950 = vpack.c.bf16 %v1768, %v1746
      %v1951 = vpack.c.bf16 %v1812, %v1790
      %v1952 = vpack.c.bf16 %v1856, %v1834
      %v1953 = vpack.c.bf16 %v1900, %v1878
      %v1954 = vpack.c.bf16 %v1944, %v1922
      %s1955 = scalar_lea.vmem %s2, 16
      %v1956 = vld [vmem:[%s1955] sm:$0xf]
      %v1957 = vld [vmem:[%s1955 + $0x4] sm:$0xf]
      %v1958 = vld [vmem:[%s1955 + $0x8] sm:$0xf]
      %v1959 = vld [vmem:[%s1955 + $0xc] sm:$0xf]
      %s1960 = scalar_lea.vmem %s3, 16
      %v1961 = vld [vmem:[%s1960] sm:$0xf]
      %v1962 = vld [vmem:[%s1960 + $0x4] sm:$0xf]
      %v1963 = vld [vmem:[%s1960 + $0x8] sm:$0xf]
      %v1964 = vld [vmem:[%s1960 + $0xc] sm:$0xf]
      %s1965 = scalar_lea.vmem %s4, 16
      %v1966 = vld [vmem:[%s1965] sm:$0xf]
      %v1967 = vld [vmem:[%s1965 + $0x4] sm:$0xf]
      %v1968 = vld [vmem:[%s1965 + $0x8] sm:$0xf]
      %v1969 = vld [vmem:[%s1965 + $0xc] sm:$0xf]
      %s1970 = scalar_lea.vmem %s5, 8
      %v1971 = vld [vmem:[%s1970] sm:$0xf]
      %v1972 = vld [vmem:[%s1970 + $0x4] sm:$0xf]
      %v1977 = vunpack.c.l.b16 %v1956
      %v1978 = vunpack.c.l.b16 %v1957
      %v1979 = vunpack.c.l.b16 %v1958
      %v1980 = vunpack.c.l.b16 %v1959
      %v1981 = vpack.c.b16 %v1978, %v1977
      %v1982 = vpack.c.b16 %v1980, %v1979
      %1985 = vmatpush.bf16.msra.mxu0 0
      %1986 = vmatpush.bf16.msra.mxu0 0
      %1987 = vmatpush.bf16.msra.mxu0 0
      %1988 = vmatpush.bf16.msra.mxu0 0
      %1989 = vmatpush.bf16.msra.mxu0 0
      %1990 = vmatpush.bf16.msra.mxu0 0
      %1991 = vmatpush.bf16.msra.mxu0 %v1982
      %1992 = vmatpush.bf16.msra.mxu0 %v1981
      %1993 = vmatmul.bf16.gmra.mxu0 %v408
      %v1994 = vpop.f32.mrf.mxu0
      %v1995 = vadd.f32 0.0, %v1994
      %v1996 = vpop.f32.mrf.mxu0
      %v1997 = vadd.f32 0.0, %v1996
      %1998 = vmatmul.bf16.gmra.mxu0 %v411
      %v1999 = vpop.f32.mrf.mxu0
      %v2000 = vadd.f32 0.0, %v1999
      %v2001 = vpop.f32.mrf.mxu0
      %v2002 = vadd.f32 0.0, %v2001
      %2003 = vmatmul.bf16.gmra.mxu0 %v414
      %v2004 = vpop.f32.mrf.mxu0
      %v2005 = vadd.f32 0.0, %v2004
      %v2006 = vpop.f32.mrf.mxu0
      %v2007 = vadd.f32 0.0, %v2006
      %2008 = vmatmul.bf16.gmra.mxu0 %v417
      %v2009 = vpop.f32.mrf.mxu0
      %v2010 = vadd.f32 0.0, %v2009
      %v2011 = vpop.f32.mrf.mxu0
      %v2012 = vadd.f32 0.0, %v2011
      %2013 = vmatmul.bf16.gmra.mxu0 %v420
      %v2014 = vpop.f32.mrf.mxu0
      %v2015 = vadd.f32 0.0, %v2014
      %v2016 = vpop.f32.mrf.mxu0
      %v2017 = vadd.f32 0.0, %v2016
      %2018 = vmatmul.bf16.gmra.mxu0 %v423
      %v2019 = vpop.f32.mrf.mxu0
      %v2020 = vadd.f32 0.0, %v2019
      %v2021 = vpop.f32.mrf.mxu0
      %v2022 = vadd.f32 0.0, %v2021
      %2023 = vmatmul.bf16.gmra.mxu0 %v426
      %v2024 = vpop.f32.mrf.mxu0
      %v2025 = vadd.f32 0.0, %v2024
      %v2026 = vpop.f32.mrf.mxu0
      %v2027 = vadd.f32 0.0, %v2026
      %2028 = vmatmul.bf16.gmra.mxu0 %v429
      %v2029 = vpop.f32.mrf.mxu0
      %v2030 = vadd.f32 0.0, %v2029
      %v2031 = vpop.f32.mrf.mxu0
      %v2032 = vadd.f32 0.0, %v2031
      %2033 = vdwg.mxu0
      %v2038 = vunpack.c.l.b16 %v1961
      %v2039 = vunpack.c.l.b16 %v1962
      %v2040 = vunpack.c.l.b16 %v1963
      %v2041 = vunpack.c.l.b16 %v1964
      %v2042 = vpack.c.b16 %v2039, %v2038
      %v2043 = vpack.c.b16 %v2041, %v2040
      %2046 = vmatpush.bf16.msra.mxu0 0
      %2047 = vmatpush.bf16.msra.mxu0 0
      %2048 = vmatpush.bf16.msra.mxu0 0
      %2049 = vmatpush.bf16.msra.mxu0 0
      %2050 = vmatpush.bf16.msra.mxu0 0
      %2051 = vmatpush.bf16.msra.mxu0 0
      %2052 = vmatpush.bf16.msra.mxu0 %v2043
      %2053 = vmatpush.bf16.msra.mxu0 %v2042
      %2054 = vmatmul.bf16.gmra.mxu0 %v493
      %v2055 = vpop.f32.mrf.mxu0
      %v2056 = vadd.f32 0.0, %v2055
      %v2057 = vpop.f32.mrf.mxu0
      %v2058 = vadd.f32 0.0, %v2057
      %2059 = vmatmul.bf16.gmra.mxu0 %v496
      %v2060 = vpop.f32.mrf.mxu0
      %v2061 = vadd.f32 0.0, %v2060
      %v2062 = vpop.f32.mrf.mxu0
      %v2063 = vadd.f32 0.0, %v2062
      %2064 = vmatmul.bf16.gmra.mxu0 %v499
      %v2065 = vpop.f32.mrf.mxu0
      %v2066 = vadd.f32 0.0, %v2065
      %v2067 = vpop.f32.mrf.mxu0
      %v2068 = vadd.f32 0.0, %v2067
      %2069 = vmatmul.bf16.gmra.mxu0 %v502
      %v2070 = vpop.f32.mrf.mxu0
      %v2071 = vadd.f32 0.0, %v2070
      %v2072 = vpop.f32.mrf.mxu0
      %v2073 = vadd.f32 0.0, %v2072
      %2074 = vmatmul.bf16.gmra.mxu0 %v505
      %v2075 = vpop.f32.mrf.mxu0
      %v2076 = vadd.f32 0.0, %v2075
      %v2077 = vpop.f32.mrf.mxu0
      %v2078 = vadd.f32 0.0, %v2077
      %2079 = vmatmul.bf16.gmra.mxu0 %v508
      %v2080 = vpop.f32.mrf.mxu0
      %v2081 = vadd.f32 0.0, %v2080
      %v2082 = vpop.f32.mrf.mxu0
      %v2083 = vadd.f32 0.0, %v2082
      %2084 = vmatmul.bf16.gmra.mxu0 %v511
      %v2085 = vpop.f32.mrf.mxu0
      %v2086 = vadd.f32 0.0, %v2085
      %v2087 = vpop.f32.mrf.mxu0
      %v2088 = vadd.f32 0.0, %v2087
      %2089 = vmatmul.bf16.gmra.mxu0 %v514
      %v2090 = vpop.f32.mrf.mxu0
      %v2091 = vadd.f32 0.0, %v2090
      %v2092 = vpop.f32.mrf.mxu0
      %v2093 = vadd.f32 0.0, %v2092
      %2094 = vmatmul.bf16.gmra.mxu0 %v517
      %v2095 = vpop.f32.mrf.mxu0
      %v2096 = vadd.f32 0.0, %v2095
      %v2097 = vpop.f32.mrf.mxu0
      %v2098 = vadd.f32 0.0, %v2097
      %2099 = vmatmul.bf16.gmra.mxu0 %v520
      %v2100 = vpop.f32.mrf.mxu0
      %v2101 = vadd.f32 0.0, %v2100
      %v2102 = vpop.f32.mrf.mxu0
      %v2103 = vadd.f32 0.0, %v2102
      %2104 = vmatmul.bf16.gmra.mxu0 %v523
      %v2105 = vpop.f32.mrf.mxu0
      %v2106 = vadd.f32 0.0, %v2105
      %v2107 = vpop.f32.mrf.mxu0
      %v2108 = vadd.f32 0.0, %v2107
      %2109 = vmatmul.bf16.gmra.mxu0 %v526
      %v2110 = vpop.f32.mrf.mxu0
      %v2111 = vadd.f32 0.0, %v2110
      %v2112 = vpop.f32.mrf.mxu0
      %v2113 = vadd.f32 0.0, %v2112
      %2114 = vmatmul.bf16.gmra.mxu0 %v529
      %v2115 = vpop.f32.mrf.mxu0
      %v2116 = vadd.f32 0.0, %v2115
      %v2117 = vpop.f32.mrf.mxu0
      %v2118 = vadd.f32 0.0, %v2117
      %2119 = vmatmul.bf16.gmra.mxu0 %v532
      %v2120 = vpop.f32.mrf.mxu0
      %v2121 = vadd.f32 0.0, %v2120
      %v2122 = vpop.f32.mrf.mxu0
      %v2123 = vadd.f32 0.0, %v2122
      %2124 = vmatmul.bf16.gmra.mxu0 %v535
      %v2125 = vpop.f32.mrf.mxu0
      %v2126 = vadd.f32 0.0, %v2125
      %v2127 = vpop.f32.mrf.mxu0
      %v2128 = vadd.f32 0.0, %v2127
      %2129 = vmatmul.bf16.gmra.mxu0 %v538
      %v2130 = vpop.f32.mrf.mxu0
      %v2131 = vadd.f32 0.0, %v2130
      %v2132 = vpop.f32.mrf.mxu0
      %v2133 = vadd.f32 0.0, %v2132
      %2134 = vdwg.mxu0
      %v2139 = vunpack.c.l.b16 %v1966
      %v2140 = vunpack.c.l.b16 %v1967
      %v2141 = vunpack.c.l.b16 %v1968
      %v2142 = vunpack.c.l.b16 %v1969
      %v2143 = vpack.c.b16 %v2140, %v2139
      %v2144 = vpack.c.b16 %v2142, %v2141
      %2147 = vmatpush.bf16.msra.mxu0 0
      %2148 = vmatpush.bf16.msra.mxu0 0
      %2149 = vmatpush.bf16.msra.mxu0 0
      %2150 = vmatpush.bf16.msra.mxu0 0
      %2151 = vmatpush.bf16.msra.mxu0 0
      %2152 = vmatpush.bf16.msra.mxu0 0
      %2153 = vmatpush.bf16.msra.mxu0 %v2144
      %2154 = vmatpush.bf16.msra.mxu0 %v2143
      %2155 = vmatmul.bf16.gmra.mxu0 %v493
      %v2156 = vpop.f32.mrf.mxu0
      %v2157 = vadd.f32 0.0, %v2156
      %v2158 = vpop.f32.mrf.mxu0
      %v2159 = vadd.f32 0.0, %v2158
      %2160 = vmatmul.bf16.gmra.mxu0 %v496
      %v2161 = vpop.f32.mrf.mxu0
      %v2162 = vadd.f32 0.0, %v2161
      %v2163 = vpop.f32.mrf.mxu0
      %v2164 = vadd.f32 0.0, %v2163
      %2165 = vmatmul.bf16.gmra.mxu0 %v499
      %v2166 = vpop.f32.mrf.mxu0
      %v2167 = vadd.f32 0.0, %v2166
      %v2168 = vpop.f32.mrf.mxu0
      %v2169 = vadd.f32 0.0, %v2168
      %2170 = vmatmul.bf16.gmra.mxu0 %v502
      %v2171 = vpop.f32.mrf.mxu0
      %v2172 = vadd.f32 0.0, %v2171
      %v2173 = vpop.f32.mrf.mxu0
      %v2174 = vadd.f32 0.0, %v2173
      %2175 = vmatmul.bf16.gmra.mxu0 %v505
      %v2176 = vpop.f32.mrf.mxu0
      %v2177 = vadd.f32 0.0, %v2176
      %v2178 = vpop.f32.mrf.mxu0
      %v2179 = vadd.f32 0.0, %v2178
      %2180 = vmatmul.bf16.gmra.mxu0 %v508
      %v2181 = vpop.f32.mrf.mxu0
      %v2182 = vadd.f32 0.0, %v2181
      %v2183 = vpop.f32.mrf.mxu0
      %v2184 = vadd.f32 0.0, %v2183
      %2185 = vmatmul.bf16.gmra.mxu0 %v511
      %v2186 = vpop.f32.mrf.mxu0
      %v2187 = vadd.f32 0.0, %v2186
      %v2188 = vpop.f32.mrf.mxu0
      %v2189 = vadd.f32 0.0, %v2188
      %2190 = vmatmul.bf16.gmra.mxu0 %v514
      %v2191 = vpop.f32.mrf.mxu0
      %v2192 = vadd.f32 0.0, %v2191
      %v2193 = vpop.f32.mrf.mxu0
      %v2194 = vadd.f32 0.0, %v2193
      %2195 = vmatmul.bf16.gmra.mxu0 %v517
      %v2196 = vpop.f32.mrf.mxu0
      %v2197 = vadd.f32 0.0, %v2196
      %v2198 = vpop.f32.mrf.mxu0
      %v2199 = vadd.f32 0.0, %v2198
      %2200 = vmatmul.bf16.gmra.mxu0 %v520
      %v2201 = vpop.f32.mrf.mxu0
      %v2202 = vadd.f32 0.0, %v2201
      %v2203 = vpop.f32.mrf.mxu0
      %v2204 = vadd.f32 0.0, %v2203
      %2205 = vmatmul.bf16.gmra.mxu0 %v523
      %v2206 = vpop.f32.mrf.mxu0
      %v2207 = vadd.f32 0.0, %v2206
      %v2208 = vpop.f32.mrf.mxu0
      %v2209 = vadd.f32 0.0, %v2208
      %2210 = vmatmul.bf16.gmra.mxu0 %v526
      %v2211 = vpop.f32.mrf.mxu0
      %v2212 = vadd.f32 0.0, %v2211
      %v2213 = vpop.f32.mrf.mxu0
      %v2214 = vadd.f32 0.0, %v2213
      %2215 = vmatmul.bf16.gmra.mxu0 %v529
      %v2216 = vpop.f32.mrf.mxu0
      %v2217 = vadd.f32 0.0, %v2216
      %v2218 = vpop.f32.mrf.mxu0
      %v2219 = vadd.f32 0.0, %v2218
      %2220 = vmatmul.bf16.gmra.mxu0 %v532
      %v2221 = vpop.f32.mrf.mxu0
      %v2222 = vadd.f32 0.0, %v2221
      %v2223 = vpop.f32.mrf.mxu0
      %v2224 = vadd.f32 0.0, %v2223
      %2225 = vmatmul.bf16.gmra.mxu0 %v535
      %v2226 = vpop.f32.mrf.mxu0
      %v2227 = vadd.f32 0.0, %v2226
      %v2228 = vpop.f32.mrf.mxu0
      %v2229 = vadd.f32 0.0, %v2228
      %2230 = vmatmul.bf16.gmra.mxu0 %v538
      %v2231 = vpop.f32.mrf.mxu0
      %v2232 = vadd.f32 0.0, %v2231
      %v2233 = vpop.f32.mrf.mxu0
      %v2234 = vadd.f32 0.0, %v2233
      %2235 = vdwg.mxu0
      %v2236 = vpack.c.bf16 %v1995, %v1995
      %v2237 = vpack.c.bf16 %v1997, %v1997
      %v2238 = vpack.c.bf16 %v2000, %v2000
      %v2239 = vpack.c.bf16 %v2002, %v2002
      %v2240 = vpack.c.bf16 %v2005, %v2005
      %v2241 = vpack.c.bf16 %v2007, %v2007
      %v2242 = vpack.c.bf16 %v2010, %v2010
      %v2243 = vpack.c.bf16 %v2012, %v2012
      %v2244 = vpack.c.bf16 %v2015, %v2015
      %v2245 = vpack.c.bf16 %v2017, %v2017
      %v2246 = vpack.c.bf16 %v2020, %v2020
      %v2247 = vpack.c.bf16 %v2022, %v2022
      %v2248 = vpack.c.bf16 %v2025, %v2025
      %v2249 = vpack.c.bf16 %v2027, %v2027
      %v2250 = vpack.c.bf16 %v2030, %v2030
      %v2251 = vpack.c.bf16 %v2032, %v2032
      %v2252 = vpack.c.bf16 %v2056, %v2056
      %v2253 = vpack.c.bf16 %v2058, %v2058
      %v2254 = vpack.c.bf16 %v2061, %v2061
      %v2255 = vpack.c.bf16 %v2063, %v2063
      %v2256 = vpack.c.bf16 %v2066, %v2066
      %v2257 = vpack.c.bf16 %v2068, %v2068
      %v2258 = vpack.c.bf16 %v2071, %v2071
      %v2259 = vpack.c.bf16 %v2073, %v2073
      %v2260 = vpack.c.bf16 %v2076, %v2076
      %v2261 = vpack.c.bf16 %v2078, %v2078
      %v2262 = vpack.c.bf16 %v2081, %v2081
      %v2263 = vpack.c.bf16 %v2083, %v2083
      %v2264 = vpack.c.bf16 %v2086, %v2086
      %v2265 = vpack.c.bf16 %v2088, %v2088
      %v2266 = vpack.c.bf16 %v2091, %v2091
      %v2267 = vpack.c.bf16 %v2093, %v2093
      %v2268 = vpack.c.bf16 %v2096, %v2096
      %v2269 = vpack.c.bf16 %v2098, %v2098
      %v2270 = vpack.c.bf16 %v2101, %v2101
      %v2271 = vpack.c.bf16 %v2103, %v2103
      %v2272 = vpack.c.bf16 %v2106, %v2106
      %v2273 = vpack.c.bf16 %v2108, %v2108
      %v2274 = vpack.c.bf16 %v2111, %v2111
      %v2275 = vpack.c.bf16 %v2113, %v2113
      %v2276 = vpack.c.bf16 %v2116, %v2116
      %v2277 = vpack.c.bf16 %v2118, %v2118
      %v2278 = vpack.c.bf16 %v2121, %v2121
      %v2279 = vpack.c.bf16 %v2123, %v2123
      %v2280 = vpack.c.bf16 %v2126, %v2126
      %v2281 = vpack.c.bf16 %v2128, %v2128
      %v2282 = vpack.c.bf16 %v2131, %v2131
      %v2283 = vpack.c.bf16 %v2133, %v2133
      %v2284 = vpack.c.bf16 %v2157, %v2157
      %v2285 = vpack.c.bf16 %v2159, %v2159
      %v2286 = vpack.c.bf16 %v2162, %v2162
      %v2287 = vpack.c.bf16 %v2164, %v2164
      %v2288 = vpack.c.bf16 %v2167, %v2167
      %v2289 = vpack.c.bf16 %v2169, %v2169
      %v2290 = vpack.c.bf16 %v2172, %v2172
      %v2291 = vpack.c.bf16 %v2174, %v2174
      %v2292 = vpack.c.bf16 %v2177, %v2177
      %v2293 = vpack.c.bf16 %v2179, %v2179
      %v2294 = vpack.c.bf16 %v2182, %v2182
      %v2295 = vpack.c.bf16 %v2184, %v2184
      %v2296 = vpack.c.bf16 %v2187, %v2187
      %v2297 = vpack.c.bf16 %v2189, %v2189
      %v2298 = vpack.c.bf16 %v2192, %v2192
      %v2299 = vpack.c.bf16 %v2194, %v2194
      %v2300 = vpack.c.bf16 %v2197, %v2197
      %v2301 = vpack.c.bf16 %v2199, %v2199
      %v2302 = vpack.c.bf16 %v2202, %v2202
      %v2303 = vpack.c.bf16 %v2204, %v2204
      %v2304 = vpack.c.bf16 %v2207, %v2207
      %v2305 = vpack.c.bf16 %v2209, %v2209
      %v2306 = vpack.c.bf16 %v2212, %v2212
      %v2307 = vpack.c.bf16 %v2214, %v2214
      %v2308 = vpack.c.bf16 %v2217, %v2217
      %v2309 = vpack.c.bf16 %v2219, %v2219
      %v2310 = vpack.c.bf16 %v2222, %v2222
      %v2311 = vpack.c.bf16 %v2224, %v2224
      %v2312 = vpack.c.bf16 %v2227, %v2227
      %v2313 = vpack.c.bf16 %v2229, %v2229
      %v2314 = vpack.c.bf16 %v2232, %v2232
      %v2315 = vpack.c.bf16 %v2234, %v2234
      %v2318 = vunpack.c.l.b16 %v2252
      %v2319 = vunpack.c.l.b16 %v2253
      %v2320 = vpack.c.b16 %v2319, %v2318
      %v2322 = vsel %vm815, %v2236, 0
      %v2325 = vsel %vm815, %v2320, 0
      %2327 = vmatpush.bf16.xpose.msra.mxu0 0
      %2328 = vmatpush.bf16.xpose.msra.mxu0 0
      %2329 = vmatpush.bf16.xpose.msra.mxu0 0
      %2330 = vmatpush.bf16.xpose.msra.mxu0 0
      %2331 = vmatpush.bf16.xpose.msra.mxu0 0
      %2332 = vmatpush.bf16.xpose.msra.mxu0 0
      %2333 = vmatpush.bf16.xpose.msra.mxu0 0
      %2334 = vmatpush.bf16.xpose.msra.mxu0 %v2325
      %2335 = vmatmul.bf16.gmra.mxu0 %v2322
      %v2336 = vpop.f32.mrf.mxu0
      %v2337 = vadd.f32 0.0, %v2336
      %v2338 = vpop.f32.mrf.mxu0
      %2339 = vdwg.mxu0
      %v2342 = vunpack.c.l.b16 %v2254
      %v2343 = vunpack.c.l.b16 %v2255
      %v2344 = vpack.c.b16 %v2343, %v2342
      %v2346 = vsel %vm815, %v2237, 0
      %v2349 = vsel %vm815, %v2344, 0
      %2351 = vmatpush.bf16.xpose.msra.mxu0 0
      %2352 = vmatpush.bf16.xpose.msra.mxu0 0
      %2353 = vmatpush.bf16.xpose.msra.mxu0 0
      %2354 = vmatpush.bf16.xpose.msra.mxu0 0
      %2355 = vmatpush.bf16.xpose.msra.mxu0 0
      %2356 = vmatpush.bf16.xpose.msra.mxu0 0
      %2357 = vmatpush.bf16.xpose.msra.mxu0 0
      %2358 = vmatpush.bf16.xpose.msra.mxu0 %v2349
      %2359 = vmatmul.bf16.gmra.mxu0 %v2346
      %v2360 = vpop.f32.mrf.mxu0
      %v2361 = vadd.f32 0.0, %v2360
      %v2362 = vpop.f32.mrf.mxu0
      %2363 = vdwg.mxu0
      %v2366 = vunpack.c.l.b16 %v2256
      %v2367 = vunpack.c.l.b16 %v2257
      %v2368 = vpack.c.b16 %v2367, %v2366
      %v2370 = vsel %vm815, %v2238, 0
      %v2373 = vsel %vm815, %v2368, 0
      %2375 = vmatpush.bf16.xpose.msra.mxu0 0
      %2376 = vmatpush.bf16.xpose.msra.mxu0 0
      %2377 = vmatpush.bf16.xpose.msra.mxu0 0
      %2378 = vmatpush.bf16.xpose.msra.mxu0 0
      %2379 = vmatpush.bf16.xpose.msra.mxu0 0
      %2380 = vmatpush.bf16.xpose.msra.mxu0 0
      %2381 = vmatpush.bf16.xpose.msra.mxu0 0
      %2382 = vmatpush.bf16.xpose.msra.mxu0 %v2373
      %2383 = vmatmul.bf16.gmra.mxu0 %v2370
      %v2384 = vpop.f32.mrf.mxu0
      %v2385 = vadd.f32 0.0, %v2384
      %v2386 = vpop.f32.mrf.mxu0
      %2387 = vdwg.mxu0
      %v2390 = vunpack.c.l.b16 %v2258
      %v2391 = vunpack.c.l.b16 %v2259
      %v2392 = vpack.c.b16 %v2391, %v2390
      %v2394 = vsel %vm815, %v2239, 0
      %v2397 = vsel %vm815, %v2392, 0
      %2399 = vmatpush.bf16.xpose.msra.mxu0 0
      %2400 = vmatpush.bf16.xpose.msra.mxu0 0
      %2401 = vmatpush.bf16.xpose.msra.mxu0 0
      %2402 = vmatpush.bf16.xpose.msra.mxu0 0
      %2403 = vmatpush.bf16.xpose.msra.mxu0 0
      %2404 = vmatpush.bf16.xpose.msra.mxu0 0
      %2405 = vmatpush.bf16.xpose.msra.mxu0 0
      %2406 = vmatpush.bf16.xpose.msra.mxu0 %v2397
      %2407 = vmatmul.bf16.gmra.mxu0 %v2394
      %v2408 = vpop.f32.mrf.mxu0
      %v2409 = vadd.f32 0.0, %v2408
      %v2410 = vpop.f32.mrf.mxu0
      %2411 = vdwg.mxu0
      %v2414 = vunpack.c.l.b16 %v2260
      %v2415 = vunpack.c.l.b16 %v2261
      %v2416 = vpack.c.b16 %v2415, %v2414
      %v2418 = vsel %vm815, %v2240, 0
      %v2421 = vsel %vm815, %v2416, 0
      %2423 = vmatpush.bf16.xpose.msra.mxu0 0
      %2424 = vmatpush.bf16.xpose.msra.mxu0 0
      %2425 = vmatpush.bf16.xpose.msra.mxu0 0
      %2426 = vmatpush.bf16.xpose.msra.mxu0 0
      %2427 = vmatpush.bf16.xpose.msra.mxu0 0
      %2428 = vmatpush.bf16.xpose.msra.mxu0 0
      %2429 = vmatpush.bf16.xpose.msra.mxu0 0
      %2430 = vmatpush.bf16.xpose.msra.mxu0 %v2421
      %2431 = vmatmul.bf16.gmra.mxu0 %v2418
      %v2432 = vpop.f32.mrf.mxu0
      %v2433 = vadd.f32 0.0, %v2432
      %v2434 = vpop.f32.mrf.mxu0
      %2435 = vdwg.mxu0
      %v2438 = vunpack.c.l.b16 %v2262
      %v2439 = vunpack.c.l.b16 %v2263
      %v2440 = vpack.c.b16 %v2439, %v2438
      %v2442 = vsel %vm815, %v2241, 0
      %v2445 = vsel %vm815, %v2440, 0
      %2447 = vmatpush.bf16.xpose.msra.mxu0 0
      %2448 = vmatpush.bf16.xpose.msra.mxu0 0
      %2449 = vmatpush.bf16.xpose.msra.mxu0 0
      %2450 = vmatpush.bf16.xpose.msra.mxu0 0
      %2451 = vmatpush.bf16.xpose.msra.mxu0 0
      %2452 = vmatpush.bf16.xpose.msra.mxu0 0
      %2453 = vmatpush.bf16.xpose.msra.mxu0 0
      %2454 = vmatpush.bf16.xpose.msra.mxu0 %v2445
      %2455 = vmatmul.bf16.gmra.mxu0 %v2442
      %v2456 = vpop.f32.mrf.mxu0
      %v2457 = vadd.f32 0.0, %v2456
      %v2458 = vpop.f32.mrf.mxu0
      %2459 = vdwg.mxu0
      %v2462 = vunpack.c.l.b16 %v2264
      %v2463 = vunpack.c.l.b16 %v2265
      %v2464 = vpack.c.b16 %v2463, %v2462
      %v2466 = vsel %vm815, %v2242, 0
      %v2469 = vsel %vm815, %v2464, 0
      %2471 = vmatpush.bf16.xpose.msra.mxu0 0
      %2472 = vmatpush.bf16.xpose.msra.mxu0 0
      %2473 = vmatpush.bf16.xpose.msra.mxu0 0
      %2474 = vmatpush.bf16.xpose.msra.mxu0 0
      %2475 = vmatpush.bf16.xpose.msra.mxu0 0
      %2476 = vmatpush.bf16.xpose.msra.mxu0 0
      %2477 = vmatpush.bf16.xpose.msra.mxu0 0
      %2478 = vmatpush.bf16.xpose.msra.mxu0 %v2469
      %2479 = vmatmul.bf16.gmra.mxu0 %v2466
      %v2480 = vpop.f32.mrf.mxu0
      %v2481 = vadd.f32 0.0, %v2480
      %v2482 = vpop.f32.mrf.mxu0
      %2483 = vdwg.mxu0
      %v2486 = vunpack.c.l.b16 %v2266
      %v2487 = vunpack.c.l.b16 %v2267
      %v2488 = vpack.c.b16 %v2487, %v2486
      %v2490 = vsel %vm815, %v2243, 0
      %v2493 = vsel %vm815, %v2488, 0
      %2495 = vmatpush.bf16.xpose.msra.mxu0 0
      %2496 = vmatpush.bf16.xpose.msra.mxu0 0
      %2497 = vmatpush.bf16.xpose.msra.mxu0 0
      %2498 = vmatpush.bf16.xpose.msra.mxu0 0
      %2499 = vmatpush.bf16.xpose.msra.mxu0 0
      %2500 = vmatpush.bf16.xpose.msra.mxu0 0
      %2501 = vmatpush.bf16.xpose.msra.mxu0 0
      %2502 = vmatpush.bf16.xpose.msra.mxu0 %v2493
      %2503 = vmatmul.bf16.gmra.mxu0 %v2490
      %v2504 = vpop.f32.mrf.mxu0
      %v2505 = vadd.f32 0.0, %v2504
      %v2506 = vpop.f32.mrf.mxu0
      %2507 = vdwg.mxu0
      %v2510 = vunpack.c.l.b16 %v2268
      %v2511 = vunpack.c.l.b16 %v2269
      %v2512 = vpack.c.b16 %v2511, %v2510
      %v2514 = vsel %vm815, %v2244, 0
      %v2517 = vsel %vm815, %v2512, 0
      %2519 = vmatpush.bf16.xpose.msra.mxu0 0
      %2520 = vmatpush.bf16.xpose.msra.mxu0 0
      %2521 = vmatpush.bf16.xpose.msra.mxu0 0
      %2522 = vmatpush.bf16.xpose.msra.mxu0 0
      %2523 = vmatpush.bf16.xpose.msra.mxu0 0
      %2524 = vmatpush.bf16.xpose.msra.mxu0 0
      %2525 = vmatpush.bf16.xpose.msra.mxu0 0
      %2526 = vmatpush.bf16.xpose.msra.mxu0 %v2517
      %2527 = vmatmul.bf16.gmra.mxu0 %v2514
      %v2528 = vpop.f32.mrf.mxu0
      %v2529 = vadd.f32 0.0, %v2528
      %v2530 = vpop.f32.mrf.mxu0
      %2531 = vdwg.mxu0
      %v2534 = vunpack.c.l.b16 %v2270
      %v2535 = vunpack.c.l.b16 %v2271
      %v2536 = vpack.c.b16 %v2535, %v2534
      %v2538 = vsel %vm815, %v2245, 0
      %v2541 = vsel %vm815, %v2536, 0
      %2543 = vmatpush.bf16.xpose.msra.mxu0 0
      %2544 = vmatpush.bf16.xpose.msra.mxu0 0
      %2545 = vmatpush.bf16.xpose.msra.mxu0 0
      %2546 = vmatpush.bf16.xpose.msra.mxu0 0
      %2547 = vmatpush.bf16.xpose.msra.mxu0 0
      %2548 = vmatpush.bf16.xpose.msra.mxu0 0
      %2549 = vmatpush.bf16.xpose.msra.mxu0 0
      %2550 = vmatpush.bf16.xpose.msra.mxu0 %v2541
      %2551 = vmatmul.bf16.gmra.mxu0 %v2538
      %v2552 = vpop.f32.mrf.mxu0
      %v2553 = vadd.f32 0.0, %v2552
      %v2554 = vpop.f32.mrf.mxu0
      %2555 = vdwg.mxu0
      %v2558 = vunpack.c.l.b16 %v2272
      %v2559 = vunpack.c.l.b16 %v2273
      %v2560 = vpack.c.b16 %v2559, %v2558
      %v2562 = vsel %vm815, %v2246, 0
      %v2565 = vsel %vm815, %v2560, 0
      %2567 = vmatpush.bf16.xpose.msra.mxu0 0
      %2568 = vmatpush.bf16.xpose.msra.mxu0 0
      %2569 = vmatpush.bf16.xpose.msra.mxu0 0
      %2570 = vmatpush.bf16.xpose.msra.mxu0 0
      %2571 = vmatpush.bf16.xpose.msra.mxu0 0
      %2572 = vmatpush.bf16.xpose.msra.mxu0 0
      %2573 = vmatpush.bf16.xpose.msra.mxu0 0
      %2574 = vmatpush.bf16.xpose.msra.mxu0 %v2565
      %2575 = vmatmul.bf16.gmra.mxu0 %v2562
      %v2576 = vpop.f32.mrf.mxu0
      %v2577 = vadd.f32 0.0, %v2576
      %v2578 = vpop.f32.mrf.mxu0
      %2579 = vdwg.mxu0
      %v2582 = vunpack.c.l.b16 %v2274
      %v2583 = vunpack.c.l.b16 %v2275
      %v2584 = vpack.c.b16 %v2583, %v2582
      %v2586 = vsel %vm815, %v2247, 0
      %v2589 = vsel %vm815, %v2584, 0
      %2591 = vmatpush.bf16.xpose.msra.mxu0 0
      %2592 = vmatpush.bf16.xpose.msra.mxu0 0
      %2593 = vmatpush.bf16.xpose.msra.mxu0 0
      %2594 = vmatpush.bf16.xpose.msra.mxu0 0
      %2595 = vmatpush.bf16.xpose.msra.mxu0 0
      %2596 = vmatpush.bf16.xpose.msra.mxu0 0
      %2597 = vmatpush.bf16.xpose.msra.mxu0 0
      %2598 = vmatpush.bf16.xpose.msra.mxu0 %v2589
      %2599 = vmatmul.bf16.gmra.mxu0 %v2586
      %v2600 = vpop.f32.mrf.mxu0
      %v2601 = vadd.f32 0.0, %v2600
      %v2602 = vpop.f32.mrf.mxu0
      %2603 = vdwg.mxu0
      %v2606 = vunpack.c.l.b16 %v2276
      %v2607 = vunpack.c.l.b16 %v2277
      %v2608 = vpack.c.b16 %v2607, %v2606
      %v2610 = vsel %vm815, %v2248, 0
      %v2613 = vsel %vm815, %v2608, 0
      %2615 = vmatpush.bf16.xpose.msra.mxu0 0
      %2616 = vmatpush.bf16.xpose.msra.mxu0 0
      %2617 = vmatpush.bf16.xpose.msra.mxu0 0
      %2618 = vmatpush.bf16.xpose.msra.mxu0 0
      %2619 = vmatpush.bf16.xpose.msra.mxu0 0
      %2620 = vmatpush.bf16.xpose.msra.mxu0 0
      %2621 = vmatpush.bf16.xpose.msra.mxu0 0
      %2622 = vmatpush.bf16.xpose.msra.mxu0 %v2613
      %2623 = vmatmul.bf16.gmra.mxu0 %v2610
      %v2624 = vpop.f32.mrf.mxu0
      %v2625 = vadd.f32 0.0, %v2624
      %v2626 = vpop.f32.mrf.mxu0
      %2627 = vdwg.mxu0
      %v2630 = vunpack.c.l.b16 %v2278
      %v2631 = vunpack.c.l.b16 %v2279
      %v2632 = vpack.c.b16 %v2631, %v2630
      %v2634 = vsel %vm815, %v2249, 0
      %v2637 = vsel %vm815, %v2632, 0
      %2639 = vmatpush.bf16.xpose.msra.mxu0 0
      %2640 = vmatpush.bf16.xpose.msra.mxu0 0
      %2641 = vmatpush.bf16.xpose.msra.mxu0 0
      %2642 = vmatpush.bf16.xpose.msra.mxu0 0
      %2643 = vmatpush.bf16.xpose.msra.mxu0 0
      %2644 = vmatpush.bf16.xpose.msra.mxu0 0
      %2645 = vmatpush.bf16.xpose.msra.mxu0 0
      %2646 = vmatpush.bf16.xpose.msra.mxu0 %v2637
      %2647 = vmatmul.bf16.gmra.mxu0 %v2634
      %v2648 = vpop.f32.mrf.mxu0
      %v2649 = vadd.f32 0.0, %v2648
      %v2650 = vpop.f32.mrf.mxu0
      %2651 = vdwg.mxu0
      %v2654 = vunpack.c.l.b16 %v2280
      %v2655 = vunpack.c.l.b16 %v2281
      %v2656 = vpack.c.b16 %v2655, %v2654
      %v2658 = vsel %vm815, %v2250, 0
      %v2661 = vsel %vm815, %v2656, 0
      %2663 = vmatpush.bf16.xpose.msra.mxu0 0
      %2664 = vmatpush.bf16.xpose.msra.mxu0 0
      %2665 = vmatpush.bf16.xpose.msra.mxu0 0
      %2666 = vmatpush.bf16.xpose.msra.mxu0 0
      %2667 = vmatpush.bf16.xpose.msra.mxu0 0
      %2668 = vmatpush.bf16.xpose.msra.mxu0 0
      %2669 = vmatpush.bf16.xpose.msra.mxu0 0
      %2670 = vmatpush.bf16.xpose.msra.mxu0 %v2661
      %2671 = vmatmul.bf16.gmra.mxu0 %v2658
      %v2672 = vpop.f32.mrf.mxu0
      %v2673 = vadd.f32 0.0, %v2672
      %v2674 = vpop.f32.mrf.mxu0
      %2675 = vdwg.mxu0
      %v2678 = vunpack.c.l.b16 %v2282
      %v2679 = vunpack.c.l.b16 %v2283
      %v2680 = vpack.c.b16 %v2679, %v2678
      %v2682 = vsel %vm815, %v2251, 0
      %v2685 = vsel %vm815, %v2680, 0
      %2687 = vmatpush.bf16.xpose.msra.mxu0 0
      %2688 = vmatpush.bf16.xpose.msra.mxu0 0
      %2689 = vmatpush.bf16.xpose.msra.mxu0 0
      %2690 = vmatpush.bf16.xpose.msra.mxu0 0
      %2691 = vmatpush.bf16.xpose.msra.mxu0 0
      %2692 = vmatpush.bf16.xpose.msra.mxu0 0
      %2693 = vmatpush.bf16.xpose.msra.mxu0 0
      %2694 = vmatpush.bf16.xpose.msra.mxu0 %v2685
      %2695 = vmatmul.bf16.gmra.mxu0 %v2682
      %v2696 = vpop.f32.mrf.mxu0
      %v2697 = vadd.f32 0.0, %v2696
      %v2698 = vpop.f32.mrf.mxu0
      %2699 = vdwg.mxu0
      %v2700 = vsel %vm815, %v2337, -inf
      %2701 = vmax.xlane.f32.xlu0 %v2700
      %v2702 = vpop.xlane.xlu0 %2701
      %v2703 = vsel %vm815, %v2361, -inf
      %2704 = vmax.xlane.f32.xlu0 %v2703
      %v2705 = vpop.xlane.xlu0 %2704
      %v2706 = vsel %vm815, %v2385, -inf
      %2707 = vmax.xlane.f32.xlu0 %v2706
      %v2708 = vpop.xlane.xlu0 %2707
      %v2709 = vsel %vm815, %v2409, -inf
      %2710 = vmax.xlane.f32.xlu0 %v2709
      %v2711 = vpop.xlane.xlu0 %2710
      %v2712 = vsel %vm815, %v2433, -inf
      %2713 = vmax.xlane.f32.xlu0 %v2712
      %v2714 = vpop.xlane.xlu0 %2713
      %v2715 = vsel %vm815, %v2457, -inf
      %2716 = vmax.xlane.f32.xlu0 %v2715
      %v2717 = vpop.xlane.xlu0 %2716
      %v2718 = vsel %vm815, %v2481, -inf
      %2719 = vmax.xlane.f32.xlu0 %v2718
      %v2720 = vpop.xlane.xlu0 %2719
      %v2721 = vsel %vm815, %v2505, -inf
      %2722 = vmax.xlane.f32.xlu0 %v2721
      %v2723 = vpop.xlane.xlu0 %2722
      %v2724 = vsel %vm815, %v2529, -inf
      %2725 = vmax.xlane.f32.xlu0 %v2724
      %v2726 = vpop.xlane.xlu0 %2725
      %v2727 = vsel %vm815, %v2553, -inf
      %2728 = vmax.xlane.f32.xlu0 %v2727
      %v2729 = vpop.xlane.xlu0 %2728
      %v2730 = vsel %vm815, %v2577, -inf
      %2731 = vmax.xlane.f32.xlu0 %v2730
      %v2732 = vpop.xlane.xlu0 %2731
      %v2733 = vsel %vm815, %v2601, -inf
      %2734 = vmax.xlane.f32.xlu0 %v2733
      %v2735 = vpop.xlane.xlu0 %2734
      %v2736 = vsel %vm815, %v2625, -inf
      %2737 = vmax.xlane.f32.xlu0 %v2736
      %v2738 = vpop.xlane.xlu0 %2737
      %v2739 = vsel %vm815, %v2649, -inf
      %2740 = vmax.xlane.f32.xlu0 %v2739
      %v2741 = vpop.xlane.xlu0 %2740
      %v2742 = vsel %vm815, %v2673, -inf
      %2743 = vmax.xlane.f32.xlu0 %v2742
      %v2744 = vpop.xlane.xlu0 %2743
      %v2745 = vsel %vm815, %v2697, -inf
      %2746 = vmax.xlane.f32.xlu0 %v2745
      %v2747 = vpop.xlane.xlu0 %2746
      %v2748 = vsub.f32 %v2337, %v2702
      %v2749 = vsub.f32 %v2361, %v2705
      %v2750 = vsub.f32 %v2385, %v2708
      %v2751 = vsub.f32 %v2409, %v2711
      %v2752 = vsub.f32 %v2433, %v2714
      %v2753 = vsub.f32 %v2457, %v2717
      %v2754 = vsub.f32 %v2481, %v2720
      %v2755 = vsub.f32 %v2505, %v2723
      %v2756 = vsub.f32 %v2529, %v2726
      %v2757 = vsub.f32 %v2553, %v2729
      %v2758 = vsub.f32 %v2577, %v2732
      %v2759 = vsub.f32 %v2601, %v2735
      %v2760 = vsub.f32 %v2625, %v2738
      %v2761 = vsub.f32 %v2649, %v2741
      %v2762 = vsub.f32 %v2673, %v2744
      %v2763 = vsub.f32 %v2697, %v2747
      %v2764 = vmul.f32 %v2748, 1.442695
      %v2765 = vpow.pop %v2764
      %v2766 = vmul.f32 %v2749, 1.442695
      %v2767 = vpow.pop %v2766
      %v2768 = vmul.f32 %v2750, 1.442695
      %v2769 = vpow.pop %v2768
      %v2770 = vmul.f32 %v2751, 1.442695
      %v2771 = vpow.pop %v2770
      %v2772 = vmul.f32 %v2752, 1.442695
      %v2773 = vpow.pop %v2772
      %v2774 = vmul.f32 %v2753, 1.442695
      %v2775 = vpow.pop %v2774
      %v2776 = vmul.f32 %v2754, 1.442695
      %v2777 = vpow.pop %v2776
      %v2778 = vmul.f32 %v2755, 1.442695
      %v2779 = vpow.pop %v2778
      %v2780 = vmul.f32 %v2756, 1.442695
      %v2781 = vpow.pop %v2780
      %v2782 = vmul.f32 %v2757, 1.442695
      %v2783 = vpow.pop %v2782
      %v2784 = vmul.f32 %v2758, 1.442695
      %v2785 = vpow.pop %v2784
      %v2786 = vmul.f32 %v2759, 1.442695
      %v2787 = vpow.pop %v2786
      %v2788 = vmul.f32 %v2760, 1.442695
      %v2789 = vpow.pop %v2788
      %v2790 = vmul.f32 %v2761, 1.442695
      %v2791 = vpow.pop %v2790
      %v2792 = vmul.f32 %v2762, 1.442695
      %v2793 = vpow.pop %v2792
      %v2794 = vmul.f32 %v2763, 1.442695
      %v2795 = vpow.pop %v2794
      %v2796 = vsel %vm815, %v2765, 0.0
      %2797 = vadd.xlane.f32.xlu0 %v2796
      %v2798 = vpop.xlane.xlu0 %2797
      %v2799 = vsel %vm815, %v2767, 0.0
      %2800 = vadd.xlane.f32.xlu0 %v2799
      %v2801 = vpop.xlane.xlu0 %2800
      %v2802 = vsel %vm815, %v2769, 0.0
      %2803 = vadd.xlane.f32.xlu0 %v2802
      %v2804 = vpop.xlane.xlu0 %2803
      %v2805 = vsel %vm815, %v2771, 0.0
      %2806 = vadd.xlane.f32.xlu0 %v2805
      %v2807 = vpop.xlane.xlu0 %2806
      %v2808 = vsel %vm815, %v2773, 0.0
      %2809 = vadd.xlane.f32.xlu0 %v2808
      %v2810 = vpop.xlane.xlu0 %2809
      %v2811 = vsel %vm815, %v2775, 0.0
      %2812 = vadd.xlane.f32.xlu0 %v2811
      %v2813 = vpop.xlane.xlu0 %2812
      %v2814 = vsel %vm815, %v2777, 0.0
      %2815 = vadd.xlane.f32.xlu0 %v2814
      %v2816 = vpop.xlane.xlu0 %2815
      %v2817 = vsel %vm815, %v2779, 0.0
      %2818 = vadd.xlane.f32.xlu0 %v2817
      %v2819 = vpop.xlane.xlu0 %2818
      %v2820 = vsel %vm815, %v2781, 0.0
      %2821 = vadd.xlane.f32.xlu0 %v2820
      %v2822 = vpop.xlane.xlu0 %2821
      %v2823 = vsel %vm815, %v2783, 0.0
      %2824 = vadd.xlane.f32.xlu0 %v2823
      %v2825 = vpop.xlane.xlu0 %2824
      %v2826 = vsel %vm815, %v2785, 0.0
      %2827 = vadd.xlane.f32.xlu0 %v2826
      %v2828 = vpop.xlane.xlu0 %2827
      %v2829 = vsel %vm815, %v2787, 0.0
      %2830 = vadd.xlane.f32.xlu0 %v2829
      %v2831 = vpop.xlane.xlu0 %2830
      %v2832 = vsel %vm815, %v2789, 0.0
      %2833 = vadd.xlane.f32.xlu0 %v2832
      %v2834 = vpop.xlane.xlu0 %2833
      %v2835 = vsel %vm815, %v2791, 0.0
      %2836 = vadd.xlane.f32.xlu0 %v2835
      %v2837 = vpop.xlane.xlu0 %2836
      %v2838 = vsel %vm815, %v2793, 0.0
      %2839 = vadd.xlane.f32.xlu0 %v2838
      %v2840 = vpop.xlane.xlu0 %2839
      %v2841 = vsel %vm815, %v2795, 0.0
      %2842 = vadd.xlane.f32.xlu0 %v2841
      %v2843 = vpop.xlane.xlu0 %2842
      %v2844 = vrcp.pop %v2798
      %v2845 = vmul.f32 %v2798, %v2844
      %v2846 = vsub.f32 1.0, %v2845
      %v2847 = vmul.f32 %v2844, %v2846
      %v2848 = vadd.f32 %v2844, %v2847
      %vm2849 = vweird.f32 %v2798
      %vm2850 = vweird.f32 %v2844
      %vm2851 = vmor %vm2849, %vm2850
      %v2852 = vsel %vm2851, %v2844, %v2848
      %v2853 = vand.u32 2147483647, %v2798
      %vm2854 = vcmp.eq.f32.partialorder %v2853, 8.507059e+37
      %v2855 = vand.u32 %v2798, 2147483648
      %v2856 = vor.u32 1.1754944e-38, %v2855
      %v2857 = vsel %vm2854, %v2856, %v2852
      %v2858 = vrcp.pop %v2801
      %v2859 = vmul.f32 %v2801, %v2858
      %v2860 = vsub.f32 1.0, %v2859
      %v2861 = vmul.f32 %v2858, %v2860
      %v2862 = vadd.f32 %v2858, %v2861
      %vm2863 = vweird.f32 %v2801
      %vm2864 = vweird.f32 %v2858
      %vm2865 = vmor %vm2863, %vm2864
      %v2866 = vsel %vm2865, %v2858, %v2862
      %v2867 = vand.u32 2147483647, %v2801
      %vm2868 = vcmp.eq.f32.partialorder %v2867, 8.507059e+37
      %v2869 = vand.u32 %v2801, 2147483648
      %v2870 = vor.u32 1.1754944e-38, %v2869
      %v2871 = vsel %vm2868, %v2870, %v2866
      %v2872 = vrcp.pop %v2804
      %v2873 = vmul.f32 %v2804, %v2872
      %v2874 = vsub.f32 1.0, %v2873
      %v2875 = vmul.f32 %v2872, %v2874
      %v2876 = vadd.f32 %v2872, %v2875
      %vm2877 = vweird.f32 %v2804
      %vm2878 = vweird.f32 %v2872
      %vm2879 = vmor %vm2877, %vm2878
      %v2880 = vsel %vm2879, %v2872, %v2876
      %v2881 = vand.u32 2147483647, %v2804
      %vm2882 = vcmp.eq.f32.partialorder %v2881, 8.507059e+37
      %v2883 = vand.u32 %v2804, 2147483648
      %v2884 = vor.u32 1.1754944e-38, %v2883
      %v2885 = vsel %vm2882, %v2884, %v2880
      %v2886 = vrcp.pop %v2807
      %v2887 = vmul.f32 %v2807, %v2886
      %v2888 = vsub.f32 1.0, %v2887
      %v2889 = vmul.f32 %v2886, %v2888
      %v2890 = vadd.f32 %v2886, %v2889
      %vm2891 = vweird.f32 %v2807
      %vm2892 = vweird.f32 %v2886
      %vm2893 = vmor %vm2891, %vm2892
      %v2894 = vsel %vm2893, %v2886, %v2890
      %v2895 = vand.u32 2147483647, %v2807
      %vm2896 = vcmp.eq.f32.partialorder %v2895, 8.507059e+37
      %v2897 = vand.u32 %v2807, 2147483648
      %v2898 = vor.u32 1.1754944e-38, %v2897
      %v2899 = vsel %vm2896, %v2898, %v2894
      %v2900 = vrcp.pop %v2810
      %v2901 = vmul.f32 %v2810, %v2900
      %v2902 = vsub.f32 1.0, %v2901
      %v2903 = vmul.f32 %v2900, %v2902
      %v2904 = vadd.f32 %v2900, %v2903
      %vm2905 = vweird.f32 %v2810
      %vm2906 = vweird.f32 %v2900
      %vm2907 = vmor %vm2905, %vm2906
      %v2908 = vsel %vm2907, %v2900, %v2904
      %v2909 = vand.u32 2147483647, %v2810
      %vm2910 = vcmp.eq.f32.partialorder %v2909, 8.507059e+37
      %v2911 = vand.u32 %v2810, 2147483648
      %v2912 = vor.u32 1.1754944e-38, %v2911
      %v2913 = vsel %vm2910, %v2912, %v2908
      %v2914 = vrcp.pop %v2813
      %v2915 = vmul.f32 %v2813, %v2914
      %v2916 = vsub.f32 1.0, %v2915
      %v2917 = vmul.f32 %v2914, %v2916
      %v2918 = vadd.f32 %v2914, %v2917
      %vm2919 = vweird.f32 %v2813
      %vm2920 = vweird.f32 %v2914
      %vm2921 = vmor %vm2919, %vm2920
      %v2922 = vsel %vm2921, %v2914, %v2918
      %v2923 = vand.u32 2147483647, %v2813
      %vm2924 = vcmp.eq.f32.partialorder %v2923, 8.507059e+37
      %v2925 = vand.u32 %v2813, 2147483648
      %v2926 = vor.u32 1.1754944e-38, %v2925
      %v2927 = vsel %vm2924, %v2926, %v2922
      %v2928 = vrcp.pop %v2816
      %v2929 = vmul.f32 %v2816, %v2928
      %v2930 = vsub.f32 1.0, %v2929
      %v2931 = vmul.f32 %v2928, %v2930
      %v2932 = vadd.f32 %v2928, %v2931
      %vm2933 = vweird.f32 %v2816
      %vm2934 = vweird.f32 %v2928
      %vm2935 = vmor %vm2933, %vm2934
      %v2936 = vsel %vm2935, %v2928, %v2932
      %v2937 = vand.u32 2147483647, %v2816
      %vm2938 = vcmp.eq.f32.partialorder %v2937, 8.507059e+37
      %v2939 = vand.u32 %v2816, 2147483648
      %v2940 = vor.u32 1.1754944e-38, %v2939
      %v2941 = vsel %vm2938, %v2940, %v2936
      %v2942 = vrcp.pop %v2819
      %v2943 = vmul.f32 %v2819, %v2942
      %v2944 = vsub.f32 1.0, %v2943
      %v2945 = vmul.f32 %v2942, %v2944
      %v2946 = vadd.f32 %v2942, %v2945
      %vm2947 = vweird.f32 %v2819
      %vm2948 = vweird.f32 %v2942
      %vm2949 = vmor %vm2947, %vm2948
      %v2950 = vsel %vm2949, %v2942, %v2946
      %v2951 = vand.u32 2147483647, %v2819
      %vm2952 = vcmp.eq.f32.partialorder %v2951, 8.507059e+37
      %v2953 = vand.u32 %v2819, 2147483648
      %v2954 = vor.u32 1.1754944e-38, %v2953
      %v2955 = vsel %vm2952, %v2954, %v2950
      %v2956 = vrcp.pop %v2822
      %v2957 = vmul.f32 %v2822, %v2956
      %v2958 = vsub.f32 1.0, %v2957
      %v2959 = vmul.f32 %v2956, %v2958
      %v2960 = vadd.f32 %v2956, %v2959
      %vm2961 = vweird.f32 %v2822
      %vm2962 = vweird.f32 %v2956
      %vm2963 = vmor %vm2961, %vm2962
      %v2964 = vsel %vm2963, %v2956, %v2960
      %v2965 = vand.u32 2147483647, %v2822
      %vm2966 = vcmp.eq.f32.partialorder %v2965, 8.507059e+37
      %v2967 = vand.u32 %v2822, 2147483648
      %v2968 = vor.u32 1.1754944e-38, %v2967
      %v2969 = vsel %vm2966, %v2968, %v2964
      %v2970 = vrcp.pop %v2825
      %v2971 = vmul.f32 %v2825, %v2970
      %v2972 = vsub.f32 1.0, %v2971
      %v2973 = vmul.f32 %v2970, %v2972
      %v2974 = vadd.f32 %v2970, %v2973
      %vm2975 = vweird.f32 %v2825
      %vm2976 = vweird.f32 %v2970
      %vm2977 = vmor %vm2975, %vm2976
      %v2978 = vsel %vm2977, %v2970, %v2974
      %v2979 = vand.u32 2147483647, %v2825
      %vm2980 = vcmp.eq.f32.partialorder %v2979, 8.507059e+37
      %v2981 = vand.u32 %v2825, 2147483648
      %v2982 = vor.u32 1.1754944e-38, %v2981
      %v2983 = vsel %vm2980, %v2982, %v2978
      %v2984 = vrcp.pop %v2828
      %v2985 = vmul.f32 %v2828, %v2984
      %v2986 = vsub.f32 1.0, %v2985
      %v2987 = vmul.f32 %v2984, %v2986
      %v2988 = vadd.f32 %v2984, %v2987
      %vm2989 = vweird.f32 %v2828
      %vm2990 = vweird.f32 %v2984
      %vm2991 = vmor %vm2989, %vm2990
      %v2992 = vsel %vm2991, %v2984, %v2988
      %v2993 = vand.u32 2147483647, %v2828
      %vm2994 = vcmp.eq.f32.partialorder %v2993, 8.507059e+37
      %v2995 = vand.u32 %v2828, 2147483648
      %v2996 = vor.u32 1.1754944e-38, %v2995
      %v2997 = vsel %vm2994, %v2996, %v2992
      %v2998 = vrcp.pop %v2831
      %v2999 = vmul.f32 %v2831, %v2998
      %v3000 = vsub.f32 1.0, %v2999
      %v3001 = vmul.f32 %v2998, %v3000
      %v3002 = vadd.f32 %v2998, %v3001
      %vm3003 = vweird.f32 %v2831
      %vm3004 = vweird.f32 %v2998
      %vm3005 = vmor %vm3003, %vm3004
      %v3006 = vsel %vm3005, %v2998, %v3002
      %v3007 = vand.u32 2147483647, %v2831
      %vm3008 = vcmp.eq.f32.partialorder %v3007, 8.507059e+37
      %v3009 = vand.u32 %v2831, 2147483648
      %v3010 = vor.u32 1.1754944e-38, %v3009
      %v3011 = vsel %vm3008, %v3010, %v3006
      %v3012 = vrcp.pop %v2834
      %v3013 = vmul.f32 %v2834, %v3012
      %v3014 = vsub.f32 1.0, %v3013
      %v3015 = vmul.f32 %v3012, %v3014
      %v3016 = vadd.f32 %v3012, %v3015
      %vm3017 = vweird.f32 %v2834
      %vm3018 = vweird.f32 %v3012
      %vm3019 = vmor %vm3017, %vm3018
      %v3020 = vsel %vm3019, %v3012, %v3016
      %v3021 = vand.u32 2147483647, %v2834
      %vm3022 = vcmp.eq.f32.partialorder %v3021, 8.507059e+37
      %v3023 = vand.u32 %v2834, 2147483648
      %v3024 = vor.u32 1.1754944e-38, %v3023
      %v3025 = vsel %vm3022, %v3024, %v3020
      %v3026 = vrcp.pop %v2837
      %v3027 = vmul.f32 %v2837, %v3026
      %v3028 = vsub.f32 1.0, %v3027
      %v3029 = vmul.f32 %v3026, %v3028
      %v3030 = vadd.f32 %v3026, %v3029
      %vm3031 = vweird.f32 %v2837
      %vm3032 = vweird.f32 %v3026
      %vm3033 = vmor %vm3031, %vm3032
      %v3034 = vsel %vm3033, %v3026, %v3030
      %v3035 = vand.u32 2147483647, %v2837
      %vm3036 = vcmp.eq.f32.partialorder %v3035, 8.507059e+37
      %v3037 = vand.u32 %v2837, 2147483648
      %v3038 = vor.u32 1.1754944e-38, %v3037
      %v3039 = vsel %vm3036, %v3038, %v3034
      %v3040 = vrcp.pop %v2840
      %v3041 = vmul.f32 %v2840, %v3040
      %v3042 = vsub.f32 1.0, %v3041
      %v3043 = vmul.f32 %v3040, %v3042
      %v3044 = vadd.f32 %v3040, %v3043
      %vm3045 = vweird.f32 %v2840
      %vm3046 = vweird.f32 %v3040
      %vm3047 = vmor %vm3045, %vm3046
      %v3048 = vsel %vm3047, %v3040, %v3044
      %v3049 = vand.u32 2147483647, %v2840
      %vm3050 = vcmp.eq.f32.partialorder %v3049, 8.507059e+37
      %v3051 = vand.u32 %v2840, 2147483648
      %v3052 = vor.u32 1.1754944e-38, %v3051
      %v3053 = vsel %vm3050, %v3052, %v3048
      %v3054 = vrcp.pop %v2843
      %v3055 = vmul.f32 %v2843, %v3054
      %v3056 = vsub.f32 1.0, %v3055
      %v3057 = vmul.f32 %v3054, %v3056
      %v3058 = vadd.f32 %v3054, %v3057
      %vm3059 = vweird.f32 %v2843
      %vm3060 = vweird.f32 %v3054
      %vm3061 = vmor %vm3059, %vm3060
      %v3062 = vsel %vm3061, %v3054, %v3058
      %v3063 = vand.u32 2147483647, %v2843
      %vm3064 = vcmp.eq.f32.partialorder %v3063, 8.507059e+37
      %v3065 = vand.u32 %v2843, 2147483648
      %v3066 = vor.u32 1.1754944e-38, %v3065
      %v3067 = vsel %vm3064, %v3066, %v3062
      %v3068 = vmul.f32 %v2765, %v2857
      %v3069 = vmul.f32 %v2767, %v2871
      %v3070 = vmul.f32 %v2769, %v2885
      %v3071 = vmul.f32 %v2771, %v2899
      %v3072 = vmul.f32 %v2773, %v2913
      %v3073 = vmul.f32 %v2775, %v2927
      %v3074 = vmul.f32 %v2777, %v2941
      %v3075 = vmul.f32 %v2779, %v2955
      %v3076 = vmul.f32 %v2781, %v2969
      %v3077 = vmul.f32 %v2783, %v2983
      %v3078 = vmul.f32 %v2785, %v2997
      %v3079 = vmul.f32 %v2787, %v3011
      %v3080 = vmul.f32 %v2789, %v3025
      %v3081 = vmul.f32 %v2791, %v3039
      %v3082 = vmul.f32 %v2793, %v3053
      %v3083 = vmul.f32 %v2795, %v3067
      %v3084 = vpack.c.bf16 %v3068, %v3068
      %v3085 = vpack.c.bf16 %v3069, %v3069
      %v3086 = vpack.c.bf16 %v3070, %v3070
      %v3087 = vpack.c.bf16 %v3071, %v3071
      %v3088 = vpack.c.bf16 %v3072, %v3072
      %v3089 = vpack.c.bf16 %v3073, %v3073
      %v3090 = vpack.c.bf16 %v3074, %v3074
      %v3091 = vpack.c.bf16 %v3075, %v3075
      %v3092 = vpack.c.bf16 %v3076, %v3076
      %v3093 = vpack.c.bf16 %v3077, %v3077
      %v3094 = vpack.c.bf16 %v3078, %v3078
      %v3095 = vpack.c.bf16 %v3079, %v3079
      %v3096 = vpack.c.bf16 %v3080, %v3080
      %v3097 = vpack.c.bf16 %v3081, %v3081
      %v3098 = vpack.c.bf16 %v3082, %v3082
      %v3099 = vpack.c.bf16 %v3083, %v3083
      %v3102 = vunpack.c.l.b16 %v2284
      %v3103 = vunpack.c.l.b16 %v2285
      %v3104 = vpack.c.b16 %v3103, %v3102
      %v3107 = vsel %vm815, %v3084, 0
      %3109 = vmatpush.bf16.msra.mxu0 0
      %3110 = vmatpush.bf16.msra.mxu0 0
      %3111 = vmatpush.bf16.msra.mxu0 0
      %3112 = vmatpush.bf16.msra.mxu0 0
      %3113 = vmatpush.bf16.msra.mxu0 0
      %3114 = vmatpush.bf16.msra.mxu0 0
      %3115 = vmatpush.bf16.msra.mxu0 0
      %3116 = vmatpush.bf16.msra.mxu0 %v3104
      %3117 = vmatmul.bf16.gmra.mxu0 %v3107
      %v3118 = vpop.f32.mrf.mxu0
      %v3119 = vadd.f32 0.0, %v3118
      %v3120 = vpop.f32.mrf.mxu0
      %3121 = vdwg.mxu0
      %v3124 = vunpack.c.l.b16 %v2286
      %v3125 = vunpack.c.l.b16 %v2287
      %v3126 = vpack.c.b16 %v3125, %v3124
      %v3129 = vsel %vm815, %v3085, 0
      %3131 = vmatpush.bf16.msra.mxu0 0
      %3132 = vmatpush.bf16.msra.mxu0 0
      %3133 = vmatpush.bf16.msra.mxu0 0
      %3134 = vmatpush.bf16.msra.mxu0 0
      %3135 = vmatpush.bf16.msra.mxu0 0
      %3136 = vmatpush.bf16.msra.mxu0 0
      %3137 = vmatpush.bf16.msra.mxu0 0
      %3138 = vmatpush.bf16.msra.mxu0 %v3126
      %3139 = vmatmul.bf16.gmra.mxu0 %v3129
      %v3140 = vpop.f32.mrf.mxu0
      %v3141 = vadd.f32 0.0, %v3140
      %v3142 = vpop.f32.mrf.mxu0
      %3143 = vdwg.mxu0
      %v3146 = vunpack.c.l.b16 %v2288
      %v3147 = vunpack.c.l.b16 %v2289
      %v3148 = vpack.c.b16 %v3147, %v3146
      %v3151 = vsel %vm815, %v3086, 0
      %3153 = vmatpush.bf16.msra.mxu0 0
      %3154 = vmatpush.bf16.msra.mxu0 0
      %3155 = vmatpush.bf16.msra.mxu0 0
      %3156 = vmatpush.bf16.msra.mxu0 0
      %3157 = vmatpush.bf16.msra.mxu0 0
      %3158 = vmatpush.bf16.msra.mxu0 0
      %3159 = vmatpush.bf16.msra.mxu0 0
      %3160 = vmatpush.bf16.msra.mxu0 %v3148
      %3161 = vmatmul.bf16.gmra.mxu0 %v3151
      %v3162 = vpop.f32.mrf.mxu0
      %v3163 = vadd.f32 0.0, %v3162
      %v3164 = vpop.f32.mrf.mxu0
      %3165 = vdwg.mxu0
      %v3168 = vunpack.c.l.b16 %v2290
      %v3169 = vunpack.c.l.b16 %v2291
      %v3170 = vpack.c.b16 %v3169, %v3168
      %v3173 = vsel %vm815, %v3087, 0
      %3175 = vmatpush.bf16.msra.mxu0 0
      %3176 = vmatpush.bf16.msra.mxu0 0
      %3177 = vmatpush.bf16.msra.mxu0 0
      %3178 = vmatpush.bf16.msra.mxu0 0
      %3179 = vmatpush.bf16.msra.mxu0 0
      %3180 = vmatpush.bf16.msra.mxu0 0
      %3181 = vmatpush.bf16.msra.mxu0 0
      %3182 = vmatpush.bf16.msra.mxu0 %v3170
      %3183 = vmatmul.bf16.gmra.mxu0 %v3173
      %v3184 = vpop.f32.mrf.mxu0
      %v3185 = vadd.f32 0.0, %v3184
      %v3186 = vpop.f32.mrf.mxu0
      %3187 = vdwg.mxu0
      %v3190 = vunpack.c.l.b16 %v2292
      %v3191 = vunpack.c.l.b16 %v2293
      %v3192 = vpack.c.b16 %v3191, %v3190
      %v3195 = vsel %vm815, %v3088, 0
      %3197 = vmatpush.bf16.msra.mxu0 0
      %3198 = vmatpush.bf16.msra.mxu0 0
      %3199 = vmatpush.bf16.msra.mxu0 0
      %3200 = vmatpush.bf16.msra.mxu0 0
      %3201 = vmatpush.bf16.msra.mxu0 0
      %3202 = vmatpush.bf16.msra.mxu0 0
      %3203 = vmatpush.bf16.msra.mxu0 0
      %3204 = vmatpush.bf16.msra.mxu0 %v3192
      %3205 = vmatmul.bf16.gmra.mxu0 %v3195
      %v3206 = vpop.f32.mrf.mxu0
      %v3207 = vadd.f32 0.0, %v3206
      %v3208 = vpop.f32.mrf.mxu0
      %3209 = vdwg.mxu0
      %v3212 = vunpack.c.l.b16 %v2294
      %v3213 = vunpack.c.l.b16 %v2295
      %v3214 = vpack.c.b16 %v3213, %v3212
      %v3217 = vsel %vm815, %v3089, 0
      %3219 = vmatpush.bf16.msra.mxu0 0
      %3220 = vmatpush.bf16.msra.mxu0 0
      %3221 = vmatpush.bf16.msra.mxu0 0
      %3222 = vmatpush.bf16.msra.mxu0 0
      %3223 = vmatpush.bf16.msra.mxu0 0
      %3224 = vmatpush.bf16.msra.mxu0 0
      %3225 = vmatpush.bf16.msra.mxu0 0
      %3226 = vmatpush.bf16.msra.mxu0 %v3214
      %3227 = vmatmul.bf16.gmra.mxu0 %v3217
      %v3228 = vpop.f32.mrf.mxu0
      %v3229 = vadd.f32 0.0, %v3228
      %v3230 = vpop.f32.mrf.mxu0
      %3231 = vdwg.mxu0
      %v3234 = vunpack.c.l.b16 %v2296
      %v3235 = vunpack.c.l.b16 %v2297
      %v3236 = vpack.c.b16 %v3235, %v3234
      %v3239 = vsel %vm815, %v3090, 0
      %3241 = vmatpush.bf16.msra.mxu0 0
      %3242 = vmatpush.bf16.msra.mxu0 0
      %3243 = vmatpush.bf16.msra.mxu0 0
      %3244 = vmatpush.bf16.msra.mxu0 0
      %3245 = vmatpush.bf16.msra.mxu0 0
      %3246 = vmatpush.bf16.msra.mxu0 0
      %3247 = vmatpush.bf16.msra.mxu0 0
      %3248 = vmatpush.bf16.msra.mxu0 %v3236
      %3249 = vmatmul.bf16.gmra.mxu0 %v3239
      %v3250 = vpop.f32.mrf.mxu0
      %v3251 = vadd.f32 0.0, %v3250
      %v3252 = vpop.f32.mrf.mxu0
      %3253 = vdwg.mxu0
      %v3256 = vunpack.c.l.b16 %v2298
      %v3257 = vunpack.c.l.b16 %v2299
      %v3258 = vpack.c.b16 %v3257, %v3256
      %v3261 = vsel %vm815, %v3091, 0
      %3263 = vmatpush.bf16.msra.mxu0 0
      %3264 = vmatpush.bf16.msra.mxu0 0
      %3265 = vmatpush.bf16.msra.mxu0 0
      %3266 = vmatpush.bf16.msra.mxu0 0
      %3267 = vmatpush.bf16.msra.mxu0 0
      %3268 = vmatpush.bf16.msra.mxu0 0
      %3269 = vmatpush.bf16.msra.mxu0 0
      %3270 = vmatpush.bf16.msra.mxu0 %v3258
      %3271 = vmatmul.bf16.gmra.mxu0 %v3261
      %v3272 = vpop.f32.mrf.mxu0
      %v3273 = vadd.f32 0.0, %v3272
      %v3274 = vpop.f32.mrf.mxu0
      %3275 = vdwg.mxu0
      %v3278 = vunpack.c.l.b16 %v2300
      %v3279 = vunpack.c.l.b16 %v2301
      %v3280 = vpack.c.b16 %v3279, %v3278
      %v3283 = vsel %vm815, %v3092, 0
      %3285 = vmatpush.bf16.msra.mxu0 0
      %3286 = vmatpush.bf16.msra.mxu0 0
      %3287 = vmatpush.bf16.msra.mxu0 0
      %3288 = vmatpush.bf16.msra.mxu0 0
      %3289 = vmatpush.bf16.msra.mxu0 0
      %3290 = vmatpush.bf16.msra.mxu0 0
      %3291 = vmatpush.bf16.msra.mxu0 0
      %3292 = vmatpush.bf16.msra.mxu0 %v3280
      %3293 = vmatmul.bf16.gmra.mxu0 %v3283
      %v3294 = vpop.f32.mrf.mxu0
      %v3295 = vadd.f32 0.0, %v3294
      %v3296 = vpop.f32.mrf.mxu0
      %3297 = vdwg.mxu0
      %v3300 = vunpack.c.l.b16 %v2302
      %v3301 = vunpack.c.l.b16 %v2303
      %v3302 = vpack.c.b16 %v3301, %v3300
      %v3305 = vsel %vm815, %v3093, 0
      %3307 = vmatpush.bf16.msra.mxu0 0
      %3308 = vmatpush.bf16.msra.mxu0 0
      %3309 = vmatpush.bf16.msra.mxu0 0
      %3310 = vmatpush.bf16.msra.mxu0 0
      %3311 = vmatpush.bf16.msra.mxu0 0
      %3312 = vmatpush.bf16.msra.mxu0 0
      %3313 = vmatpush.bf16.msra.mxu0 0
      %3314 = vmatpush.bf16.msra.mxu0 %v3302
      %3315 = vmatmul.bf16.gmra.mxu0 %v3305
      %v3316 = vpop.f32.mrf.mxu0
      %v3317 = vadd.f32 0.0, %v3316
      %v3318 = vpop.f32.mrf.mxu0
      %3319 = vdwg.mxu0
      %v3322 = vunpack.c.l.b16 %v2304
      %v3323 = vunpack.c.l.b16 %v2305
      %v3324 = vpack.c.b16 %v3323, %v3322
      %v3327 = vsel %vm815, %v3094, 0
      %3329 = vmatpush.bf16.msra.mxu0 0
      %3330 = vmatpush.bf16.msra.mxu0 0
      %3331 = vmatpush.bf16.msra.mxu0 0
      %3332 = vmatpush.bf16.msra.mxu0 0
      %3333 = vmatpush.bf16.msra.mxu0 0
      %3334 = vmatpush.bf16.msra.mxu0 0
      %3335 = vmatpush.bf16.msra.mxu0 0
      %3336 = vmatpush.bf16.msra.mxu0 %v3324
      %3337 = vmatmul.bf16.gmra.mxu0 %v3327
      %v3338 = vpop.f32.mrf.mxu0
      %v3339 = vadd.f32 0.0, %v3338
      %v3340 = vpop.f32.mrf.mxu0
      %3341 = vdwg.mxu0
      %v3344 = vunpack.c.l.b16 %v2306
      %v3345 = vunpack.c.l.b16 %v2307
      %v3346 = vpack.c.b16 %v3345, %v3344
      %v3349 = vsel %vm815, %v3095, 0
      %3351 = vmatpush.bf16.msra.mxu0 0
      %3352 = vmatpush.bf16.msra.mxu0 0
      %3353 = vmatpush.bf16.msra.mxu0 0
      %3354 = vmatpush.bf16.msra.mxu0 0
      %3355 = vmatpush.bf16.msra.mxu0 0
      %3356 = vmatpush.bf16.msra.mxu0 0
      %3357 = vmatpush.bf16.msra.mxu0 0
      %3358 = vmatpush.bf16.msra.mxu0 %v3346
      %3359 = vmatmul.bf16.gmra.mxu0 %v3349
      %v3360 = vpop.f32.mrf.mxu0
      %v3361 = vadd.f32 0.0, %v3360
      %v3362 = vpop.f32.mrf.mxu0
      %3363 = vdwg.mxu0
      %v3366 = vunpack.c.l.b16 %v2308
      %v3367 = vunpack.c.l.b16 %v2309
      %v3368 = vpack.c.b16 %v3367, %v3366
      %v3371 = vsel %vm815, %v3096, 0
      %3373 = vmatpush.bf16.msra.mxu0 0
      %3374 = vmatpush.bf16.msra.mxu0 0
      %3375 = vmatpush.bf16.msra.mxu0 0
      %3376 = vmatpush.bf16.msra.mxu0 0
      %3377 = vmatpush.bf16.msra.mxu0 0
      %3378 = vmatpush.bf16.msra.mxu0 0
      %3379 = vmatpush.bf16.msra.mxu0 0
      %3380 = vmatpush.bf16.msra.mxu0 %v3368
      %3381 = vmatmul.bf16.gmra.mxu0 %v3371
      %v3382 = vpop.f32.mrf.mxu0
      %v3383 = vadd.f32 0.0, %v3382
      %v3384 = vpop.f32.mrf.mxu0
      %3385 = vdwg.mxu0
      %v3388 = vunpack.c.l.b16 %v2310
      %v3389 = vunpack.c.l.b16 %v2311
      %v3390 = vpack.c.b16 %v3389, %v3388
      %v3393 = vsel %vm815, %v3097, 0
      %3395 = vmatpush.bf16.msra.mxu0 0
      %3396 = vmatpush.bf16.msra.mxu0 0
      %3397 = vmatpush.bf16.msra.mxu0 0
      %3398 = vmatpush.bf16.msra.mxu0 0
      %3399 = vmatpush.bf16.msra.mxu0 0
      %3400 = vmatpush.bf16.msra.mxu0 0
      %3401 = vmatpush.bf16.msra.mxu0 0
      %3402 = vmatpush.bf16.msra.mxu0 %v3390
      %3403 = vmatmul.bf16.gmra.mxu0 %v3393
      %v3404 = vpop.f32.mrf.mxu0
      %v3405 = vadd.f32 0.0, %v3404
      %v3406 = vpop.f32.mrf.mxu0
      %3407 = vdwg.mxu0
      %v3410 = vunpack.c.l.b16 %v2312
      %v3411 = vunpack.c.l.b16 %v2313
      %v3412 = vpack.c.b16 %v3411, %v3410
      %v3415 = vsel %vm815, %v3098, 0
      %3417 = vmatpush.bf16.msra.mxu0 0
      %3418 = vmatpush.bf16.msra.mxu0 0
      %3419 = vmatpush.bf16.msra.mxu0 0
      %3420 = vmatpush.bf16.msra.mxu0 0
      %3421 = vmatpush.bf16.msra.mxu0 0
      %3422 = vmatpush.bf16.msra.mxu0 0
      %3423 = vmatpush.bf16.msra.mxu0 0
      %3424 = vmatpush.bf16.msra.mxu0 %v3412
      %3425 = vmatmul.bf16.gmra.mxu0 %v3415
      %v3426 = vpop.f32.mrf.mxu0
      %v3427 = vadd.f32 0.0, %v3426
      %v3428 = vpop.f32.mrf.mxu0
      %3429 = vdwg.mxu0
      %v3432 = vunpack.c.l.b16 %v2314
      %v3433 = vunpack.c.l.b16 %v2315
      %v3434 = vpack.c.b16 %v3433, %v3432
      %v3437 = vsel %vm815, %v3099, 0
      %3439 = vmatpush.bf16.msra.mxu0 0
      %3440 = vmatpush.bf16.msra.mxu0 0
      %3441 = vmatpush.bf16.msra.mxu0 0
      %3442 = vmatpush.bf16.msra.mxu0 0
      %3443 = vmatpush.bf16.msra.mxu0 0
      %3444 = vmatpush.bf16.msra.mxu0 0
      %3445 = vmatpush.bf16.msra.mxu0 0
      %3446 = vmatpush.bf16.msra.mxu0 %v3434
      %3447 = vmatmul.bf16.gmra.mxu0 %v3437
      %v3448 = vpop.f32.mrf.mxu0
      %v3449 = vadd.f32 0.0, %v3448
      %v3450 = vpop.f32.mrf.mxu0
      %3451 = vdwg.mxu0
      %v3452 = vpack.c.bf16 %v3141, %v3119
      %v3453 = vpack.c.bf16 %v3185, %v3163
      %v3454 = vpack.c.bf16 %v3229, %v3207
      %v3455 = vpack.c.bf16 %v3273, %v3251
      %v3456 = vpack.c.bf16 %v3317, %v3295
      %v3457 = vpack.c.bf16 %v3361, %v3339
      %v3458 = vpack.c.bf16 %v3405, %v3383
      %v3459 = vpack.c.bf16 %v3449, %v3427
      %v3462 = vunpack.c.l.b16 %v1971
      %v3463 = vunpack.c.l.b16 %v1972
      %v3464 = vpack.c.b16 %v3463, %v3462
      %v3467 = vsel %vm815, %v3452, 0
      %v3470 = vsel %vm815, %v3453, 0
      %v3473 = vsel %vm815, %v3454, 0
      %v3476 = vsel %vm815, %v3455, 0
      %v3479 = vsel %vm815, %v3456, 0
      %v3482 = vsel %vm815, %v3457, 0
      %v3485 = vsel %vm815, %v3458, 0
      %v3488 = vsel %vm815, %v3459, 0
      %3490 = vmatpush.bf16.msra.mxu0 0
      %3491 = vmatpush.bf16.msra.mxu0 0
      %3492 = vmatpush.bf16.msra.mxu0 0
      %3493 = vmatpush.bf16.msra.mxu0 0
      %3494 = vmatpush.bf16.msra.mxu0 0
      %3495 = vmatpush.bf16.msra.mxu0 0
      %3496 = vmatpush.bf16.msra.mxu0 0
      %3497 = vmatpush.bf16.msra.mxu0 %v3464
      %3498 = vmatmul.bf16.gmra.mxu0 %v3467
      %v3499 = vpop.f32.mrf.mxu0
      %v3500 = vadd.f32 0.0, %v3499
      %v3501 = vpop.f32.mrf.mxu0
      %v3502 = vadd.f32 0.0, %v3501
      %3503 = vmatmul.bf16.gmra.mxu0 %v3470
      %v3504 = vpop.f32.mrf.mxu0
      %v3505 = vadd.f32 0.0, %v3504
      %v3506 = vpop.f32.mrf.mxu0
      %v3507 = vadd.f32 0.0, %v3506
      %3508 = vmatmul.bf16.gmra.mxu0 %v3473
      %v3509 = vpop.f32.mrf.mxu0
      %v3510 = vadd.f32 0.0, %v3509
      %v3511 = vpop.f32.mrf.mxu0
      %v3512 = vadd.f32 0.0, %v3511
      %3513 = vmatmul.bf16.gmra.mxu0 %v3476
      %v3514 = vpop.f32.mrf.mxu0
      %v3515 = vadd.f32 0.0, %v3514
      %v3516 = vpop.f32.mrf.mxu0
      %v3517 = vadd.f32 0.0, %v3516
      %3518 = vmatmul.bf16.gmra.mxu0 %v3479
      %v3519 = vpop.f32.mrf.mxu0
      %v3520 = vadd.f32 0.0, %v3519
      %v3521 = vpop.f32.mrf.mxu0
      %v3522 = vadd.f32 0.0, %v3521
      %3523 = vmatmul.bf16.gmra.mxu0 %v3482
      %v3524 = vpop.f32.mrf.mxu0
      %v3525 = vadd.f32 0.0, %v3524
      %v3526 = vpop.f32.mrf.mxu0
      %v3527 = vadd.f32 0.0, %v3526
      %3528 = vmatmul.bf16.gmra.mxu0 %v3485
      %v3529 = vpop.f32.mrf.mxu0
      %v3530 = vadd.f32 0.0, %v3529
      %v3531 = vpop.f32.mrf.mxu0
      %v3532 = vadd.f32 0.0, %v3531
      %3533 = vmatmul.bf16.gmra.mxu0 %v3488
      %v3534 = vpop.f32.mrf.mxu0
      %v3535 = vadd.f32 0.0, %v3534
      %v3536 = vpop.f32.mrf.mxu0
      %v3537 = vadd.f32 0.0, %v3536
      %3538 = vdwg.mxu0
      %v3541 = vunpack.c.l.b16 %v392
      %v3542 = vunpack.c.l.b16 %v393
      %v3543 = vpack.c.b16 %v3542, %v3541
      %v3546 = vsel %vm815, %v1947, 0
      %v3549 = vsel %vm815, %v1948, 0
      %v3552 = vsel %vm815, %v1949, 0
      %v3555 = vsel %vm815, %v1950, 0
      %v3558 = vsel %vm815, %v1951, 0
      %v3561 = vsel %vm815, %v1952, 0
      %v3564 = vsel %vm815, %v1953, 0
      %v3567 = vsel %vm815, %v1954, 0
      %3569 = vmatpush.bf16.msra.mxu0 0
      %3570 = vmatpush.bf16.msra.mxu0 0
      %3571 = vmatpush.bf16.msra.mxu0 0
      %3572 = vmatpush.bf16.msra.mxu0 0
      %3573 = vmatpush.bf16.msra.mxu0 0
      %3574 = vmatpush.bf16.msra.mxu0 0
      %3575 = vmatpush.bf16.msra.mxu0 0
      %3576 = vmatpush.bf16.msra.mxu0 %v3543
      %3577 = vmatmul.bf16.gmra.mxu0 %v3546
      %v3578 = vpop.f32.mrf.mxu0
      %v3579 = vadd.f32 %v3500, %v3578
      %v3580 = vpop.f32.mrf.mxu0
      %v3581 = vadd.f32 %v3502, %v3580
      %3582 = vmatmul.bf16.gmra.mxu0 %v3549
      %v3583 = vpop.f32.mrf.mxu0
      %v3584 = vadd.f32 %v3505, %v3583
      %v3585 = vpop.f32.mrf.mxu0
      %v3586 = vadd.f32 %v3507, %v3585
      %3587 = vmatmul.bf16.gmra.mxu0 %v3552
      %v3588 = vpop.f32.mrf.mxu0
      %v3589 = vadd.f32 %v3510, %v3588
      %v3590 = vpop.f32.mrf.mxu0
      %v3591 = vadd.f32 %v3512, %v3590
      %3592 = vmatmul.bf16.gmra.mxu0 %v3555
      %v3593 = vpop.f32.mrf.mxu0
      %v3594 = vadd.f32 %v3515, %v3593
      %v3595 = vpop.f32.mrf.mxu0
      %v3596 = vadd.f32 %v3517, %v3595
      %3597 = vmatmul.bf16.gmra.mxu0 %v3558
      %v3598 = vpop.f32.mrf.mxu0
      %v3599 = vadd.f32 %v3520, %v3598
      %v3600 = vpop.f32.mrf.mxu0
      %v3601 = vadd.f32 %v3522, %v3600
      %3602 = vmatmul.bf16.gmra.mxu0 %v3561
      %v3603 = vpop.f32.mrf.mxu0
      %v3604 = vadd.f32 %v3525, %v3603
      %v3605 = vpop.f32.mrf.mxu0
      %v3606 = vadd.f32 %v3527, %v3605
      %3607 = vmatmul.bf16.gmra.mxu0 %v3564
      %v3608 = vpop.f32.mrf.mxu0
      %v3609 = vadd.f32 %v3530, %v3608
      %v3610 = vpop.f32.mrf.mxu0
      %v3611 = vadd.f32 %v3532, %v3610
      %3612 = vmatmul.bf16.gmra.mxu0 %v3567
      %v3613 = vpop.f32.mrf.mxu0
      %v3614 = vadd.f32 %v3535, %v3613
      %v3615 = vpop.f32.mrf.mxu0
      %v3616 = vadd.f32 %v3537, %v3615
      %3617 = vdwg.mxu0
      %s3618 = scalar_lea.vmem %s2, 32
      %v3619 = vld [vmem:[%s3618] sm:$0xf]
      %v3620 = vld [vmem:[%s3618 + $0x4] sm:$0xf]
      %v3621 = vld [vmem:[%s3618 + $0x8] sm:$0xf]
      %v3622 = vld [vmem:[%s3618 + $0xc] sm:$0xf]
      %s3623 = scalar_lea.vmem %s3, 32
      %v3624 = vld [vmem:[%s3623] sm:$0xf]
      %v3625 = vld [vmem:[%s3623 + $0x4] sm:$0xf]
      %v3626 = vld [vmem:[%s3623 + $0x8] sm:$0xf]
      %v3627 = vld [vmem:[%s3623 + $0xc] sm:$0xf]
      %s3628 = scalar_lea.vmem %s4, 32
      %v3629 = vld [vmem:[%s3628] sm:$0xf]
      %v3630 = vld [vmem:[%s3628 + $0x4] sm:$0xf]
      %v3631 = vld [vmem:[%s3628 + $0x8] sm:$0xf]
      %v3632 = vld [vmem:[%s3628 + $0xc] sm:$0xf]
      %s3633 = scalar_lea.vmem %s5, 16
      %v3634 = vld [vmem:[%s3633] sm:$0xf]
      %v3635 = vld [vmem:[%s3633 + $0x4] sm:$0xf]
      %v3640 = vunpack.c.l.b16 %v3619
      %v3641 = vunpack.c.l.b16 %v3620
      %v3642 = vunpack.c.l.b16 %v3621
      %v3643 = vunpack.c.l.b16 %v3622
      %v3644 = vpack.c.b16 %v3641, %v3640
      %v3645 = vpack.c.b16 %v3643, %v3642
      %3648 = vmatpush.bf16.msra.mxu0 0
      %3649 = vmatpush.bf16.msra.mxu0 0
      %3650 = vmatpush.bf16.msra.mxu0 0
      %3651 = vmatpush.bf16.msra.mxu0 0
      %3652 = vmatpush.bf16.msra.mxu0 0
      %3653 = vmatpush.bf16.msra.mxu0 0
      %3654 = vmatpush.bf16.msra.mxu0 %v3645
      %3655 = vmatpush.bf16.msra.mxu0 %v3644
      %3656 = vmatmul.bf16.gmra.mxu0 %v408
      %v3657 = vpop.f32.mrf.mxu0
      %v3658 = vadd.f32 0.0, %v3657
      %v3659 = vpop.f32.mrf.mxu0
      %v3660 = vadd.f32 0.0, %v3659
      %3661 = vmatmul.bf16.gmra.mxu0 %v411
      %v3662 = vpop.f32.mrf.mxu0
      %v3663 = vadd.f32 0.0, %v3662
      %v3664 = vpop.f32.mrf.mxu0
      %v3665 = vadd.f32 0.0, %v3664
      %3666 = vmatmul.bf16.gmra.mxu0 %v414
      %v3667 = vpop.f32.mrf.mxu0
      %v3668 = vadd.f32 0.0, %v3667
      %v3669 = vpop.f32.mrf.mxu0
      %v3670 = vadd.f32 0.0, %v3669
      %3671 = vmatmul.bf16.gmra.mxu0 %v417
      %v3672 = vpop.f32.mrf.mxu0
      %v3673 = vadd.f32 0.0, %v3672
      %v3674 = vpop.f32.mrf.mxu0
      %v3675 = vadd.f32 0.0, %v3674
      %3676 = vmatmul.bf16.gmra.mxu0 %v420
      %v3677 = vpop.f32.mrf.mxu0
      %v3678 = vadd.f32 0.0, %v3677
      %v3679 = vpop.f32.mrf.mxu0
      %v3680 = vadd.f32 0.0, %v3679
      %3681 = vmatmul.bf16.gmra.mxu0 %v423
      %v3682 = vpop.f32.mrf.mxu0
      %v3683 = vadd.f32 0.0, %v3682
      %v3684 = vpop.f32.mrf.mxu0
      %v3685 = vadd.f32 0.0, %v3684
      %3686 = vmatmul.bf16.gmra.mxu0 %v426
      %v3687 = vpop.f32.mrf.mxu0
      %v3688 = vadd.f32 0.0, %v3687
      %v3689 = vpop.f32.mrf.mxu0
      %v3690 = vadd.f32 0.0, %v3689
      %3691 = vmatmul.bf16.gmra.mxu0 %v429
      %v3692 = vpop.f32.mrf.mxu0
      %v3693 = vadd.f32 0.0, %v3692
      %v3694 = vpop.f32.mrf.mxu0
      %v3695 = vadd.f32 0.0, %v3694
      %3696 = vdwg.mxu0
      %v3701 = vunpack.c.l.b16 %v3624
      %v3702 = vunpack.c.l.b16 %v3625
      %v3703 = vunpack.c.l.b16 %v3626
      %v3704 = vunpack.c.l.b16 %v3627
      %v3705 = vpack.c.b16 %v3702, %v3701
      %v3706 = vpack.c.b16 %v3704, %v3703
      %3709 = vmatpush.bf16.msra.mxu0 0
      %3710 = vmatpush.bf16.msra.mxu0 0
      %3711 = vmatpush.bf16.msra.mxu0 0
      %3712 = vmatpush.bf16.msra.mxu0 0
      %3713 = vmatpush.bf16.msra.mxu0 0
      %3714 = vmatpush.bf16.msra.mxu0 0
      %3715 = vmatpush.bf16.msra.mxu0 %v3706
      %3716 = vmatpush.bf16.msra.mxu0 %v3705
      %3717 = vmatmul.bf16.gmra.mxu0 %v493
      %v3718 = vpop.f32.mrf.mxu0
      %v3719 = vadd.f32 0.0, %v3718
      %v3720 = vpop.f32.mrf.mxu0
      %v3721 = vadd.f32 0.0, %v3720
      %3722 = vmatmul.bf16.gmra.mxu0 %v496
      %v3723 = vpop.f32.mrf.mxu0
      %v3724 = vadd.f32 0.0, %v3723
      %v3725 = vpop.f32.mrf.mxu0
      %v3726 = vadd.f32 0.0, %v3725
      %3727 = vmatmul.bf16.gmra.mxu0 %v499
      %v3728 = vpop.f32.mrf.mxu0
      %v3729 = vadd.f32 0.0, %v3728
      %v3730 = vpop.f32.mrf.mxu0
      %v3731 = vadd.f32 0.0, %v3730
      %3732 = vmatmul.bf16.gmra.mxu0 %v502
      %v3733 = vpop.f32.mrf.mxu0
      %v3734 = vadd.f32 0.0, %v3733
      %v3735 = vpop.f32.mrf.mxu0
      %v3736 = vadd.f32 0.0, %v3735
      %3737 = vmatmul.bf16.gmra.mxu0 %v505
      %v3738 = vpop.f32.mrf.mxu0
      %v3739 = vadd.f32 0.0, %v3738
      %v3740 = vpop.f32.mrf.mxu0
      %v3741 = vadd.f32 0.0, %v3740
      %3742 = vmatmul.bf16.gmra.mxu0 %v508
      %v3743 = vpop.f32.mrf.mxu0
      %v3744 = vadd.f32 0.0, %v3743
      %v3745 = vpop.f32.mrf.mxu0
      %v3746 = vadd.f32 0.0, %v3745
      %3747 = vmatmul.bf16.gmra.mxu0 %v511
      %v3748 = vpop.f32.mrf.mxu0
      %v3749 = vadd.f32 0.0, %v3748
      %v3750 = vpop.f32.mrf.mxu0
      %v3751 = vadd.f32 0.0, %v3750
      %3752 = vmatmul.bf16.gmra.mxu0 %v514
      %v3753 = vpop.f32.mrf.mxu0
      %v3754 = vadd.f32 0.0, %v3753
      %v3755 = vpop.f32.mrf.mxu0
      %v3756 = vadd.f32 0.0, %v3755
      %3757 = vmatmul.bf16.gmra.mxu0 %v517
      %v3758 = vpop.f32.mrf.mxu0
      %v3759 = vadd.f32 0.0, %v3758
      %v3760 = vpop.f32.mrf.mxu0
      %v3761 = vadd.f32 0.0, %v3760
      %3762 = vmatmul.bf16.gmra.mxu0 %v520
      %v3763 = vpop.f32.mrf.mxu0
      %v3764 = vadd.f32 0.0, %v3763
      %v3765 = vpop.f32.mrf.mxu0
      %v3766 = vadd.f32 0.0, %v3765
      %3767 = vmatmul.bf16.gmra.mxu0 %v523
      %v3768 = vpop.f32.mrf.mxu0
      %v3769 = vadd.f32 0.0, %v3768
      %v3770 = vpop.f32.mrf.mxu0
      %v3771 = vadd.f32 0.0, %v3770
      %3772 = vmatmul.bf16.gmra.mxu0 %v526
      %v3773 = vpop.f32.mrf.mxu0
      %v3774 = vadd.f32 0.0, %v3773
      %v3775 = vpop.f32.mrf.mxu0
      %v3776 = vadd.f32 0.0, %v3775
      %3777 = vmatmul.bf16.gmra.mxu0 %v529
      %v3778 = vpop.f32.mrf.mxu0
      %v3779 = vadd.f32 0.0, %v3778
      %v3780 = vpop.f32.mrf.mxu0
      %v3781 = vadd.f32 0.0, %v3780
      %3782 = vmatmul.bf16.gmra.mxu0 %v532
      %v3783 = vpop.f32.mrf.mxu0
      %v3784 = vadd.f32 0.0, %v3783
      %v3785 = vpop.f32.mrf.mxu0
      %v3786 = vadd.f32 0.0, %v3785
      %3787 = vmatmul.bf16.gmra.mxu0 %v535
      %v3788 = vpop.f32.mrf.mxu0
      %v3789 = vadd.f32 0.0, %v3788
      %v3790 = vpop.f32.mrf.mxu0
      %v3791 = vadd.f32 0.0, %v3790
      %3792 = vmatmul.bf16.gmra.mxu0 %v538
      %v3793 = vpop.f32.mrf.mxu0
      %v3794 = vadd.f32 0.0, %v3793
      %v3795 = vpop.f32.mrf.mxu0
      %v3796 = vadd.f32 0.0, %v3795
      %3797 = vdwg.mxu0
      %v3802 = vunpack.c.l.b16 %v3629
      %v3803 = vunpack.c.l.b16 %v3630
      %v3804 = vunpack.c.l.b16 %v3631
      %v3805 = vunpack.c.l.b16 %v3632
      %v3806 = vpack.c.b16 %v3803, %v3802
      %v3807 = vpack.c.b16 %v3805, %v3804
      %3810 = vmatpush.bf16.msra.mxu0 0
      %3811 = vmatpush.bf16.msra.mxu0 0
      %3812 = vmatpush.bf16.msra.mxu0 0
      %3813 = vmatpush.bf16.msra.mxu0 0
      %3814 = vmatpush.bf16.msra.mxu0 0
      %3815 = vmatpush.bf16.msra.mxu0 0
      %3816 = vmatpush.bf16.msra.mxu0 %v3807
      %3817 = vmatpush.bf16.msra.mxu0 %v3806
      %3818 = vmatmul.bf16.gmra.mxu0 %v493
      %v3819 = vpop.f32.mrf.mxu0
      %v3820 = vadd.f32 0.0, %v3819
      %v3821 = vpop.f32.mrf.mxu0
      %v3822 = vadd.f32 0.0, %v3821
      %3823 = vmatmul.bf16.gmra.mxu0 %v496
      %v3824 = vpop.f32.mrf.mxu0
      %v3825 = vadd.f32 0.0, %v3824
      %v3826 = vpop.f32.mrf.mxu0
      %v3827 = vadd.f32 0.0, %v3826
      %3828 = vmatmul.bf16.gmra.mxu0 %v499
      %v3829 = vpop.f32.mrf.mxu0
      %v3830 = vadd.f32 0.0, %v3829
      %v3831 = vpop.f32.mrf.mxu0
      %v3832 = vadd.f32 0.0, %v3831
      %3833 = vmatmul.bf16.gmra.mxu0 %v502
      %v3834 = vpop.f32.mrf.mxu0
      %v3835 = vadd.f32 0.0, %v3834
      %v3836 = vpop.f32.mrf.mxu0
      %v3837 = vadd.f32 0.0, %v3836
      %3838 = vmatmul.bf16.gmra.mxu0 %v505
      %v3839 = vpop.f32.mrf.mxu0
      %v3840 = vadd.f32 0.0, %v3839
      %v3841 = vpop.f32.mrf.mxu0
      %v3842 = vadd.f32 0.0, %v3841
      %3843 = vmatmul.bf16.gmra.mxu0 %v508
      %v3844 = vpop.f32.mrf.mxu0
      %v3845 = vadd.f32 0.0, %v3844
      %v3846 = vpop.f32.mrf.mxu0
      %v3847 = vadd.f32 0.0, %v3846
      %3848 = vmatmul.bf16.gmra.mxu0 %v511
      %v3849 = vpop.f32.mrf.mxu0
      %v3850 = vadd.f32 0.0, %v3849
      %v3851 = vpop.f32.mrf.mxu0
      %v3852 = vadd.f32 0.0, %v3851
      %3853 = vmatmul.bf16.gmra.mxu0 %v514
      %v3854 = vpop.f32.mrf.mxu0
      %v3855 = vadd.f32 0.0, %v3854
      %v3856 = vpop.f32.mrf.mxu0
      %v3857 = vadd.f32 0.0, %v3856
      %3858 = vmatmul.bf16.gmra.mxu0 %v517
      %v3859 = vpop.f32.mrf.mxu0
      %v3860 = vadd.f32 0.0, %v3859
      %v3861 = vpop.f32.mrf.mxu0
      %v3862 = vadd.f32 0.0, %v3861
      %3863 = vmatmul.bf16.gmra.mxu0 %v520
      %v3864 = vpop.f32.mrf.mxu0
      %v3865 = vadd.f32 0.0, %v3864
      %v3866 = vpop.f32.mrf.mxu0
      %v3867 = vadd.f32 0.0, %v3866
      %3868 = vmatmul.bf16.gmra.mxu0 %v523
      %v3869 = vpop.f32.mrf.mxu0
      %v3870 = vadd.f32 0.0, %v3869
      %v3871 = vpop.f32.mrf.mxu0
      %v3872 = vadd.f32 0.0, %v3871
      %3873 = vmatmul.bf16.gmra.mxu0 %v526
      %v3874 = vpop.f32.mrf.mxu0
      %v3875 = vadd.f32 0.0, %v3874
      %v3876 = vpop.f32.mrf.mxu0
      %v3877 = vadd.f32 0.0, %v3876
      %3878 = vmatmul.bf16.gmra.mxu0 %v529
      %v3879 = vpop.f32.mrf.mxu0
      %v3880 = vadd.f32 0.0, %v3879
      %v3881 = vpop.f32.mrf.mxu0
      %v3882 = vadd.f32 0.0, %v3881
      %3883 = vmatmul.bf16.gmra.mxu0 %v532
      %v3884 = vpop.f32.mrf.mxu0
      %v3885 = vadd.f32 0.0, %v3884
      %v3886 = vpop.f32.mrf.mxu0
      %v3887 = vadd.f32 0.0, %v3886
      %3888 = vmatmul.bf16.gmra.mxu0 %v535
      %v3889 = vpop.f32.mrf.mxu0
      %v3890 = vadd.f32 0.0, %v3889
      %v3891 = vpop.f32.mrf.mxu0
      %v3892 = vadd.f32 0.0, %v3891
      %3893 = vmatmul.bf16.gmra.mxu0 %v538
      %v3894 = vpop.f32.mrf.mxu0
      %v3895 = vadd.f32 0.0, %v3894
      %v3896 = vpop.f32.mrf.mxu0
      %v3897 = vadd.f32 0.0, %v3896
      %3898 = vdwg.mxu0
      %v3899 = vpack.c.bf16 %v3658, %v3658
      %v3900 = vpack.c.bf16 %v3660, %v3660
      %v3901 = vpack.c.bf16 %v3663, %v3663
      %v3902 = vpack.c.bf16 %v3665, %v3665
      %v3903 = vpack.c.bf16 %v3668, %v3668
      %v3904 = vpack.c.bf16 %v3670, %v3670
      %v3905 = vpack.c.bf16 %v3673, %v3673
      %v3906 = vpack.c.bf16 %v3675, %v3675
      %v3907 = vpack.c.bf16 %v3678, %v3678
      %v3908 = vpack.c.bf16 %v3680, %v3680
      %v3909 = vpack.c.bf16 %v3683, %v3683
      %v3910 = vpack.c.bf16 %v3685, %v3685
      %v3911 = vpack.c.bf16 %v3688, %v3688
      %v3912 = vpack.c.bf16 %v3690, %v3690
      %v3913 = vpack.c.bf16 %v3693, %v3693
      %v3914 = vpack.c.bf16 %v3695, %v3695
      %v3915 = vpack.c.bf16 %v3719, %v3719
      %v3916 = vpack.c.bf16 %v3721, %v3721
      %v3917 = vpack.c.bf16 %v3724, %v3724
      %v3918 = vpack.c.bf16 %v3726, %v3726
      %v3919 = vpack.c.bf16 %v3729, %v3729
      %v3920 = vpack.c.bf16 %v3731, %v3731
      %v3921 = vpack.c.bf16 %v3734, %v3734
      %v3922 = vpack.c.bf16 %v3736, %v3736
      %v3923 = vpack.c.bf16 %v3739, %v3739
      %v3924 = vpack.c.bf16 %v3741, %v3741
      %v3925 = vpack.c.bf16 %v3744, %v3744
      %v3926 = vpack.c.bf16 %v3746, %v3746
      %v3927 = vpack.c.bf16 %v3749, %v3749
      %v3928 = vpack.c.bf16 %v3751, %v3751
      %v3929 = vpack.c.bf16 %v3754, %v3754
      %v3930 = vpack.c.bf16 %v3756, %v3756
      %v3931 = vpack.c.bf16 %v3759, %v3759
      %v3932 = vpack.c.bf16 %v3761, %v3761
      %v3933 = vpack.c.bf16 %v3764, %v3764
      %v3934 = vpack.c.bf16 %v3766, %v3766
      %v3935 = vpack.c.bf16 %v3769, %v3769
      %v3936 = vpack.c.bf16 %v3771, %v3771
      %v3937 = vpack.c.bf16 %v3774, %v3774
      %v3938 = vpack.c.bf16 %v3776, %v3776
      %v3939 = vpack.c.bf16 %v3779, %v3779
      %v3940 = vpack.c.bf16 %v3781, %v3781
      %v3941 = vpack.c.bf16 %v3784, %v3784
      %v3942 = vpack.c.bf16 %v3786, %v3786
      %v3943 = vpack.c.bf16 %v3789, %v3789
      %v3944 = vpack.c.bf16 %v3791, %v3791
      %v3945 = vpack.c.bf16 %v3794, %v3794
      %v3946 = vpack.c.bf16 %v3796, %v3796
      %v3947 = vpack.c.bf16 %v3820, %v3820
      %v3948 = vpack.c.bf16 %v3822, %v3822
      %v3949 = vpack.c.bf16 %v3825, %v3825
      %v3950 = vpack.c.bf16 %v3827, %v3827
      %v3951 = vpack.c.bf16 %v3830, %v3830
      %v3952 = vpack.c.bf16 %v3832, %v3832
      %v3953 = vpack.c.bf16 %v3835, %v3835
      %v3954 = vpack.c.bf16 %v3837, %v3837
      %v3955 = vpack.c.bf16 %v3840, %v3840
      %v3956 = vpack.c.bf16 %v3842, %v3842
      %v3957 = vpack.c.bf16 %v3845, %v3845
      %v3958 = vpack.c.bf16 %v3847, %v3847
      %v3959 = vpack.c.bf16 %v3850, %v3850
      %v3960 = vpack.c.bf16 %v3852, %v3852
      %v3961 = vpack.c.bf16 %v3855, %v3855
      %v3962 = vpack.c.bf16 %v3857, %v3857
      %v3963 = vpack.c.bf16 %v3860, %v3860
      %v3964 = vpack.c.bf16 %v3862, %v3862
      %v3965 = vpack.c.bf16 %v3865, %v3865
      %v3966 = vpack.c.bf16 %v3867, %v3867
      %v3967 = vpack.c.bf16 %v3870, %v3870
      %v3968 = vpack.c.bf16 %v3872, %v3872
      %v3969 = vpack.c.bf16 %v3875, %v3875
      %v3970 = vpack.c.bf16 %v3877, %v3877
      %v3971 = vpack.c.bf16 %v3880, %v3880
      %v3972 = vpack.c.bf16 %v3882, %v3882
      %v3973 = vpack.c.bf16 %v3885, %v3885
      %v3974 = vpack.c.bf16 %v3887, %v3887
      %v3975 = vpack.c.bf16 %v3890, %v3890
      %v3976 = vpack.c.bf16 %v3892, %v3892
      %v3977 = vpack.c.bf16 %v3895, %v3895
      %v3978 = vpack.c.bf16 %v3897, %v3897
      %v3981 = vunpack.c.l.b16 %v3915
      %v3982 = vunpack.c.l.b16 %v3916
      %v3983 = vpack.c.b16 %v3982, %v3981
      %v3985 = vsel %vm815, %v3899, 0
      %v3988 = vsel %vm815, %v3983, 0
      %3990 = vmatpush.bf16.xpose.msra.mxu0 0
      %3991 = vmatpush.bf16.xpose.msra.mxu0 0
      %3992 = vmatpush.bf16.xpose.msra.mxu0 0
      %3993 = vmatpush.bf16.xpose.msra.mxu0 0
      %3994 = vmatpush.bf16.xpose.msra.mxu0 0
      %3995 = vmatpush.bf16.xpose.msra.mxu0 0
      %3996 = vmatpush.bf16.xpose.msra.mxu0 0
      %3997 = vmatpush.bf16.xpose.msra.mxu0 %v3988
      %3998 = vmatmul.bf16.gmra.mxu0 %v3985
      %v3999 = vpop.f32.mrf.mxu0
      %v4000 = vadd.f32 0.0, %v3999
      %v4001 = vpop.f32.mrf.mxu0
      %4002 = vdwg.mxu0
      %v4005 = vunpack.c.l.b16 %v3917
      %v4006 = vunpack.c.l.b16 %v3918
      %v4007 = vpack.c.b16 %v4006, %v4005
      %v4009 = vsel %vm815, %v3900, 0
      %v4012 = vsel %vm815, %v4007, 0
      %4014 = vmatpush.bf16.xpose.msra.mxu0 0
      %4015 = vmatpush.bf16.xpose.msra.mxu0 0
      %4016 = vmatpush.bf16.xpose.msra.mxu0 0
      %4017 = vmatpush.bf16.xpose.msra.mxu0 0
      %4018 = vmatpush.bf16.xpose.msra.mxu0 0
      %4019 = vmatpush.bf16.xpose.msra.mxu0 0
      %4020 = vmatpush.bf16.xpose.msra.mxu0 0
      %4021 = vmatpush.bf16.xpose.msra.mxu0 %v4012
      %4022 = vmatmul.bf16.gmra.mxu0 %v4009
      %v4023 = vpop.f32.mrf.mxu0
      %v4024 = vadd.f32 0.0, %v4023
      %v4025 = vpop.f32.mrf.mxu0
      %4026 = vdwg.mxu0
      %v4029 = vunpack.c.l.b16 %v3919
      %v4030 = vunpack.c.l.b16 %v3920
      %v4031 = vpack.c.b16 %v4030, %v4029
      %v4033 = vsel %vm815, %v3901, 0
      %v4036 = vsel %vm815, %v4031, 0
      %4038 = vmatpush.bf16.xpose.msra.mxu0 0
      %4039 = vmatpush.bf16.xpose.msra.mxu0 0
      %4040 = vmatpush.bf16.xpose.msra.mxu0 0
      %4041 = vmatpush.bf16.xpose.msra.mxu0 0
      %4042 = vmatpush.bf16.xpose.msra.mxu0 0
      %4043 = vmatpush.bf16.xpose.msra.mxu0 0
      %4044 = vmatpush.bf16.xpose.msra.mxu0 0
      %4045 = vmatpush.bf16.xpose.msra.mxu0 %v4036
      %4046 = vmatmul.bf16.gmra.mxu0 %v4033
      %v4047 = vpop.f32.mrf.mxu0
      %v4048 = vadd.f32 0.0, %v4047
      %v4049 = vpop.f32.mrf.mxu0
      %4050 = vdwg.mxu0
      %v4053 = vunpack.c.l.b16 %v3921
      %v4054 = vunpack.c.l.b16 %v3922
      %v4055 = vpack.c.b16 %v4054, %v4053
      %v4057 = vsel %vm815, %v3902, 0
      %v4060 = vsel %vm815, %v4055, 0
      %4062 = vmatpush.bf16.xpose.msra.mxu0 0
      %4063 = vmatpush.bf16.xpose.msra.mxu0 0
      %4064 = vmatpush.bf16.xpose.msra.mxu0 0
      %4065 = vmatpush.bf16.xpose.msra.mxu0 0
      %4066 = vmatpush.bf16.xpose.msra.mxu0 0
      %4067 = vmatpush.bf16.xpose.msra.mxu0 0
      %4068 = vmatpush.bf16.xpose.msra.mxu0 0
      %4069 = vmatpush.bf16.xpose.msra.mxu0 %v4060
      %4070 = vmatmul.bf16.gmra.mxu0 %v4057
      %v4071 = vpop.f32.mrf.mxu0
      %v4072 = vadd.f32 0.0, %v4071
      %v4073 = vpop.f32.mrf.mxu0
      %4074 = vdwg.mxu0
      %v4077 = vunpack.c.l.b16 %v3923
      %v4078 = vunpack.c.l.b16 %v3924
      %v4079 = vpack.c.b16 %v4078, %v4077
      %v4081 = vsel %vm815, %v3903, 0
      %v4084 = vsel %vm815, %v4079, 0
      %4086 = vmatpush.bf16.xpose.msra.mxu0 0
      %4087 = vmatpush.bf16.xpose.msra.mxu0 0
      %4088 = vmatpush.bf16.xpose.msra.mxu0 0
      %4089 = vmatpush.bf16.xpose.msra.mxu0 0
      %4090 = vmatpush.bf16.xpose.msra.mxu0 0
      %4091 = vmatpush.bf16.xpose.msra.mxu0 0
      %4092 = vmatpush.bf16.xpose.msra.mxu0 0
      %4093 = vmatpush.bf16.xpose.msra.mxu0 %v4084
      %4094 = vmatmul.bf16.gmra.mxu0 %v4081
      %v4095 = vpop.f32.mrf.mxu0
      %v4096 = vadd.f32 0.0, %v4095
      %v4097 = vpop.f32.mrf.mxu0
      %4098 = vdwg.mxu0
      %v4101 = vunpack.c.l.b16 %v3925
      %v4102 = vunpack.c.l.b16 %v3926
      %v4103 = vpack.c.b16 %v4102, %v4101
      %v4105 = vsel %vm815, %v3904, 0
      %v4108 = vsel %vm815, %v4103, 0
      %4110 = vmatpush.bf16.xpose.msra.mxu0 0
      %4111 = vmatpush.bf16.xpose.msra.mxu0 0
      %4112 = vmatpush.bf16.xpose.msra.mxu0 0
      %4113 = vmatpush.bf16.xpose.msra.mxu0 0
      %4114 = vmatpush.bf16.xpose.msra.mxu0 0
      %4115 = vmatpush.bf16.xpose.msra.mxu0 0
      %4116 = vmatpush.bf16.xpose.msra.mxu0 0
      %4117 = vmatpush.bf16.xpose.msra.mxu0 %v4108
      %4118 = vmatmul.bf16.gmra.mxu0 %v4105
      %v4119 = vpop.f32.mrf.mxu0
      %v4120 = vadd.f32 0.0, %v4119
      %v4121 = vpop.f32.mrf.mxu0
      %4122 = vdwg.mxu0
      %v4125 = vunpack.c.l.b16 %v3927
      %v4126 = vunpack.c.l.b16 %v3928
      %v4127 = vpack.c.b16 %v4126, %v4125
      %v4129 = vsel %vm815, %v3905, 0
      %v4132 = vsel %vm815, %v4127, 0
      %4134 = vmatpush.bf16.xpose.msra.mxu0 0
      %4135 = vmatpush.bf16.xpose.msra.mxu0 0
      %4136 = vmatpush.bf16.xpose.msra.mxu0 0
      %4137 = vmatpush.bf16.xpose.msra.mxu0 0
      %4138 = vmatpush.bf16.xpose.msra.mxu0 0
      %4139 = vmatpush.bf16.xpose.msra.mxu0 0
      %4140 = vmatpush.bf16.xpose.msra.mxu0 0
      %4141 = vmatpush.bf16.xpose.msra.mxu0 %v4132
      %4142 = vmatmul.bf16.gmra.mxu0 %v4129
      %v4143 = vpop.f32.mrf.mxu0
      %v4144 = vadd.f32 0.0, %v4143
      %v4145 = vpop.f32.mrf.mxu0
      %4146 = vdwg.mxu0
      %v4149 = vunpack.c.l.b16 %v3929
      %v4150 = vunpack.c.l.b16 %v3930
      %v4151 = vpack.c.b16 %v4150, %v4149
      %v4153 = vsel %vm815, %v3906, 0
      %v4156 = vsel %vm815, %v4151, 0
      %4158 = vmatpush.bf16.xpose.msra.mxu0 0
      %4159 = vmatpush.bf16.xpose.msra.mxu0 0
      %4160 = vmatpush.bf16.xpose.msra.mxu0 0
      %4161 = vmatpush.bf16.xpose.msra.mxu0 0
      %4162 = vmatpush.bf16.xpose.msra.mxu0 0
      %4163 = vmatpush.bf16.xpose.msra.mxu0 0
      %4164 = vmatpush.bf16.xpose.msra.mxu0 0
      %4165 = vmatpush.bf16.xpose.msra.mxu0 %v4156
      %4166 = vmatmul.bf16.gmra.mxu0 %v4153
      %v4167 = vpop.f32.mrf.mxu0
      %v4168 = vadd.f32 0.0, %v4167
      %v4169 = vpop.f32.mrf.mxu0
      %4170 = vdwg.mxu0
      %v4173 = vunpack.c.l.b16 %v3931
      %v4174 = vunpack.c.l.b16 %v3932
      %v4175 = vpack.c.b16 %v4174, %v4173
      %v4177 = vsel %vm815, %v3907, 0
      %v4180 = vsel %vm815, %v4175, 0
      %4182 = vmatpush.bf16.xpose.msra.mxu0 0
      %4183 = vmatpush.bf16.xpose.msra.mxu0 0
      %4184 = vmatpush.bf16.xpose.msra.mxu0 0
      %4185 = vmatpush.bf16.xpose.msra.mxu0 0
      %4186 = vmatpush.bf16.xpose.msra.mxu0 0
      %4187 = vmatpush.bf16.xpose.msra.mxu0 0
      %4188 = vmatpush.bf16.xpose.msra.mxu0 0
      %4189 = vmatpush.bf16.xpose.msra.mxu0 %v4180
      %4190 = vmatmul.bf16.gmra.mxu0 %v4177
      %v4191 = vpop.f32.mrf.mxu0
      %v4192 = vadd.f32 0.0, %v4191
      %v4193 = vpop.f32.mrf.mxu0
      %4194 = vdwg.mxu0
      %v4197 = vunpack.c.l.b16 %v3933
      %v4198 = vunpack.c.l.b16 %v3934
      %v4199 = vpack.c.b16 %v4198, %v4197
      %v4201 = vsel %vm815, %v3908, 0
      %v4204 = vsel %vm815, %v4199, 0
      %4206 = vmatpush.bf16.xpose.msra.mxu0 0
      %4207 = vmatpush.bf16.xpose.msra.mxu0 0
      %4208 = vmatpush.bf16.xpose.msra.mxu0 0
      %4209 = vmatpush.bf16.xpose.msra.mxu0 0
      %4210 = vmatpush.bf16.xpose.msra.mxu0 0
      %4211 = vmatpush.bf16.xpose.msra.mxu0 0
      %4212 = vmatpush.bf16.xpose.msra.mxu0 0
      %4213 = vmatpush.bf16.xpose.msra.mxu0 %v4204
      %4214 = vmatmul.bf16.gmra.mxu0 %v4201
      %v4215 = vpop.f32.mrf.mxu0
      %v4216 = vadd.f32 0.0, %v4215
      %v4217 = vpop.f32.mrf.mxu0
      %4218 = vdwg.mxu0
      %v4221 = vunpack.c.l.b16 %v3935
      %v4222 = vunpack.c.l.b16 %v3936
      %v4223 = vpack.c.b16 %v4222, %v4221
      %v4225 = vsel %vm815, %v3909, 0
      %v4228 = vsel %vm815, %v4223, 0
      %4230 = vmatpush.bf16.xpose.msra.mxu0 0
      %4231 = vmatpush.bf16.xpose.msra.mxu0 0
      %4232 = vmatpush.bf16.xpose.msra.mxu0 0
      %4233 = vmatpush.bf16.xpose.msra.mxu0 0
      %4234 = vmatpush.bf16.xpose.msra.mxu0 0
      %4235 = vmatpush.bf16.xpose.msra.mxu0 0
      %4236 = vmatpush.bf16.xpose.msra.mxu0 0
      %4237 = vmatpush.bf16.xpose.msra.mxu0 %v4228
      %4238 = vmatmul.bf16.gmra.mxu0 %v4225
      %v4239 = vpop.f32.mrf.mxu0
      %v4240 = vadd.f32 0.0, %v4239
      %v4241 = vpop.f32.mrf.mxu0
      %4242 = vdwg.mxu0
      %v4245 = vunpack.c.l.b16 %v3937
      %v4246 = vunpack.c.l.b16 %v3938
      %v4247 = vpack.c.b16 %v4246, %v4245
      %v4249 = vsel %vm815, %v3910, 0
      %v4252 = vsel %vm815, %v4247, 0
      %4254 = vmatpush.bf16.xpose.msra.mxu0 0
      %4255 = vmatpush.bf16.xpose.msra.mxu0 0
      %4256 = vmatpush.bf16.xpose.msra.mxu0 0
      %4257 = vmatpush.bf16.xpose.msra.mxu0 0
      %4258 = vmatpush.bf16.xpose.msra.mxu0 0
      %4259 = vmatpush.bf16.xpose.msra.mxu0 0
      %4260 = vmatpush.bf16.xpose.msra.mxu0 0
      %4261 = vmatpush.bf16.xpose.msra.mxu0 %v4252
      %4262 = vmatmul.bf16.gmra.mxu0 %v4249
      %v4263 = vpop.f32.mrf.mxu0
      %v4264 = vadd.f32 0.0, %v4263
      %v4265 = vpop.f32.mrf.mxu0
      %4266 = vdwg.mxu0
      %v4269 = vunpack.c.l.b16 %v3939
      %v4270 = vunpack.c.l.b16 %v3940
      %v4271 = vpack.c.b16 %v4270, %v4269
      %v4273 = vsel %vm815, %v3911, 0
      %v4276 = vsel %vm815, %v4271, 0
      %4278 = vmatpush.bf16.xpose.msra.mxu0 0
      %4279 = vmatpush.bf16.xpose.msra.mxu0 0
      %4280 = vmatpush.bf16.xpose.msra.mxu0 0
      %4281 = vmatpush.bf16.xpose.msra.mxu0 0
      %4282 = vmatpush.bf16.xpose.msra.mxu0 0
      %4283 = vmatpush.bf16.xpose.msra.mxu0 0
      %4284 = vmatpush.bf16.xpose.msra.mxu0 0
      %4285 = vmatpush.bf16.xpose.msra.mxu0 %v4276
      %4286 = vmatmul.bf16.gmra.mxu0 %v4273
      %v4287 = vpop.f32.mrf.mxu0
      %v4288 = vadd.f32 0.0, %v4287
      %v4289 = vpop.f32.mrf.mxu0
      %4290 = vdwg.mxu0
      %v4293 = vunpack.c.l.b16 %v3941
      %v4294 = vunpack.c.l.b16 %v3942
      %v4295 = vpack.c.b16 %v4294, %v4293
      %v4297 = vsel %vm815, %v3912, 0
      %v4300 = vsel %vm815, %v4295, 0
      %4302 = vmatpush.bf16.xpose.msra.mxu0 0
      %4303 = vmatpush.bf16.xpose.msra.mxu0 0
      %4304 = vmatpush.bf16.xpose.msra.mxu0 0
      %4305 = vmatpush.bf16.xpose.msra.mxu0 0
      %4306 = vmatpush.bf16.xpose.msra.mxu0 0
      %4307 = vmatpush.bf16.xpose.msra.mxu0 0
      %4308 = vmatpush.bf16.xpose.msra.mxu0 0
      %4309 = vmatpush.bf16.xpose.msra.mxu0 %v4300
      %4310 = vmatmul.bf16.gmra.mxu0 %v4297
      %v4311 = vpop.f32.mrf.mxu0
      %v4312 = vadd.f32 0.0, %v4311
      %v4313 = vpop.f32.mrf.mxu0
      %4314 = vdwg.mxu0
      %v4317 = vunpack.c.l.b16 %v3943
      %v4318 = vunpack.c.l.b16 %v3944
      %v4319 = vpack.c.b16 %v4318, %v4317
      %v4321 = vsel %vm815, %v3913, 0
      %v4324 = vsel %vm815, %v4319, 0
      %4326 = vmatpush.bf16.xpose.msra.mxu0 0
      %4327 = vmatpush.bf16.xpose.msra.mxu0 0
      %4328 = vmatpush.bf16.xpose.msra.mxu0 0
      %4329 = vmatpush.bf16.xpose.msra.mxu0 0
      %4330 = vmatpush.bf16.xpose.msra.mxu0 0
      %4331 = vmatpush.bf16.xpose.msra.mxu0 0
      %4332 = vmatpush.bf16.xpose.msra.mxu0 0
      %4333 = vmatpush.bf16.xpose.msra.mxu0 %v4324
      %4334 = vmatmul.bf16.gmra.mxu0 %v4321
      %v4335 = vpop.f32.mrf.mxu0
      %v4336 = vadd.f32 0.0, %v4335
      %v4337 = vpop.f32.mrf.mxu0
      %4338 = vdwg.mxu0
      %v4341 = vunpack.c.l.b16 %v3945
      %v4342 = vunpack.c.l.b16 %v3946
      %v4343 = vpack.c.b16 %v4342, %v4341
      %v4345 = vsel %vm815, %v3914, 0
      %v4348 = vsel %vm815, %v4343, 0
      %4350 = vmatpush.bf16.xpose.msra.mxu0 0
      %4351 = vmatpush.bf16.xpose.msra.mxu0 0
      %4352 = vmatpush.bf16.xpose.msra.mxu0 0
      %4353 = vmatpush.bf16.xpose.msra.mxu0 0
      %4354 = vmatpush.bf16.xpose.msra.mxu0 0
      %4355 = vmatpush.bf16.xpose.msra.mxu0 0
      %4356 = vmatpush.bf16.xpose.msra.mxu0 0
      %4357 = vmatpush.bf16.xpose.msra.mxu0 %v4348
      %4358 = vmatmul.bf16.gmra.mxu0 %v4345
      %v4359 = vpop.f32.mrf.mxu0
      %v4360 = vadd.f32 0.0, %v4359
      %v4361 = vpop.f32.mrf.mxu0
      %4362 = vdwg.mxu0
      %v4363 = vsel %vm815, %v4000, -inf
      %4364 = vmax.xlane.f32.xlu0 %v4363
      %v4365 = vpop.xlane.xlu0 %4364
      %v4366 = vsel %vm815, %v4024, -inf
      %4367 = vmax.xlane.f32.xlu0 %v4366
      %v4368 = vpop.xlane.xlu0 %4367
      %v4369 = vsel %vm815, %v4048, -inf
      %4370 = vmax.xlane.f32.xlu0 %v4369
      %v4371 = vpop.xlane.xlu0 %4370
      %v4372 = vsel %vm815, %v4072, -inf
      %4373 = vmax.xlane.f32.xlu0 %v4372
      %v4374 = vpop.xlane.xlu0 %4373
      %v4375 = vsel %vm815, %v4096, -inf
      %4376 = vmax.xlane.f32.xlu0 %v4375
      %v4377 = vpop.xlane.xlu0 %4376
      %v4378 = vsel %vm815, %v4120, -inf
      %4379 = vmax.xlane.f32.xlu0 %v4378
      %v4380 = vpop.xlane.xlu0 %4379
      %v4381 = vsel %vm815, %v4144, -inf
      %4382 = vmax.xlane.f32.xlu0 %v4381
      %v4383 = vpop.xlane.xlu0 %4382
      %v4384 = vsel %vm815, %v4168, -inf
      %4385 = vmax.xlane.f32.xlu0 %v4384
      %v4386 = vpop.xlane.xlu0 %4385
      %v4387 = vsel %vm815, %v4192, -inf
      %4388 = vmax.xlane.f32.xlu0 %v4387
      %v4389 = vpop.xlane.xlu0 %4388
      %v4390 = vsel %vm815, %v4216, -inf
      %4391 = vmax.xlane.f32.xlu0 %v4390
      %v4392 = vpop.xlane.xlu0 %4391
      %v4393 = vsel %vm815, %v4240, -inf
      %4394 = vmax.xlane.f32.xlu0 %v4393
      %v4395 = vpop.xlane.xlu0 %4394
      %v4396 = vsel %vm815, %v4264, -inf
      %4397 = vmax.xlane.f32.xlu0 %v4396
      %v4398 = vpop.xlane.xlu0 %4397
      %v4399 = vsel %vm815, %v4288, -inf
      %4400 = vmax.xlane.f32.xlu0 %v4399
      %v4401 = vpop.xlane.xlu0 %4400
      %v4402 = vsel %vm815, %v4312, -inf
      %4403 = vmax.xlane.f32.xlu0 %v4402
      %v4404 = vpop.xlane.xlu0 %4403
      %v4405 = vsel %vm815, %v4336, -inf
      %4406 = vmax.xlane.f32.xlu0 %v4405
      %v4407 = vpop.xlane.xlu0 %4406
      %v4408 = vsel %vm815, %v4360, -inf
      %4409 = vmax.xlane.f32.xlu0 %v4408
      %v4410 = vpop.xlane.xlu0 %4409
      %v4411 = vsub.f32 %v4000, %v4365
      %v4412 = vsub.f32 %v4024, %v4368
      %v4413 = vsub.f32 %v4048, %v4371
      %v4414 = vsub.f32 %v4072, %v4374
      %v4415 = vsub.f32 %v4096, %v4377
      %v4416 = vsub.f32 %v4120, %v4380
      %v4417 = vsub.f32 %v4144, %v4383
      %v4418 = vsub.f32 %v4168, %v4386
      %v4419 = vsub.f32 %v4192, %v4389
      %v4420 = vsub.f32 %v4216, %v4392
      %v4421 = vsub.f32 %v4240, %v4395
      %v4422 = vsub.f32 %v4264, %v4398
      %v4423 = vsub.f32 %v4288, %v4401
      %v4424 = vsub.f32 %v4312, %v4404
      %v4425 = vsub.f32 %v4336, %v4407
      %v4426 = vsub.f32 %v4360, %v4410
      %v4427 = vmul.f32 %v4411, 1.442695
      %v4428 = vpow.pop %v4427
      %v4429 = vmul.f32 %v4412, 1.442695
      %v4430 = vpow.pop %v4429
      %v4431 = vmul.f32 %v4413, 1.442695
      %v4432 = vpow.pop %v4431
      %v4433 = vmul.f32 %v4414, 1.442695
      %v4434 = vpow.pop %v4433
      %v4435 = vmul.f32 %v4415, 1.442695
      %v4436 = vpow.pop %v4435
      %v4437 = vmul.f32 %v4416, 1.442695
      %v4438 = vpow.pop %v4437
      %v4439 = vmul.f32 %v4417, 1.442695
      %v4440 = vpow.pop %v4439
      %v4441 = vmul.f32 %v4418, 1.442695
      %v4442 = vpow.pop %v4441
      %v4443 = vmul.f32 %v4419, 1.442695
      %v4444 = vpow.pop %v4443
      %v4445 = vmul.f32 %v4420, 1.442695
      %v4446 = vpow.pop %v4445
      %v4447 = vmul.f32 %v4421, 1.442695
      %v4448 = vpow.pop %v4447
      %v4449 = vmul.f32 %v4422, 1.442695
      %v4450 = vpow.pop %v4449
      %v4451 = vmul.f32 %v4423, 1.442695
      %v4452 = vpow.pop %v4451
      %v4453 = vmul.f32 %v4424, 1.442695
      %v4454 = vpow.pop %v4453
      %v4455 = vmul.f32 %v4425, 1.442695
      %v4456 = vpow.pop %v4455
      %v4457 = vmul.f32 %v4426, 1.442695
      %v4458 = vpow.pop %v4457
      %v4459 = vsel %vm815, %v4428, 0.0
      %4460 = vadd.xlane.f32.xlu0 %v4459
      %v4461 = vpop.xlane.xlu0 %4460
      %v4462 = vsel %vm815, %v4430, 0.0
      %4463 = vadd.xlane.f32.xlu0 %v4462
      %v4464 = vpop.xlane.xlu0 %4463
      %v4465 = vsel %vm815, %v4432, 0.0
      %4466 = vadd.xlane.f32.xlu0 %v4465
      %v4467 = vpop.xlane.xlu0 %4466
      %v4468 = vsel %vm815, %v4434, 0.0
      %4469 = vadd.xlane.f32.xlu0 %v4468
      %v4470 = vpop.xlane.xlu0 %4469
      %v4471 = vsel %vm815, %v4436, 0.0
      %4472 = vadd.xlane.f32.xlu0 %v4471
      %v4473 = vpop.xlane.xlu0 %4472
      %v4474 = vsel %vm815, %v4438, 0.0
      %4475 = vadd.xlane.f32.xlu0 %v4474
      %v4476 = vpop.xlane.xlu0 %4475
      %v4477 = vsel %vm815, %v4440, 0.0
      %4478 = vadd.xlane.f32.xlu0 %v4477
      %v4479 = vpop.xlane.xlu0 %4478
      %v4480 = vsel %vm815, %v4442, 0.0
      %4481 = vadd.xlane.f32.xlu0 %v4480
      %v4482 = vpop.xlane.xlu0 %4481
      %v4483 = vsel %vm815, %v4444, 0.0
      %4484 = vadd.xlane.f32.xlu0 %v4483
      %v4485 = vpop.xlane.xlu0 %4484
      %v4486 = vsel %vm815, %v4446, 0.0
      %4487 = vadd.xlane.f32.xlu0 %v4486
      %v4488 = vpop.xlane.xlu0 %4487
      %v4489 = vsel %vm815, %v4448, 0.0
      %4490 = vadd.xlane.f32.xlu0 %v4489
      %v4491 = vpop.xlane.xlu0 %4490
      %v4492 = vsel %vm815, %v4450, 0.0
      %4493 = vadd.xlane.f32.xlu0 %v4492
      %v4494 = vpop.xlane.xlu0 %4493
      %v4495 = vsel %vm815, %v4452, 0.0
      %4496 = vadd.xlane.f32.xlu0 %v4495
      %v4497 = vpop.xlane.xlu0 %4496
      %v4498 = vsel %vm815, %v4454, 0.0
      %4499 = vadd.xlane.f32.xlu0 %v4498
      %v4500 = vpop.xlane.xlu0 %4499
      %v4501 = vsel %vm815, %v4456, 0.0
      %4502 = vadd.xlane.f32.xlu0 %v4501
      %v4503 = vpop.xlane.xlu0 %4502
      %v4504 = vsel %vm815, %v4458, 0.0
      %4505 = vadd.xlane.f32.xlu0 %v4504
      %v4506 = vpop.xlane.xlu0 %4505
      %v4507 = vrcp.pop %v4461
      %v4508 = vmul.f32 %v4461, %v4507
      %v4509 = vsub.f32 1.0, %v4508
      %v4510 = vmul.f32 %v4507, %v4509
      %v4511 = vadd.f32 %v4507, %v4510
      %vm4512 = vweird.f32 %v4461
      %vm4513 = vweird.f32 %v4507
      %vm4514 = vmor %vm4512, %vm4513
      %v4515 = vsel %vm4514, %v4507, %v4511
      %v4516 = vand.u32 2147483647, %v4461
      %vm4517 = vcmp.eq.f32.partialorder %v4516, 8.507059e+37
      %v4518 = vand.u32 %v4461, 2147483648
      %v4519 = vor.u32 1.1754944e-38, %v4518
      %v4520 = vsel %vm4517, %v4519, %v4515
      %v4521 = vrcp.pop %v4464
      %v4522 = vmul.f32 %v4464, %v4521
      %v4523 = vsub.f32 1.0, %v4522
      %v4524 = vmul.f32 %v4521, %v4523
      %v4525 = vadd.f32 %v4521, %v4524
      %vm4526 = vweird.f32 %v4464
      %vm4527 = vweird.f32 %v4521
      %vm4528 = vmor %vm4526, %vm4527
      %v4529 = vsel %vm4528, %v4521, %v4525
      %v4530 = vand.u32 2147483647, %v4464
      %vm4531 = vcmp.eq.f32.partialorder %v4530, 8.507059e+37
      %v4532 = vand.u32 %v4464, 2147483648
      %v4533 = vor.u32 1.1754944e-38, %v4532
      %v4534 = vsel %vm4531, %v4533, %v4529
      %v4535 = vrcp.pop %v4467
      %v4536 = vmul.f32 %v4467, %v4535
      %v4537 = vsub.f32 1.0, %v4536
      %v4538 = vmul.f32 %v4535, %v4537
      %v4539 = vadd.f32 %v4535, %v4538
      %vm4540 = vweird.f32 %v4467
      %vm4541 = vweird.f32 %v4535
      %vm4542 = vmor %vm4540, %vm4541
      %v4543 = vsel %vm4542, %v4535, %v4539
      %v4544 = vand.u32 2147483647, %v4467
      %vm4545 = vcmp.eq.f32.partialorder %v4544, 8.507059e+37
      %v4546 = vand.u32 %v4467, 2147483648
      %v4547 = vor.u32 1.1754944e-38, %v4546
      %v4548 = vsel %vm4545, %v4547, %v4543
      %v4549 = vrcp.pop %v4470
      %v4550 = vmul.f32 %v4470, %v4549
      %v4551 = vsub.f32 1.0, %v4550
      %v4552 = vmul.f32 %v4549, %v4551
      %v4553 = vadd.f32 %v4549, %v4552
      %vm4554 = vweird.f32 %v4470
      %vm4555 = vweird.f32 %v4549
      %vm4556 = vmor %vm4554, %vm4555
      %v4557 = vsel %vm4556, %v4549, %v4553
      %v4558 = vand.u32 2147483647, %v4470
      %vm4559 = vcmp.eq.f32.partialorder %v4558, 8.507059e+37
      %v4560 = vand.u32 %v4470, 2147483648
      %v4561 = vor.u32 1.1754944e-38, %v4560
      %v4562 = vsel %vm4559, %v4561, %v4557
      %v4563 = vrcp.pop %v4473
      %v4564 = vmul.f32 %v4473, %v4563
      %v4565 = vsub.f32 1.0, %v4564
      %v4566 = vmul.f32 %v4563, %v4565
      %v4567 = vadd.f32 %v4563, %v4566
      %vm4568 = vweird.f32 %v4473
      %vm4569 = vweird.f32 %v4563
      %vm4570 = vmor %vm4568, %vm4569
      %v4571 = vsel %vm4570, %v4563, %v4567
      %v4572 = vand.u32 2147483647, %v4473
      %vm4573 = vcmp.eq.f32.partialorder %v4572, 8.507059e+37
      %v4574 = vand.u32 %v4473, 2147483648
      %v4575 = vor.u32 1.1754944e-38, %v4574
      %v4576 = vsel %vm4573, %v4575, %v4571
      %v4577 = vrcp.pop %v4476
      %v4578 = vmul.f32 %v4476, %v4577
      %v4579 = vsub.f32 1.0, %v4578
      %v4580 = vmul.f32 %v4577, %v4579
      %v4581 = vadd.f32 %v4577, %v4580
      %vm4582 = vweird.f32 %v4476
      %vm4583 = vweird.f32 %v4577
      %vm4584 = vmor %vm4582, %vm4583
      %v4585 = vsel %vm4584, %v4577, %v4581
      %v4586 = vand.u32 2147483647, %v4476
      %vm4587 = vcmp.eq.f32.partialorder %v4586, 8.507059e+37
      %v4588 = vand.u32 %v4476, 2147483648
      %v4589 = vor.u32 1.1754944e-38, %v4588
      %v4590 = vsel %vm4587, %v4589, %v4585
      %v4591 = vrcp.pop %v4479
      %v4592 = vmul.f32 %v4479, %v4591
      %v4593 = vsub.f32 1.0, %v4592
      %v4594 = vmul.f32 %v4591, %v4593
      %v4595 = vadd.f32 %v4591, %v4594
      %vm4596 = vweird.f32 %v4479
      %vm4597 = vweird.f32 %v4591
      %vm4598 = vmor %vm4596, %vm4597
      %v4599 = vsel %vm4598, %v4591, %v4595
      %v4600 = vand.u32 2147483647, %v4479
      %vm4601 = vcmp.eq.f32.partialorder %v4600, 8.507059e+37
      %v4602 = vand.u32 %v4479, 2147483648
      %v4603 = vor.u32 1.1754944e-38, %v4602
      %v4604 = vsel %vm4601, %v4603, %v4599
      %v4605 = vrcp.pop %v4482
      %v4606 = vmul.f32 %v4482, %v4605
      %v4607 = vsub.f32 1.0, %v4606
      %v4608 = vmul.f32 %v4605, %v4607
      %v4609 = vadd.f32 %v4605, %v4608
      %vm4610 = vweird.f32 %v4482
      %vm4611 = vweird.f32 %v4605
      %vm4612 = vmor %vm4610, %vm4611
      %v4613 = vsel %vm4612, %v4605, %v4609
      %v4614 = vand.u32 2147483647, %v4482
      %vm4615 = vcmp.eq.f32.partialorder %v4614, 8.507059e+37
      %v4616 = vand.u32 %v4482, 2147483648
      %v4617 = vor.u32 1.1754944e-38, %v4616
      %v4618 = vsel %vm4615, %v4617, %v4613
      %v4619 = vrcp.pop %v4485
      %v4620 = vmul.f32 %v4485, %v4619
      %v4621 = vsub.f32 1.0, %v4620
      %v4622 = vmul.f32 %v4619, %v4621
      %v4623 = vadd.f32 %v4619, %v4622
      %vm4624 = vweird.f32 %v4485
      %vm4625 = vweird.f32 %v4619
      %vm4626 = vmor %vm4624, %vm4625
      %v4627 = vsel %vm4626, %v4619, %v4623
      %v4628 = vand.u32 2147483647, %v4485
      %vm4629 = vcmp.eq.f32.partialorder %v4628, 8.507059e+37
      %v4630 = vand.u32 %v4485, 2147483648
      %v4631 = vor.u32 1.1754944e-38, %v4630
      %v4632 = vsel %vm4629, %v4631, %v4627
      %v4633 = vrcp.pop %v4488
      %v4634 = vmul.f32 %v4488, %v4633
      %v4635 = vsub.f32 1.0, %v4634
      %v4636 = vmul.f32 %v4633, %v4635
      %v4637 = vadd.f32 %v4633, %v4636
      %vm4638 = vweird.f32 %v4488
      %vm4639 = vweird.f32 %v4633
      %vm4640 = vmor %vm4638, %vm4639
      %v4641 = vsel %vm4640, %v4633, %v4637
      %v4642 = vand.u32 2147483647, %v4488
      %vm4643 = vcmp.eq.f32.partialorder %v4642, 8.507059e+37
      %v4644 = vand.u32 %v4488, 2147483648
      %v4645 = vor.u32 1.1754944e-38, %v4644
      %v4646 = vsel %vm4643, %v4645, %v4641
      %v4647 = vrcp.pop %v4491
      %v4648 = vmul.f32 %v4491, %v4647
      %v4649 = vsub.f32 1.0, %v4648
      %v4650 = vmul.f32 %v4647, %v4649
      %v4651 = vadd.f32 %v4647, %v4650
      %vm4652 = vweird.f32 %v4491
      %vm4653 = vweird.f32 %v4647
      %vm4654 = vmor %vm4652, %vm4653
      %v4655 = vsel %vm4654, %v4647, %v4651
      %v4656 = vand.u32 2147483647, %v4491
      %vm4657 = vcmp.eq.f32.partialorder %v4656, 8.507059e+37
      %v4658 = vand.u32 %v4491, 2147483648
      %v4659 = vor.u32 1.1754944e-38, %v4658
      %v4660 = vsel %vm4657, %v4659, %v4655
      %v4661 = vrcp.pop %v4494
      %v4662 = vmul.f32 %v4494, %v4661
      %v4663 = vsub.f32 1.0, %v4662
      %v4664 = vmul.f32 %v4661, %v4663
      %v4665 = vadd.f32 %v4661, %v4664
      %vm4666 = vweird.f32 %v4494
      %vm4667 = vweird.f32 %v4661
      %vm4668 = vmor %vm4666, %vm4667
      %v4669 = vsel %vm4668, %v4661, %v4665
      %v4670 = vand.u32 2147483647, %v4494
      %vm4671 = vcmp.eq.f32.partialorder %v4670, 8.507059e+37
      %v4672 = vand.u32 %v4494, 2147483648
      %v4673 = vor.u32 1.1754944e-38, %v4672
      %v4674 = vsel %vm4671, %v4673, %v4669
      %v4675 = vrcp.pop %v4497
      %v4676 = vmul.f32 %v4497, %v4675
      %v4677 = vsub.f32 1.0, %v4676
      %v4678 = vmul.f32 %v4675, %v4677
      %v4679 = vadd.f32 %v4675, %v4678
      %vm4680 = vweird.f32 %v4497
      %vm4681 = vweird.f32 %v4675
      %vm4682 = vmor %vm4680, %vm4681
      %v4683 = vsel %vm4682, %v4675, %v4679
      %v4684 = vand.u32 2147483647, %v4497
      %vm4685 = vcmp.eq.f32.partialorder %v4684, 8.507059e+37
      %v4686 = vand.u32 %v4497, 2147483648
      %v4687 = vor.u32 1.1754944e-38, %v4686
      %v4688 = vsel %vm4685, %v4687, %v4683
      %v4689 = vrcp.pop %v4500
      %v4690 = vmul.f32 %v4500, %v4689
      %v4691 = vsub.f32 1.0, %v4690
      %v4692 = vmul.f32 %v4689, %v4691
      %v4693 = vadd.f32 %v4689, %v4692
      %vm4694 = vweird.f32 %v4500
      %vm4695 = vweird.f32 %v4689
      %vm4696 = vmor %vm4694, %vm4695
      %v4697 = vsel %vm4696, %v4689, %v4693
      %v4698 = vand.u32 2147483647, %v4500
      %vm4699 = vcmp.eq.f32.partialorder %v4698, 8.507059e+37
      %v4700 = vand.u32 %v4500, 2147483648
      %v4701 = vor.u32 1.1754944e-38, %v4700
      %v4702 = vsel %vm4699, %v4701, %v4697
      %v4703 = vrcp.pop %v4503
      %v4704 = vmul.f32 %v4503, %v4703
      %v4705 = vsub.f32 1.0, %v4704
      %v4706 = vmul.f32 %v4703, %v4705
      %v4707 = vadd.f32 %v4703, %v4706
      %vm4708 = vweird.f32 %v4503
      %vm4709 = vweird.f32 %v4703
      %vm4710 = vmor %vm4708, %vm4709
      %v4711 = vsel %vm4710, %v4703, %v4707
      %v4712 = vand.u32 2147483647, %v4503
      %vm4713 = vcmp.eq.f32.partialorder %v4712, 8.507059e+37
      %v4714 = vand.u32 %v4503, 2147483648
      %v4715 = vor.u32 1.1754944e-38, %v4714
      %v4716 = vsel %vm4713, %v4715, %v4711
      %v4717 = vrcp.pop %v4506
      %v4718 = vmul.f32 %v4506, %v4717
      %v4719 = vsub.f32 1.0, %v4718
      %v4720 = vmul.f32 %v4717, %v4719
      %v4721 = vadd.f32 %v4717, %v4720
      %vm4722 = vweird.f32 %v4506
      %vm4723 = vweird.f32 %v4717
      %vm4724 = vmor %vm4722, %vm4723
      %v4725 = vsel %vm4724, %v4717, %v4721
      %v4726 = vand.u32 2147483647, %v4506
      %vm4727 = vcmp.eq.f32.partialorder %v4726, 8.507059e+37
      %v4728 = vand.u32 %v4506, 2147483648
      %v4729 = vor.u32 1.1754944e-38, %v4728
      %v4730 = vsel %vm4727, %v4729, %v4725
      %v4731 = vmul.f32 %v4428, %v4520
      %v4732 = vmul.f32 %v4430, %v4534
      %v4733 = vmul.f32 %v4432, %v4548
      %v4734 = vmul.f32 %v4434, %v4562
      %v4735 = vmul.f32 %v4436, %v4576
      %v4736 = vmul.f32 %v4438, %v4590
      %v4737 = vmul.f32 %v4440, %v4604
      %v4738 = vmul.f32 %v4442, %v4618
      %v4739 = vmul.f32 %v4444, %v4632
      %v4740 = vmul.f32 %v4446, %v4646
      %v4741 = vmul.f32 %v4448, %v4660
      %v4742 = vmul.f32 %v4450, %v4674
      %v4743 = vmul.f32 %v4452, %v4688
      %v4744 = vmul.f32 %v4454, %v4702
      %v4745 = vmul.f32 %v4456, %v4716
      %v4746 = vmul.f32 %v4458, %v4730
      %v4747 = vpack.c.bf16 %v4731, %v4731
      %v4748 = vpack.c.bf16 %v4732, %v4732
      %v4749 = vpack.c.bf16 %v4733, %v4733
      %v4750 = vpack.c.bf16 %v4734, %v4734
      %v4751 = vpack.c.bf16 %v4735, %v4735
      %v4752 = vpack.c.bf16 %v4736, %v4736
      %v4753 = vpack.c.bf16 %v4737, %v4737
      %v4754 = vpack.c.bf16 %v4738, %v4738
      %v4755 = vpack.c.bf16 %v4739, %v4739
      %v4756 = vpack.c.bf16 %v4740, %v4740
      %v4757 = vpack.c.bf16 %v4741, %v4741
      %v4758 = vpack.c.bf16 %v4742, %v4742
      %v4759 = vpack.c.bf16 %v4743, %v4743
      %v4760 = vpack.c.bf16 %v4744, %v4744
      %v4761 = vpack.c.bf16 %v4745, %v4745
      %v4762 = vpack.c.bf16 %v4746, %v4746
      %v4765 = vunpack.c.l.b16 %v3947
      %v4766 = vunpack.c.l.b16 %v3948
      %v4767 = vpack.c.b16 %v4766, %v4765
      %v4770 = vsel %vm815, %v4747, 0
      %4772 = vmatpush.bf16.msra.mxu0 0
      %4773 = vmatpush.bf16.msra.mxu0 0
      %4774 = vmatpush.bf16.msra.mxu0 0
      %4775 = vmatpush.bf16.msra.mxu0 0
      %4776 = vmatpush.bf16.msra.mxu0 0
      %4777 = vmatpush.bf16.msra.mxu0 0
      %4778 = vmatpush.bf16.msra.mxu0 0
      %4779 = vmatpush.bf16.msra.mxu0 %v4767
      %4780 = vmatmul.bf16.gmra.mxu0 %v4770
      %v4781 = vpop.f32.mrf.mxu0
      %v4782 = vadd.f32 0.0, %v4781
      %v4783 = vpop.f32.mrf.mxu0
      %4784 = vdwg.mxu0
      %v4787 = vunpack.c.l.b16 %v3949
      %v4788 = vunpack.c.l.b16 %v3950
      %v4789 = vpack.c.b16 %v4788, %v4787
      %v4792 = vsel %vm815, %v4748, 0
      %4794 = vmatpush.bf16.msra.mxu0 0
      %4795 = vmatpush.bf16.msra.mxu0 0
      %4796 = vmatpush.bf16.msra.mxu0 0
      %4797 = vmatpush.bf16.msra.mxu0 0
      %4798 = vmatpush.bf16.msra.mxu0 0
      %4799 = vmatpush.bf16.msra.mxu0 0
      %4800 = vmatpush.bf16.msra.mxu0 0
      %4801 = vmatpush.bf16.msra.mxu0 %v4789
      %4802 = vmatmul.bf16.gmra.mxu0 %v4792
      %v4803 = vpop.f32.mrf.mxu0
      %v4804 = vadd.f32 0.0, %v4803
      %v4805 = vpop.f32.mrf.mxu0
      %4806 = vdwg.mxu0
      %v4809 = vunpack.c.l.b16 %v3951
      %v4810 = vunpack.c.l.b16 %v3952
      %v4811 = vpack.c.b16 %v4810, %v4809
      %v4814 = vsel %vm815, %v4749, 0
      %4816 = vmatpush.bf16.msra.mxu0 0
      %4817 = vmatpush.bf16.msra.mxu0 0
      %4818 = vmatpush.bf16.msra.mxu0 0
      %4819 = vmatpush.bf16.msra.mxu0 0
      %4820 = vmatpush.bf16.msra.mxu0 0
      %4821 = vmatpush.bf16.msra.mxu0 0
      %4822 = vmatpush.bf16.msra.mxu0 0
      %4823 = vmatpush.bf16.msra.mxu0 %v4811
      %4824 = vmatmul.bf16.gmra.mxu0 %v4814
      %v4825 = vpop.f32.mrf.mxu0
      %v4826 = vadd.f32 0.0, %v4825
      %v4827 = vpop.f32.mrf.mxu0
      %4828 = vdwg.mxu0
      %v4831 = vunpack.c.l.b16 %v3953
      %v4832 = vunpack.c.l.b16 %v3954
      %v4833 = vpack.c.b16 %v4832, %v4831
      %v4836 = vsel %vm815, %v4750, 0
      %4838 = vmatpush.bf16.msra.mxu0 0
      %4839 = vmatpush.bf16.msra.mxu0 0
      %4840 = vmatpush.bf16.msra.mxu0 0
      %4841 = vmatpush.bf16.msra.mxu0 0
      %4842 = vmatpush.bf16.msra.mxu0 0
      %4843 = vmatpush.bf16.msra.mxu0 0
      %4844 = vmatpush.bf16.msra.mxu0 0
      %4845 = vmatpush.bf16.msra.mxu0 %v4833
      %4846 = vmatmul.bf16.gmra.mxu0 %v4836
      %v4847 = vpop.f32.mrf.mxu0
      %v4848 = vadd.f32 0.0, %v4847
      %v4849 = vpop.f32.mrf.mxu0
      %4850 = vdwg.mxu0
      %v4853 = vunpack.c.l.b16 %v3955
      %v4854 = vunpack.c.l.b16 %v3956
      %v4855 = vpack.c.b16 %v4854, %v4853
      %v4858 = vsel %vm815, %v4751, 0
      %4860 = vmatpush.bf16.msra.mxu0 0
      %4861 = vmatpush.bf16.msra.mxu0 0
      %4862 = vmatpush.bf16.msra.mxu0 0
      %4863 = vmatpush.bf16.msra.mxu0 0
      %4864 = vmatpush.bf16.msra.mxu0 0
      %4865 = vmatpush.bf16.msra.mxu0 0
      %4866 = vmatpush.bf16.msra.mxu0 0
      %4867 = vmatpush.bf16.msra.mxu0 %v4855
      %4868 = vmatmul.bf16.gmra.mxu0 %v4858
      %v4869 = vpop.f32.mrf.mxu0
      %v4870 = vadd.f32 0.0, %v4869
      %v4871 = vpop.f32.mrf.mxu0
      %4872 = vdwg.mxu0
      %v4875 = vunpack.c.l.b16 %v3957
      %v4876 = vunpack.c.l.b16 %v3958
      %v4877 = vpack.c.b16 %v4876, %v4875
      %v4880 = vsel %vm815, %v4752, 0
      %4882 = vmatpush.bf16.msra.mxu0 0
      %4883 = vmatpush.bf16.msra.mxu0 0
      %4884 = vmatpush.bf16.msra.mxu0 0
      %4885 = vmatpush.bf16.msra.mxu0 0
      %4886 = vmatpush.bf16.msra.mxu0 0
      %4887 = vmatpush.bf16.msra.mxu0 0
      %4888 = vmatpush.bf16.msra.mxu0 0
      %4889 = vmatpush.bf16.msra.mxu0 %v4877
      %4890 = vmatmul.bf16.gmra.mxu0 %v4880
      %v4891 = vpop.f32.mrf.mxu0
      %v4892 = vadd.f32 0.0, %v4891
      %v4893 = vpop.f32.mrf.mxu0
      %4894 = vdwg.mxu0
      %v4897 = vunpack.c.l.b16 %v3959
      %v4898 = vunpack.c.l.b16 %v3960
      %v4899 = vpack.c.b16 %v4898, %v4897
      %v4902 = vsel %vm815, %v4753, 0
      %4904 = vmatpush.bf16.msra.mxu0 0
      %4905 = vmatpush.bf16.msra.mxu0 0
      %4906 = vmatpush.bf16.msra.mxu0 0
      %4907 = vmatpush.bf16.msra.mxu0 0
      %4908 = vmatpush.bf16.msra.mxu0 0
      %4909 = vmatpush.bf16.msra.mxu0 0
      %4910 = vmatpush.bf16.msra.mxu0 0
      %4911 = vmatpush.bf16.msra.mxu0 %v4899
      %4912 = vmatmul.bf16.gmra.mxu0 %v4902
      %v4913 = vpop.f32.mrf.mxu0
      %v4914 = vadd.f32 0.0, %v4913
      %v4915 = vpop.f32.mrf.mxu0
      %4916 = vdwg.mxu0
      %v4919 = vunpack.c.l.b16 %v3961
      %v4920 = vunpack.c.l.b16 %v3962
      %v4921 = vpack.c.b16 %v4920, %v4919
      %v4924 = vsel %vm815, %v4754, 0
      %4926 = vmatpush.bf16.msra.mxu0 0
      %4927 = vmatpush.bf16.msra.mxu0 0
      %4928 = vmatpush.bf16.msra.mxu0 0
      %4929 = vmatpush.bf16.msra.mxu0 0
      %4930 = vmatpush.bf16.msra.mxu0 0
      %4931 = vmatpush.bf16.msra.mxu0 0
      %4932 = vmatpush.bf16.msra.mxu0 0
      %4933 = vmatpush.bf16.msra.mxu0 %v4921
      %4934 = vmatmul.bf16.gmra.mxu0 %v4924
      %v4935 = vpop.f32.mrf.mxu0
      %v4936 = vadd.f32 0.0, %v4935
      %v4937 = vpop.f32.mrf.mxu0
      %4938 = vdwg.mxu0
      %v4941 = vunpack.c.l.b16 %v3963
      %v4942 = vunpack.c.l.b16 %v3964
      %v4943 = vpack.c.b16 %v4942, %v4941
      %v4946 = vsel %vm815, %v4755, 0
      %4948 = vmatpush.bf16.msra.mxu0 0
      %4949 = vmatpush.bf16.msra.mxu0 0
      %4950 = vmatpush.bf16.msra.mxu0 0
      %4951 = vmatpush.bf16.msra.mxu0 0
      %4952 = vmatpush.bf16.msra.mxu0 0
      %4953 = vmatpush.bf16.msra.mxu0 0
      %4954 = vmatpush.bf16.msra.mxu0 0
      %4955 = vmatpush.bf16.msra.mxu0 %v4943
      %4956 = vmatmul.bf16.gmra.mxu0 %v4946
      %v4957 = vpop.f32.mrf.mxu0
      %v4958 = vadd.f32 0.0, %v4957
      %v4959 = vpop.f32.mrf.mxu0
      %4960 = vdwg.mxu0
      %v4963 = vunpack.c.l.b16 %v3965
      %v4964 = vunpack.c.l.b16 %v3966
      %v4965 = vpack.c.b16 %v4964, %v4963
      %v4968 = vsel %vm815, %v4756, 0
      %4970 = vmatpush.bf16.msra.mxu0 0
      %4971 = vmatpush.bf16.msra.mxu0 0
      %4972 = vmatpush.bf16.msra.mxu0 0
      %4973 = vmatpush.bf16.msra.mxu0 0
      %4974 = vmatpush.bf16.msra.mxu0 0
      %4975 = vmatpush.bf16.msra.mxu0 0
      %4976 = vmatpush.bf16.msra.mxu0 0
      %4977 = vmatpush.bf16.msra.mxu0 %v4965
      %4978 = vmatmul.bf16.gmra.mxu0 %v4968
      %v4979 = vpop.f32.mrf.mxu0
      %v4980 = vadd.f32 0.0, %v4979
      %v4981 = vpop.f32.mrf.mxu0
      %4982 = vdwg.mxu0
      %v4985 = vunpack.c.l.b16 %v3967
      %v4986 = vunpack.c.l.b16 %v3968
      %v4987 = vpack.c.b16 %v4986, %v4985
      %v4990 = vsel %vm815, %v4757, 0
      %4992 = vmatpush.bf16.msra.mxu0 0
      %4993 = vmatpush.bf16.msra.mxu0 0
      %4994 = vmatpush.bf16.msra.mxu0 0
      %4995 = vmatpush.bf16.msra.mxu0 0
      %4996 = vmatpush.bf16.msra.mxu0 0
      %4997 = vmatpush.bf16.msra.mxu0 0
      %4998 = vmatpush.bf16.msra.mxu0 0
      %4999 = vmatpush.bf16.msra.mxu0 %v4987
      %5000 = vmatmul.bf16.gmra.mxu0 %v4990
      %v5001 = vpop.f32.mrf.mxu0
      %v5002 = vadd.f32 0.0, %v5001
      %v5003 = vpop.f32.mrf.mxu0
      %5004 = vdwg.mxu0
      %v5007 = vunpack.c.l.b16 %v3969
      %v5008 = vunpack.c.l.b16 %v3970
      %v5009 = vpack.c.b16 %v5008, %v5007
      %v5012 = vsel %vm815, %v4758, 0
      %5014 = vmatpush.bf16.msra.mxu0 0
      %5015 = vmatpush.bf16.msra.mxu0 0
      %5016 = vmatpush.bf16.msra.mxu0 0
      %5017 = vmatpush.bf16.msra.mxu0 0
      %5018 = vmatpush.bf16.msra.mxu0 0
      %5019 = vmatpush.bf16.msra.mxu0 0
      %5020 = vmatpush.bf16.msra.mxu0 0
      %5021 = vmatpush.bf16.msra.mxu0 %v5009
      %5022 = vmatmul.bf16.gmra.mxu0 %v5012
      %v5023 = vpop.f32.mrf.mxu0
      %v5024 = vadd.f32 0.0, %v5023
      %v5025 = vpop.f32.mrf.mxu0
      %5026 = vdwg.mxu0
      %v5029 = vunpack.c.l.b16 %v3971
      %v5030 = vunpack.c.l.b16 %v3972
      %v5031 = vpack.c.b16 %v5030, %v5029
      %v5034 = vsel %vm815, %v4759, 0
      %5036 = vmatpush.bf16.msra.mxu0 0
      %5037 = vmatpush.bf16.msra.mxu0 0
      %5038 = vmatpush.bf16.msra.mxu0 0
      %5039 = vmatpush.bf16.msra.mxu0 0
      %5040 = vmatpush.bf16.msra.mxu0 0
      %5041 = vmatpush.bf16.msra.mxu0 0
      %5042 = vmatpush.bf16.msra.mxu0 0
      %5043 = vmatpush.bf16.msra.mxu0 %v5031
      %5044 = vmatmul.bf16.gmra.mxu0 %v5034
      %v5045 = vpop.f32.mrf.mxu0
      %v5046 = vadd.f32 0.0, %v5045
      %v5047 = vpop.f32.mrf.mxu0
      %5048 = vdwg.mxu0
      %v5051 = vunpack.c.l.b16 %v3973
      %v5052 = vunpack.c.l.b16 %v3974
      %v5053 = vpack.c.b16 %v5052, %v5051
      %v5056 = vsel %vm815, %v4760, 0
      %5058 = vmatpush.bf16.msra.mxu0 0
      %5059 = vmatpush.bf16.msra.mxu0 0
      %5060 = vmatpush.bf16.msra.mxu0 0
      %5061 = vmatpush.bf16.msra.mxu0 0
      %5062 = vmatpush.bf16.msra.mxu0 0
      %5063 = vmatpush.bf16.msra.mxu0 0
      %5064 = vmatpush.bf16.msra.mxu0 0
      %5065 = vmatpush.bf16.msra.mxu0 %v5053
      %5066 = vmatmul.bf16.gmra.mxu0 %v5056
      %v5067 = vpop.f32.mrf.mxu0
      %v5068 = vadd.f32 0.0, %v5067
      %v5069 = vpop.f32.mrf.mxu0
      %5070 = vdwg.mxu0
      %v5073 = vunpack.c.l.b16 %v3975
      %v5074 = vunpack.c.l.b16 %v3976
      %v5075 = vpack.c.b16 %v5074, %v5073
      %v5078 = vsel %vm815, %v4761, 0
      %5080 = vmatpush.bf16.msra.mxu0 0
      %5081 = vmatpush.bf16.msra.mxu0 0
      %5082 = vmatpush.bf16.msra.mxu0 0
      %5083 = vmatpush.bf16.msra.mxu0 0
      %5084 = vmatpush.bf16.msra.mxu0 0
      %5085 = vmatpush.bf16.msra.mxu0 0
      %5086 = vmatpush.bf16.msra.mxu0 0
      %5087 = vmatpush.bf16.msra.mxu0 %v5075
      %5088 = vmatmul.bf16.gmra.mxu0 %v5078
      %v5089 = vpop.f32.mrf.mxu0
      %v5090 = vadd.f32 0.0, %v5089
      %v5091 = vpop.f32.mrf.mxu0
      %5092 = vdwg.mxu0
      %v5095 = vunpack.c.l.b16 %v3977
      %v5096 = vunpack.c.l.b16 %v3978
      %v5097 = vpack.c.b16 %v5096, %v5095
      %v5100 = vsel %vm815, %v4762, 0
      %5102 = vmatpush.bf16.msra.mxu0 0
      %5103 = vmatpush.bf16.msra.mxu0 0
      %5104 = vmatpush.bf16.msra.mxu0 0
      %5105 = vmatpush.bf16.msra.mxu0 0
      %5106 = vmatpush.bf16.msra.mxu0 0
      %5107 = vmatpush.bf16.msra.mxu0 0
      %5108 = vmatpush.bf16.msra.mxu0 0
      %5109 = vmatpush.bf16.msra.mxu0 %v5097
      %5110 = vmatmul.bf16.gmra.mxu0 %v5100
      %v5111 = vpop.f32.mrf.mxu0
      %v5112 = vadd.f32 0.0, %v5111
      %v5113 = vpop.f32.mrf.mxu0
      %5114 = vdwg.mxu0
      %v5115 = vpack.c.bf16 %v4804, %v4782
      %v5116 = vpack.c.bf16 %v4848, %v4826
      %v5117 = vpack.c.bf16 %v4892, %v4870
      %v5118 = vpack.c.bf16 %v4936, %v4914
      %v5119 = vpack.c.bf16 %v4980, %v4958
      %v5120 = vpack.c.bf16 %v5024, %v5002
      %v5121 = vpack.c.bf16 %v5068, %v5046
      %v5122 = vpack.c.bf16 %v5112, %v5090
      %v5125 = vunpack.c.l.b16 %v3634
      %v5126 = vunpack.c.l.b16 %v3635
      %v5127 = vpack.c.b16 %v5126, %v5125
      %v5130 = vsel %vm815, %v5115, 0
      %v5133 = vsel %vm815, %v5116, 0
      %v5136 = vsel %vm815, %v5117, 0
      %v5139 = vsel %vm815, %v5118, 0
      %v5142 = vsel %vm815, %v5119, 0
      %v5145 = vsel %vm815, %v5120, 0
      %v5148 = vsel %vm815, %v5121, 0
      %v5151 = vsel %vm815, %v5122, 0
      %5153 = vmatpush.bf16.msra.mxu0 0
      %5154 = vmatpush.bf16.msra.mxu0 0
      %5155 = vmatpush.bf16.msra.mxu0 0
      %5156 = vmatpush.bf16.msra.mxu0 0
      %5157 = vmatpush.bf16.msra.mxu0 0
      %5158 = vmatpush.bf16.msra.mxu0 0
      %5159 = vmatpush.bf16.msra.mxu0 0
      %5160 = vmatpush.bf16.msra.mxu0 %v5127
      %5161 = vmatmul.bf16.gmra.mxu0 %v5130
      %v5162 = vpop.f32.mrf.mxu0
      %v5163 = vadd.f32 0.0, %v5162
      %v5164 = vpop.f32.mrf.mxu0
      %v5165 = vadd.f32 0.0, %v5164
      %5166 = vmatmul.bf16.gmra.mxu0 %v5133
      %v5167 = vpop.f32.mrf.mxu0
      %v5168 = vadd.f32 0.0, %v5167
      %v5169 = vpop.f32.mrf.mxu0
      %v5170 = vadd.f32 0.0, %v5169
      %5171 = vmatmul.bf16.gmra.mxu0 %v5136
      %v5172 = vpop.f32.mrf.mxu0
      %v5173 = vadd.f32 0.0, %v5172
      %v5174 = vpop.f32.mrf.mxu0
      %v5175 = vadd.f32 0.0, %v5174
      %5176 = vmatmul.bf16.gmra.mxu0 %v5139
      %v5177 = vpop.f32.mrf.mxu0
      %v5178 = vadd.f32 0.0, %v5177
      %v5179 = vpop.f32.mrf.mxu0
      %v5180 = vadd.f32 0.0, %v5179
      %5181 = vmatmul.bf16.gmra.mxu0 %v5142
      %v5182 = vpop.f32.mrf.mxu0
      %v5183 = vadd.f32 0.0, %v5182
      %v5184 = vpop.f32.mrf.mxu0
      %v5185 = vadd.f32 0.0, %v5184
      %5186 = vmatmul.bf16.gmra.mxu0 %v5145
      %v5187 = vpop.f32.mrf.mxu0
      %v5188 = vadd.f32 0.0, %v5187
      %v5189 = vpop.f32.mrf.mxu0
      %v5190 = vadd.f32 0.0, %v5189
      %5191 = vmatmul.bf16.gmra.mxu0 %v5148
      %v5192 = vpop.f32.mrf.mxu0
      %v5193 = vadd.f32 0.0, %v5192
      %v5194 = vpop.f32.mrf.mxu0
      %v5195 = vadd.f32 0.0, %v5194
      %5196 = vmatmul.bf16.gmra.mxu0 %v5151
      %v5197 = vpop.f32.mrf.mxu0
      %v5198 = vadd.f32 0.0, %v5197
      %v5199 = vpop.f32.mrf.mxu0
      %v5200 = vadd.f32 0.0, %v5199
      %5201 = vdwg.mxu0
      %v5202 = vadd.f32 %v3579, %v5163
      %v5203 = vadd.f32 %v3581, %v5165
      %v5204 = vadd.f32 %v3584, %v5168
      %v5205 = vadd.f32 %v3586, %v5170
      %v5206 = vadd.f32 %v3589, %v5173
      %v5207 = vadd.f32 %v3591, %v5175
      %v5208 = vadd.f32 %v3594, %v5178
      %v5209 = vadd.f32 %v3596, %v5180
      %v5210 = vadd.f32 %v3599, %v5183
      %v5211 = vadd.f32 %v3601, %v5185
      %v5212 = vadd.f32 %v3604, %v5188
      %v5213 = vadd.f32 %v3606, %v5190
      %v5214 = vadd.f32 %v3609, %v5193
      %v5215 = vadd.f32 %v3611, %v5195
      %v5216 = vadd.f32 %v3614, %v5198
      %v5217 = vadd.f32 %v3616, %v5200
      %s5218 = scalar_lea.vmem %s2, 48
      %v5219 = vld [vmem:[%s5218] sm:$0xf]
      %v5220 = vld [vmem:[%s5218 + $0x4] sm:$0xf]
      %v5221 = vld [vmem:[%s5218 + $0x8] sm:$0xf]
      %v5222 = vld [vmem:[%s5218 + $0xc] sm:$0xf]
      %s5223 = scalar_lea.vmem %s3, 48
      %v5224 = vld [vmem:[%s5223] sm:$0xf]
      %v5225 = vld [vmem:[%s5223 + $0x4] sm:$0xf]
      %v5226 = vld [vmem:[%s5223 + $0x8] sm:$0xf]
      %v5227 = vld [vmem:[%s5223 + $0xc] sm:$0xf]
      %s5228 = scalar_lea.vmem %s4, 48
      %v5229 = vld [vmem:[%s5228] sm:$0xf]
      %v5230 = vld [vmem:[%s5228 + $0x4] sm:$0xf]
      %v5231 = vld [vmem:[%s5228 + $0x8] sm:$0xf]
      %v5232 = vld [vmem:[%s5228 + $0xc] sm:$0xf]
      %s5233 = scalar_lea.vmem %s5, 24
      %v5234 = vld [vmem:[%s5233] sm:$0xf]
      %v5235 = vld [vmem:[%s5233 + $0x4] sm:$0xf]
      %v5240 = vunpack.c.l.b16 %v5219
      %v5241 = vunpack.c.l.b16 %v5220
      %v5242 = vunpack.c.l.b16 %v5221
      %v5243 = vunpack.c.l.b16 %v5222
      %v5244 = vpack.c.b16 %v5241, %v5240
      %v5245 = vpack.c.b16 %v5243, %v5242
      %5248 = vmatpush.bf16.msra.mxu0 0
      %5249 = vmatpush.bf16.msra.mxu0 0
      %5250 = vmatpush.bf16.msra.mxu0 0
      %5251 = vmatpush.bf16.msra.mxu0 0
      %5252 = vmatpush.bf16.msra.mxu0 0
      %5253 = vmatpush.bf16.msra.mxu0 0
      %5254 = vmatpush.bf16.msra.mxu0 %v5245
      %5255 = vmatpush.bf16.msra.mxu0 %v5244
      %5256 = vmatmul.bf16.gmra.mxu0 %v408
      %v5257 = vpop.f32.mrf.mxu0
      %v5258 = vadd.f32 0.0, %v5257
      %v5259 = vpop.f32.mrf.mxu0
      %v5260 = vadd.f32 0.0, %v5259
      %5261 = vmatmul.bf16.gmra.mxu0 %v411
      %v5262 = vpop.f32.mrf.mxu0
      %v5263 = vadd.f32 0.0, %v5262
      %v5264 = vpop.f32.mrf.mxu0
      %v5265 = vadd.f32 0.0, %v5264
      %5266 = vmatmul.bf16.gmra.mxu0 %v414
      %v5267 = vpop.f32.mrf.mxu0
      %v5268 = vadd.f32 0.0, %v5267
      %v5269 = vpop.f32.mrf.mxu0
      %v5270 = vadd.f32 0.0, %v5269
      %5271 = vmatmul.bf16.gmra.mxu0 %v417
      %v5272 = vpop.f32.mrf.mxu0
      %v5273 = vadd.f32 0.0, %v5272
      %v5274 = vpop.f32.mrf.mxu0
      %v5275 = vadd.f32 0.0, %v5274
      %5276 = vmatmul.bf16.gmra.mxu0 %v420
      %v5277 = vpop.f32.mrf.mxu0
      %v5278 = vadd.f32 0.0, %v5277
      %v5279 = vpop.f32.mrf.mxu0
      %v5280 = vadd.f32 0.0, %v5279
      %5281 = vmatmul.bf16.gmra.mxu0 %v423
      %v5282 = vpop.f32.mrf.mxu0
      %v5283 = vadd.f32 0.0, %v5282
      %v5284 = vpop.f32.mrf.mxu0
      %v5285 = vadd.f32 0.0, %v5284
      %5286 = vmatmul.bf16.gmra.mxu0 %v426
      %v5287 = vpop.f32.mrf.mxu0
      %v5288 = vadd.f32 0.0, %v5287
      %v5289 = vpop.f32.mrf.mxu0
      %v5290 = vadd.f32 0.0, %v5289
      %5291 = vmatmul.bf16.gmra.mxu0 %v429
      %v5292 = vpop.f32.mrf.mxu0
      %v5293 = vadd.f32 0.0, %v5292
      %v5294 = vpop.f32.mrf.mxu0
      %v5295 = vadd.f32 0.0, %v5294
      %5296 = vdwg.mxu0
      %v5301 = vunpack.c.l.b16 %v5224
      %v5302 = vunpack.c.l.b16 %v5225
      %v5303 = vunpack.c.l.b16 %v5226
      %v5304 = vunpack.c.l.b16 %v5227
      %v5305 = vpack.c.b16 %v5302, %v5301
      %v5306 = vpack.c.b16 %v5304, %v5303
      %5309 = vmatpush.bf16.msra.mxu0 0
      %5310 = vmatpush.bf16.msra.mxu0 0
      %5311 = vmatpush.bf16.msra.mxu0 0
      %5312 = vmatpush.bf16.msra.mxu0 0
      %5313 = vmatpush.bf16.msra.mxu0 0
      %5314 = vmatpush.bf16.msra.mxu0 0
      %5315 = vmatpush.bf16.msra.mxu0 %v5306
      %5316 = vmatpush.bf16.msra.mxu0 %v5305
      %5317 = vmatmul.bf16.gmra.mxu0 %v493
      %v5318 = vpop.f32.mrf.mxu0
      %v5319 = vadd.f32 0.0, %v5318
      %v5320 = vpop.f32.mrf.mxu0
      %v5321 = vadd.f32 0.0, %v5320
      %5322 = vmatmul.bf16.gmra.mxu0 %v496
      %v5323 = vpop.f32.mrf.mxu0
      %v5324 = vadd.f32 0.0, %v5323
      %v5325 = vpop.f32.mrf.mxu0
      %v5326 = vadd.f32 0.0, %v5325
      %5327 = vmatmul.bf16.gmra.mxu0 %v499
      %v5328 = vpop.f32.mrf.mxu0
      %v5329 = vadd.f32 0.0, %v5328
      %v5330 = vpop.f32.mrf.mxu0
      %v5331 = vadd.f32 0.0, %v5330
      %5332 = vmatmul.bf16.gmra.mxu0 %v502
      %v5333 = vpop.f32.mrf.mxu0
      %v5334 = vadd.f32 0.0, %v5333
      %v5335 = vpop.f32.mrf.mxu0
      %v5336 = vadd.f32 0.0, %v5335
      %5337 = vmatmul.bf16.gmra.mxu0 %v505
      %v5338 = vpop.f32.mrf.mxu0
      %v5339 = vadd.f32 0.0, %v5338
      %v5340 = vpop.f32.mrf.mxu0
      %v5341 = vadd.f32 0.0, %v5340
      %5342 = vmatmul.bf16.gmra.mxu0 %v508
      %v5343 = vpop.f32.mrf.mxu0
      %v5344 = vadd.f32 0.0, %v5343
      %v5345 = vpop.f32.mrf.mxu0
      %v5346 = vadd.f32 0.0, %v5345
      %5347 = vmatmul.bf16.gmra.mxu0 %v511
      %v5348 = vpop.f32.mrf.mxu0
      %v5349 = vadd.f32 0.0, %v5348
      %v5350 = vpop.f32.mrf.mxu0
      %v5351 = vadd.f32 0.0, %v5350
      %5352 = vmatmul.bf16.gmra.mxu0 %v514
      %v5353 = vpop.f32.mrf.mxu0
      %v5354 = vadd.f32 0.0, %v5353
      %v5355 = vpop.f32.mrf.mxu0
      %v5356 = vadd.f32 0.0, %v5355
      %5357 = vmatmul.bf16.gmra.mxu0 %v517
      %v5358 = vpop.f32.mrf.mxu0
      %v5359 = vadd.f32 0.0, %v5358
      %v5360 = vpop.f32.mrf.mxu0
      %v5361 = vadd.f32 0.0, %v5360
      %5362 = vmatmul.bf16.gmra.mxu0 %v520
      %v5363 = vpop.f32.mrf.mxu0
      %v5364 = vadd.f32 0.0, %v5363
      %v5365 = vpop.f32.mrf.mxu0
      %v5366 = vadd.f32 0.0, %v5365
      %5367 = vmatmul.bf16.gmra.mxu0 %v523
      %v5368 = vpop.f32.mrf.mxu0
      %v5369 = vadd.f32 0.0, %v5368
      %v5370 = vpop.f32.mrf.mxu0
      %v5371 = vadd.f32 0.0, %v5370
      %5372 = vmatmul.bf16.gmra.mxu0 %v526
      %v5373 = vpop.f32.mrf.mxu0
      %v5374 = vadd.f32 0.0, %v5373
      %v5375 = vpop.f32.mrf.mxu0
      %v5376 = vadd.f32 0.0, %v5375
      %5377 = vmatmul.bf16.gmra.mxu0 %v529
      %v5378 = vpop.f32.mrf.mxu0
      %v5379 = vadd.f32 0.0, %v5378
      %v5380 = vpop.f32.mrf.mxu0
      %v5381 = vadd.f32 0.0, %v5380
      %5382 = vmatmul.bf16.gmra.mxu0 %v532
      %v5383 = vpop.f32.mrf.mxu0
      %v5384 = vadd.f32 0.0, %v5383
      %v5385 = vpop.f32.mrf.mxu0
      %v5386 = vadd.f32 0.0, %v5385
      %5387 = vmatmul.bf16.gmra.mxu0 %v535
      %v5388 = vpop.f32.mrf.mxu0
      %v5389 = vadd.f32 0.0, %v5388
      %v5390 = vpop.f32.mrf.mxu0
      %v5391 = vadd.f32 0.0, %v5390
      %5392 = vmatmul.bf16.gmra.mxu0 %v538
      %v5393 = vpop.f32.mrf.mxu0
      %v5394 = vadd.f32 0.0, %v5393
      %v5395 = vpop.f32.mrf.mxu0
      %v5396 = vadd.f32 0.0, %v5395
      %5397 = vdwg.mxu0
      %v5402 = vunpack.c.l.b16 %v5229
      %v5403 = vunpack.c.l.b16 %v5230
      %v5404 = vunpack.c.l.b16 %v5231
      %v5405 = vunpack.c.l.b16 %v5232
      %v5406 = vpack.c.b16 %v5403, %v5402
      %v5407 = vpack.c.b16 %v5405, %v5404
      %5410 = vmatpush.bf16.msra.mxu0 0
      %5411 = vmatpush.bf16.msra.mxu0 0
      %5412 = vmatpush.bf16.msra.mxu0 0
      %5413 = vmatpush.bf16.msra.mxu0 0
      %5414 = vmatpush.bf16.msra.mxu0 0
      %5415 = vmatpush.bf16.msra.mxu0 0
      %5416 = vmatpush.bf16.msra.mxu0 %v5407
      %5417 = vmatpush.bf16.msra.mxu0 %v5406
      %5418 = vmatmul.bf16.gmra.mxu0 %v493
      %v5419 = vpop.f32.mrf.mxu0
      %v5420 = vadd.f32 0.0, %v5419
      %v5421 = vpop.f32.mrf.mxu0
      %v5422 = vadd.f32 0.0, %v5421
      %5423 = vmatmul.bf16.gmra.mxu0 %v496
      %v5424 = vpop.f32.mrf.mxu0
      %v5425 = vadd.f32 0.0, %v5424
      %v5426 = vpop.f32.mrf.mxu0
      %v5427 = vadd.f32 0.0, %v5426
      %5428 = vmatmul.bf16.gmra.mxu0 %v499
      %v5429 = vpop.f32.mrf.mxu0
      %v5430 = vadd.f32 0.0, %v5429
      %v5431 = vpop.f32.mrf.mxu0
      %v5432 = vadd.f32 0.0, %v5431
      %5433 = vmatmul.bf16.gmra.mxu0 %v502
      %v5434 = vpop.f32.mrf.mxu0
      %v5435 = vadd.f32 0.0, %v5434
      %v5436 = vpop.f32.mrf.mxu0
      %v5437 = vadd.f32 0.0, %v5436
      %5438 = vmatmul.bf16.gmra.mxu0 %v505
      %v5439 = vpop.f32.mrf.mxu0
      %v5440 = vadd.f32 0.0, %v5439
      %v5441 = vpop.f32.mrf.mxu0
      %v5442 = vadd.f32 0.0, %v5441
      %5443 = vmatmul.bf16.gmra.mxu0 %v508
      %v5444 = vpop.f32.mrf.mxu0
      %v5445 = vadd.f32 0.0, %v5444
      %v5446 = vpop.f32.mrf.mxu0
      %v5447 = vadd.f32 0.0, %v5446
      %5448 = vmatmul.bf16.gmra.mxu0 %v511
      %v5449 = vpop.f32.mrf.mxu0
      %v5450 = vadd.f32 0.0, %v5449
      %v5451 = vpop.f32.mrf.mxu0
      %v5452 = vadd.f32 0.0, %v5451
      %5453 = vmatmul.bf16.gmra.mxu0 %v514
      %v5454 = vpop.f32.mrf.mxu0
      %v5455 = vadd.f32 0.0, %v5454
      %v5456 = vpop.f32.mrf.mxu0
      %v5457 = vadd.f32 0.0, %v5456
      %5458 = vmatmul.bf16.gmra.mxu0 %v517
      %v5459 = vpop.f32.mrf.mxu0
      %v5460 = vadd.f32 0.0, %v5459
      %v5461 = vpop.f32.mrf.mxu0
      %v5462 = vadd.f32 0.0, %v5461
      %5463 = vmatmul.bf16.gmra.mxu0 %v520
      %v5464 = vpop.f32.mrf.mxu0
      %v5465 = vadd.f32 0.0, %v5464
      %v5466 = vpop.f32.mrf.mxu0
      %v5467 = vadd.f32 0.0, %v5466
      %5468 = vmatmul.bf16.gmra.mxu0 %v523
      %v5469 = vpop.f32.mrf.mxu0
      %v5470 = vadd.f32 0.0, %v5469
      %v5471 = vpop.f32.mrf.mxu0
      %v5472 = vadd.f32 0.0, %v5471
      %5473 = vmatmul.bf16.gmra.mxu0 %v526
      %v5474 = vpop.f32.mrf.mxu0
      %v5475 = vadd.f32 0.0, %v5474
      %v5476 = vpop.f32.mrf.mxu0
      %v5477 = vadd.f32 0.0, %v5476
      %5478 = vmatmul.bf16.gmra.mxu0 %v529
      %v5479 = vpop.f32.mrf.mxu0
      %v5480 = vadd.f32 0.0, %v5479
      %v5481 = vpop.f32.mrf.mxu0
      %v5482 = vadd.f32 0.0, %v5481
      %5483 = vmatmul.bf16.gmra.mxu0 %v532
      %v5484 = vpop.f32.mrf.mxu0
      %v5485 = vadd.f32 0.0, %v5484
      %v5486 = vpop.f32.mrf.mxu0
      %v5487 = vadd.f32 0.0, %v5486
      %5488 = vmatmul.bf16.gmra.mxu0 %v535
      %v5489 = vpop.f32.mrf.mxu0
      %v5490 = vadd.f32 0.0, %v5489
      %v5491 = vpop.f32.mrf.mxu0
      %v5492 = vadd.f32 0.0, %v5491
      %5493 = vmatmul.bf16.gmra.mxu0 %v538
      %v5494 = vpop.f32.mrf.mxu0
      %v5495 = vadd.f32 0.0, %v5494
      %v5496 = vpop.f32.mrf.mxu0
      %v5497 = vadd.f32 0.0, %v5496
      %5498 = vdwg.mxu0
      %v5499 = vpack.c.bf16 %v5258, %v5258
      %v5500 = vpack.c.bf16 %v5260, %v5260
      %v5501 = vpack.c.bf16 %v5263, %v5263
      %v5502 = vpack.c.bf16 %v5265, %v5265
      %v5503 = vpack.c.bf16 %v5268, %v5268
      %v5504 = vpack.c.bf16 %v5270, %v5270
      %v5505 = vpack.c.bf16 %v5273, %v5273
      %v5506 = vpack.c.bf16 %v5275, %v5275
      %v5507 = vpack.c.bf16 %v5278, %v5278
      %v5508 = vpack.c.bf16 %v5280, %v5280
      %v5509 = vpack.c.bf16 %v5283, %v5283
      %v5510 = vpack.c.bf16 %v5285, %v5285
      %v5511 = vpack.c.bf16 %v5288, %v5288
      %v5512 = vpack.c.bf16 %v5290, %v5290
      %v5513 = vpack.c.bf16 %v5293, %v5293
      %v5514 = vpack.c.bf16 %v5295, %v5295
      %v5515 = vpack.c.bf16 %v5319, %v5319
      %v5516 = vpack.c.bf16 %v5321, %v5321
      %v5517 = vpack.c.bf16 %v5324, %v5324
      %v5518 = vpack.c.bf16 %v5326, %v5326
      %v5519 = vpack.c.bf16 %v5329, %v5329
      %v5520 = vpack.c.bf16 %v5331, %v5331
      %v5521 = vpack.c.bf16 %v5334, %v5334
      %v5522 = vpack.c.bf16 %v5336, %v5336
      %v5523 = vpack.c.bf16 %v5339, %v5339
      %v5524 = vpack.c.bf16 %v5341, %v5341
      %v5525 = vpack.c.bf16 %v5344, %v5344
      %v5526 = vpack.c.bf16 %v5346, %v5346
      %v5527 = vpack.c.bf16 %v5349, %v5349
      %v5528 = vpack.c.bf16 %v5351, %v5351
      %v5529 = vpack.c.bf16 %v5354, %v5354
      %v5530 = vpack.c.bf16 %v5356, %v5356
      %v5531 = vpack.c.bf16 %v5359, %v5359
      %v5532 = vpack.c.bf16 %v5361, %v5361
      %v5533 = vpack.c.bf16 %v5364, %v5364
      %v5534 = vpack.c.bf16 %v5366, %v5366
      %v5535 = vpack.c.bf16 %v5369, %v5369
      %v5536 = vpack.c.bf16 %v5371, %v5371
      %v5537 = vpack.c.bf16 %v5374, %v5374
      %v5538 = vpack.c.bf16 %v5376, %v5376
      %v5539 = vpack.c.bf16 %v5379, %v5379
      %v5540 = vpack.c.bf16 %v5381, %v5381
      %v5541 = vpack.c.bf16 %v5384, %v5384
      %v5542 = vpack.c.bf16 %v5386, %v5386
      %v5543 = vpack.c.bf16 %v5389, %v5389
      %v5544 = vpack.c.bf16 %v5391, %v5391
      %v5545 = vpack.c.bf16 %v5394, %v5394
      %v5546 = vpack.c.bf16 %v5396, %v5396
      %v5547 = vpack.c.bf16 %v5420, %v5420
      %v5548 = vpack.c.bf16 %v5422, %v5422
      %v5549 = vpack.c.bf16 %v5425, %v5425
      %v5550 = vpack.c.bf16 %v5427, %v5427
      %v5551 = vpack.c.bf16 %v5430, %v5430
      %v5552 = vpack.c.bf16 %v5432, %v5432
      %v5553 = vpack.c.bf16 %v5435, %v5435
      %v5554 = vpack.c.bf16 %v5437, %v5437
      %v5555 = vpack.c.bf16 %v5440, %v5440
      %v5556 = vpack.c.bf16 %v5442, %v5442
      %v5557 = vpack.c.bf16 %v5445, %v5445
      %v5558 = vpack.c.bf16 %v5447, %v5447
      %v5559 = vpack.c.bf16 %v5450, %v5450
      %v5560 = vpack.c.bf16 %v5452, %v5452
      %v5561 = vpack.c.bf16 %v5455, %v5455
      %v5562 = vpack.c.bf16 %v5457, %v5457
      %v5563 = vpack.c.bf16 %v5460, %v5460
      %v5564 = vpack.c.bf16 %v5462, %v5462
      %v5565 = vpack.c.bf16 %v5465, %v5465
      %v5566 = vpack.c.bf16 %v5467, %v5467
      %v5567 = vpack.c.bf16 %v5470, %v5470
      %v5568 = vpack.c.bf16 %v5472, %v5472
      %v5569 = vpack.c.bf16 %v5475, %v5475
      %v5570 = vpack.c.bf16 %v5477, %v5477
      %v5571 = vpack.c.bf16 %v5480, %v5480
      %v5572 = vpack.c.bf16 %v5482, %v5482
      %v5573 = vpack.c.bf16 %v5485, %v5485
      %v5574 = vpack.c.bf16 %v5487, %v5487
      %v5575 = vpack.c.bf16 %v5490, %v5490
      %v5576 = vpack.c.bf16 %v5492, %v5492
      %v5577 = vpack.c.bf16 %v5495, %v5495
      %v5578 = vpack.c.bf16 %v5497, %v5497
      %v5581 = vunpack.c.l.b16 %v5515
      %v5582 = vunpack.c.l.b16 %v5516
      %v5583 = vpack.c.b16 %v5582, %v5581
      %v5585 = vsel %vm815, %v5499, 0
      %v5588 = vsel %vm815, %v5583, 0
      %5590 = vmatpush.bf16.xpose.msra.mxu0 0
      %5591 = vmatpush.bf16.xpose.msra.mxu0 0
      %5592 = vmatpush.bf16.xpose.msra.mxu0 0
      %5593 = vmatpush.bf16.xpose.msra.mxu0 0
      %5594 = vmatpush.bf16.xpose.msra.mxu0 0
      %5595 = vmatpush.bf16.xpose.msra.mxu0 0
      %5596 = vmatpush.bf16.xpose.msra.mxu0 0
      %5597 = vmatpush.bf16.xpose.msra.mxu0 %v5588
      %5598 = vmatmul.bf16.gmra.mxu0 %v5585
      %v5599 = vpop.f32.mrf.mxu0
      %v5600 = vadd.f32 0.0, %v5599
      %v5601 = vpop.f32.mrf.mxu0
      %5602 = vdwg.mxu0
      %v5605 = vunpack.c.l.b16 %v5517
      %v5606 = vunpack.c.l.b16 %v5518
      %v5607 = vpack.c.b16 %v5606, %v5605
      %v5609 = vsel %vm815, %v5500, 0
      %v5612 = vsel %vm815, %v5607, 0
      %5614 = vmatpush.bf16.xpose.msra.mxu0 0
      %5615 = vmatpush.bf16.xpose.msra.mxu0 0
      %5616 = vmatpush.bf16.xpose.msra.mxu0 0
      %5617 = vmatpush.bf16.xpose.msra.mxu0 0
      %5618 = vmatpush.bf16.xpose.msra.mxu0 0
      %5619 = vmatpush.bf16.xpose.msra.mxu0 0
      %5620 = vmatpush.bf16.xpose.msra.mxu0 0
      %5621 = vmatpush.bf16.xpose.msra.mxu0 %v5612
      %5622 = vmatmul.bf16.gmra.mxu0 %v5609
      %v5623 = vpop.f32.mrf.mxu0
      %v5624 = vadd.f32 0.0, %v5623
      %v5625 = vpop.f32.mrf.mxu0
      %5626 = vdwg.mxu0
      %v5629 = vunpack.c.l.b16 %v5519
      %v5630 = vunpack.c.l.b16 %v5520
      %v5631 = vpack.c.b16 %v5630, %v5629
      %v5633 = vsel %vm815, %v5501, 0
      %v5636 = vsel %vm815, %v5631, 0
      %5638 = vmatpush.bf16.xpose.msra.mxu0 0
      %5639 = vmatpush.bf16.xpose.msra.mxu0 0
      %5640 = vmatpush.bf16.xpose.msra.mxu0 0
      %5641 = vmatpush.bf16.xpose.msra.mxu0 0
      %5642 = vmatpush.bf16.xpose.msra.mxu0 0
      %5643 = vmatpush.bf16.xpose.msra.mxu0 0
      %5644 = vmatpush.bf16.xpose.msra.mxu0 0
      %5645 = vmatpush.bf16.xpose.msra.mxu0 %v5636
      %5646 = vmatmul.bf16.gmra.mxu0 %v5633
      %v5647 = vpop.f32.mrf.mxu0
      %v5648 = vadd.f32 0.0, %v5647
      %v5649 = vpop.f32.mrf.mxu0
      %5650 = vdwg.mxu0
      %v5653 = vunpack.c.l.b16 %v5521
      %v5654 = vunpack.c.l.b16 %v5522
      %v5655 = vpack.c.b16 %v5654, %v5653
      %v5657 = vsel %vm815, %v5502, 0
      %v5660 = vsel %vm815, %v5655, 0
      %5662 = vmatpush.bf16.xpose.msra.mxu0 0
      %5663 = vmatpush.bf16.xpose.msra.mxu0 0
      %5664 = vmatpush.bf16.xpose.msra.mxu0 0
      %5665 = vmatpush.bf16.xpose.msra.mxu0 0
      %5666 = vmatpush.bf16.xpose.msra.mxu0 0
      %5667 = vmatpush.bf16.xpose.msra.mxu0 0
      %5668 = vmatpush.bf16.xpose.msra.mxu0 0
      %5669 = vmatpush.bf16.xpose.msra.mxu0 %v5660
      %5670 = vmatmul.bf16.gmra.mxu0 %v5657
      %v5671 = vpop.f32.mrf.mxu0
      %v5672 = vadd.f32 0.0, %v5671
      %v5673 = vpop.f32.mrf.mxu0
      %5674 = vdwg.mxu0
      %v5677 = vunpack.c.l.b16 %v5523
      %v5678 = vunpack.c.l.b16 %v5524
      %v5679 = vpack.c.b16 %v5678, %v5677
      %v5681 = vsel %vm815, %v5503, 0
      %v5684 = vsel %vm815, %v5679, 0
      %5686 = vmatpush.bf16.xpose.msra.mxu0 0
      %5687 = vmatpush.bf16.xpose.msra.mxu0 0
      %5688 = vmatpush.bf16.xpose.msra.mxu0 0
      %5689 = vmatpush.bf16.xpose.msra.mxu0 0
      %5690 = vmatpush.bf16.xpose.msra.mxu0 0
      %5691 = vmatpush.bf16.xpose.msra.mxu0 0
      %5692 = vmatpush.bf16.xpose.msra.mxu0 0
      %5693 = vmatpush.bf16.xpose.msra.mxu0 %v5684
      %5694 = vmatmul.bf16.gmra.mxu0 %v5681
      %v5695 = vpop.f32.mrf.mxu0
      %v5696 = vadd.f32 0.0, %v5695
      %v5697 = vpop.f32.mrf.mxu0
      %5698 = vdwg.mxu0
      %v5701 = vunpack.c.l.b16 %v5525
      %v5702 = vunpack.c.l.b16 %v5526
      %v5703 = vpack.c.b16 %v5702, %v5701
      %v5705 = vsel %vm815, %v5504, 0
      %v5708 = vsel %vm815, %v5703, 0
      %5710 = vmatpush.bf16.xpose.msra.mxu0 0
      %5711 = vmatpush.bf16.xpose.msra.mxu0 0
      %5712 = vmatpush.bf16.xpose.msra.mxu0 0
      %5713 = vmatpush.bf16.xpose.msra.mxu0 0
      %5714 = vmatpush.bf16.xpose.msra.mxu0 0
      %5715 = vmatpush.bf16.xpose.msra.mxu0 0
      %5716 = vmatpush.bf16.xpose.msra.mxu0 0
      %5717 = vmatpush.bf16.xpose.msra.mxu0 %v5708
      %5718 = vmatmul.bf16.gmra.mxu0 %v5705
      %v5719 = vpop.f32.mrf.mxu0
      %v5720 = vadd.f32 0.0, %v5719
      %v5721 = vpop.f32.mrf.mxu0
      %5722 = vdwg.mxu0
      %v5725 = vunpack.c.l.b16 %v5527
      %v5726 = vunpack.c.l.b16 %v5528
      %v5727 = vpack.c.b16 %v5726, %v5725
      %v5729 = vsel %vm815, %v5505, 0
      %v5732 = vsel %vm815, %v5727, 0
      %5734 = vmatpush.bf16.xpose.msra.mxu0 0
      %5735 = vmatpush.bf16.xpose.msra.mxu0 0
      %5736 = vmatpush.bf16.xpose.msra.mxu0 0
      %5737 = vmatpush.bf16.xpose.msra.mxu0 0
      %5738 = vmatpush.bf16.xpose.msra.mxu0 0
      %5739 = vmatpush.bf16.xpose.msra.mxu0 0
      %5740 = vmatpush.bf16.xpose.msra.mxu0 0
      %5741 = vmatpush.bf16.xpose.msra.mxu0 %v5732
      %5742 = vmatmul.bf16.gmra.mxu0 %v5729
      %v5743 = vpop.f32.mrf.mxu0
      %v5744 = vadd.f32 0.0, %v5743
      %v5745 = vpop.f32.mrf.mxu0
      %5746 = vdwg.mxu0
      %v5749 = vunpack.c.l.b16 %v5529
      %v5750 = vunpack.c.l.b16 %v5530
      %v5751 = vpack.c.b16 %v5750, %v5749
      %v5753 = vsel %vm815, %v5506, 0
      %v5756 = vsel %vm815, %v5751, 0
      %5758 = vmatpush.bf16.xpose.msra.mxu0 0
      %5759 = vmatpush.bf16.xpose.msra.mxu0 0
      %5760 = vmatpush.bf16.xpose.msra.mxu0 0
      %5761 = vmatpush.bf16.xpose.msra.mxu0 0
      %5762 = vmatpush.bf16.xpose.msra.mxu0 0
      %5763 = vmatpush.bf16.xpose.msra.mxu0 0
      %5764 = vmatpush.bf16.xpose.msra.mxu0 0
      %5765 = vmatpush.bf16.xpose.msra.mxu0 %v5756
      %5766 = vmatmul.bf16.gmra.mxu0 %v5753
      %v5767 = vpop.f32.mrf.mxu0
      %v5768 = vadd.f32 0.0, %v5767
      %v5769 = vpop.f32.mrf.mxu0
      %5770 = vdwg.mxu0
      %v5773 = vunpack.c.l.b16 %v5531
      %v5774 = vunpack.c.l.b16 %v5532
      %v5775 = vpack.c.b16 %v5774, %v5773
      %v5777 = vsel %vm815, %v5507, 0
      %v5780 = vsel %vm815, %v5775, 0
      %5782 = vmatpush.bf16.xpose.msra.mxu0 0
      %5783 = vmatpush.bf16.xpose.msra.mxu0 0
      %5784 = vmatpush.bf16.xpose.msra.mxu0 0
      %5785 = vmatpush.bf16.xpose.msra.mxu0 0
      %5786 = vmatpush.bf16.xpose.msra.mxu0 0
      %5787 = vmatpush.bf16.xpose.msra.mxu0 0
      %5788 = vmatpush.bf16.xpose.msra.mxu0 0
      %5789 = vmatpush.bf16.xpose.msra.mxu0 %v5780
      %5790 = vmatmul.bf16.gmra.mxu0 %v5777
      %v5791 = vpop.f32.mrf.mxu0
      %v5792 = vadd.f32 0.0, %v5791
      %v5793 = vpop.f32.mrf.mxu0
      %5794 = vdwg.mxu0
      %v5797 = vunpack.c.l.b16 %v5533
      %v5798 = vunpack.c.l.b16 %v5534
      %v5799 = vpack.c.b16 %v5798, %v5797
      %v5801 = vsel %vm815, %v5508, 0
      %v5804 = vsel %vm815, %v5799, 0
      %5806 = vmatpush.bf16.xpose.msra.mxu0 0
      %5807 = vmatpush.bf16.xpose.msra.mxu0 0
      %5808 = vmatpush.bf16.xpose.msra.mxu0 0
      %5809 = vmatpush.bf16.xpose.msra.mxu0 0
      %5810 = vmatpush.bf16.xpose.msra.mxu0 0
      %5811 = vmatpush.bf16.xpose.msra.mxu0 0
      %5812 = vmatpush.bf16.xpose.msra.mxu0 0
      %5813 = vmatpush.bf16.xpose.msra.mxu0 %v5804
      %5814 = vmatmul.bf16.gmra.mxu0 %v5801
      %v5815 = vpop.f32.mrf.mxu0
      %v5816 = vadd.f32 0.0, %v5815
      %v5817 = vpop.f32.mrf.mxu0
      %5818 = vdwg.mxu0
      %v5821 = vunpack.c.l.b16 %v5535
      %v5822 = vunpack.c.l.b16 %v5536
      %v5823 = vpack.c.b16 %v5822, %v5821
      %v5825 = vsel %vm815, %v5509, 0
      %v5828 = vsel %vm815, %v5823, 0
      %5830 = vmatpush.bf16.xpose.msra.mxu0 0
      %5831 = vmatpush.bf16.xpose.msra.mxu0 0
      %5832 = vmatpush.bf16.xpose.msra.mxu0 0
      %5833 = vmatpush.bf16.xpose.msra.mxu0 0
      %5834 = vmatpush.bf16.xpose.msra.mxu0 0
      %5835 = vmatpush.bf16.xpose.msra.mxu0 0
      %5836 = vmatpush.bf16.xpose.msra.mxu0 0
      %5837 = vmatpush.bf16.xpose.msra.mxu0 %v5828
      %5838 = vmatmul.bf16.gmra.mxu0 %v5825
      %v5839 = vpop.f32.mrf.mxu0
      %v5840 = vadd.f32 0.0, %v5839
      %v5841 = vpop.f32.mrf.mxu0
      %5842 = vdwg.mxu0
      %v5845 = vunpack.c.l.b16 %v5537
      %v5846 = vunpack.c.l.b16 %v5538
      %v5847 = vpack.c.b16 %v5846, %v5845
      %v5849 = vsel %vm815, %v5510, 0
      %v5852 = vsel %vm815, %v5847, 0
      %5854 = vmatpush.bf16.xpose.msra.mxu0 0
      %5855 = vmatpush.bf16.xpose.msra.mxu0 0
      %5856 = vmatpush.bf16.xpose.msra.mxu0 0
      %5857 = vmatpush.bf16.xpose.msra.mxu0 0
      %5858 = vmatpush.bf16.xpose.msra.mxu0 0
      %5859 = vmatpush.bf16.xpose.msra.mxu0 0
      %5860 = vmatpush.bf16.xpose.msra.mxu0 0
      %5861 = vmatpush.bf16.xpose.msra.mxu0 %v5852
      %5862 = vmatmul.bf16.gmra.mxu0 %v5849
      %v5863 = vpop.f32.mrf.mxu0
      %v5864 = vadd.f32 0.0, %v5863
      %v5865 = vpop.f32.mrf.mxu0
      %5866 = vdwg.mxu0
      %v5869 = vunpack.c.l.b16 %v5539
      %v5870 = vunpack.c.l.b16 %v5540
      %v5871 = vpack.c.b16 %v5870, %v5869
      %v5873 = vsel %vm815, %v5511, 0
      %v5876 = vsel %vm815, %v5871, 0
      %5878 = vmatpush.bf16.xpose.msra.mxu0 0
      %5879 = vmatpush.bf16.xpose.msra.mxu0 0
      %5880 = vmatpush.bf16.xpose.msra.mxu0 0
      %5881 = vmatpush.bf16.xpose.msra.mxu0 0
      %5882 = vmatpush.bf16.xpose.msra.mxu0 0
      %5883 = vmatpush.bf16.xpose.msra.mxu0 0
      %5884 = vmatpush.bf16.xpose.msra.mxu0 0
      %5885 = vmatpush.bf16.xpose.msra.mxu0 %v5876
      %5886 = vmatmul.bf16.gmra.mxu0 %v5873
      %v5887 = vpop.f32.mrf.mxu0
      %v5888 = vadd.f32 0.0, %v5887
      %v5889 = vpop.f32.mrf.mxu0
      %5890 = vdwg.mxu0
      %v5893 = vunpack.c.l.b16 %v5541
      %v5894 = vunpack.c.l.b16 %v5542
      %v5895 = vpack.c.b16 %v5894, %v5893
      %v5897 = vsel %vm815, %v5512, 0
      %v5900 = vsel %vm815, %v5895, 0
      %5902 = vmatpush.bf16.xpose.msra.mxu0 0
      %5903 = vmatpush.bf16.xpose.msra.mxu0 0
      %5904 = vmatpush.bf16.xpose.msra.mxu0 0
      %5905 = vmatpush.bf16.xpose.msra.mxu0 0
      %5906 = vmatpush.bf16.xpose.msra.mxu0 0
      %5907 = vmatpush.bf16.xpose.msra.mxu0 0
      %5908 = vmatpush.bf16.xpose.msra.mxu0 0
      %5909 = vmatpush.bf16.xpose.msra.mxu0 %v5900
      %5910 = vmatmul.bf16.gmra.mxu0 %v5897
      %v5911 = vpop.f32.mrf.mxu0
      %v5912 = vadd.f32 0.0, %v5911
      %v5913 = vpop.f32.mrf.mxu0
      %5914 = vdwg.mxu0
      %v5917 = vunpack.c.l.b16 %v5543
      %v5918 = vunpack.c.l.b16 %v5544
      %v5919 = vpack.c.b16 %v5918, %v5917
      %v5921 = vsel %vm815, %v5513, 0
      %v5924 = vsel %vm815, %v5919, 0
      %5926 = vmatpush.bf16.xpose.msra.mxu0 0
      %5927 = vmatpush.bf16.xpose.msra.mxu0 0
      %5928 = vmatpush.bf16.xpose.msra.mxu0 0
      %5929 = vmatpush.bf16.xpose.msra.mxu0 0
      %5930 = vmatpush.bf16.xpose.msra.mxu0 0
      %5931 = vmatpush.bf16.xpose.msra.mxu0 0
      %5932 = vmatpush.bf16.xpose.msra.mxu0 0
      %5933 = vmatpush.bf16.xpose.msra.mxu0 %v5924
      %5934 = vmatmul.bf16.gmra.mxu0 %v5921
      %v5935 = vpop.f32.mrf.mxu0
      %v5936 = vadd.f32 0.0, %v5935
      %v5937 = vpop.f32.mrf.mxu0
      %5938 = vdwg.mxu0
      %v5941 = vunpack.c.l.b16 %v5545
      %v5942 = vunpack.c.l.b16 %v5546
      %v5943 = vpack.c.b16 %v5942, %v5941
      %v5945 = vsel %vm815, %v5514, 0
      %v5948 = vsel %vm815, %v5943, 0
      %5950 = vmatpush.bf16.xpose.msra.mxu0 0
      %5951 = vmatpush.bf16.xpose.msra.mxu0 0
      %5952 = vmatpush.bf16.xpose.msra.mxu0 0
      %5953 = vmatpush.bf16.xpose.msra.mxu0 0
      %5954 = vmatpush.bf16.xpose.msra.mxu0 0
      %5955 = vmatpush.bf16.xpose.msra.mxu0 0
      %5956 = vmatpush.bf16.xpose.msra.mxu0 0
      %5957 = vmatpush.bf16.xpose.msra.mxu0 %v5948
      %5958 = vmatmul.bf16.gmra.mxu0 %v5945
      %v5959 = vpop.f32.mrf.mxu0
      %v5960 = vadd.f32 0.0, %v5959
      %v5961 = vpop.f32.mrf.mxu0
      %5962 = vdwg.mxu0
      %v5963 = vsel %vm815, %v5600, -inf
      %5964 = vmax.xlane.f32.xlu0 %v5963
      %v5965 = vpop.xlane.xlu0 %5964
      %v5966 = vsel %vm815, %v5624, -inf
      %5967 = vmax.xlane.f32.xlu0 %v5966
      %v5968 = vpop.xlane.xlu0 %5967
      %v5969 = vsel %vm815, %v5648, -inf
      %5970 = vmax.xlane.f32.xlu0 %v5969
      %v5971 = vpop.xlane.xlu0 %5970
      %v5972 = vsel %vm815, %v5672, -inf
      %5973 = vmax.xlane.f32.xlu0 %v5972
      %v5974 = vpop.xlane.xlu0 %5973
      %v5975 = vsel %vm815, %v5696, -inf
      %5976 = vmax.xlane.f32.xlu0 %v5975
      %v5977 = vpop.xlane.xlu0 %5976
      %v5978 = vsel %vm815, %v5720, -inf
      %5979 = vmax.xlane.f32.xlu0 %v5978
      %v5980 = vpop.xlane.xlu0 %5979
      %v5981 = vsel %vm815, %v5744, -inf
      %5982 = vmax.xlane.f32.xlu0 %v5981
      %v5983 = vpop.xlane.xlu0 %5982
      %v5984 = vsel %vm815, %v5768, -inf
      %5985 = vmax.xlane.f32.xlu0 %v5984
      %v5986 = vpop.xlane.xlu0 %5985
      %v5987 = vsel %vm815, %v5792, -inf
      %5988 = vmax.xlane.f32.xlu0 %v5987
      %v5989 = vpop.xlane.xlu0 %5988
      %v5990 = vsel %vm815, %v5816, -inf
      %5991 = vmax.xlane.f32.xlu0 %v5990
      %v5992 = vpop.xlane.xlu0 %5991
      %v5993 = vsel %vm815, %v5840, -inf
      %5994 = vmax.xlane.f32.xlu0 %v5993
      %v5995 = vpop.xlane.xlu0 %5994
      %v5996 = vsel %vm815, %v5864, -inf
      %5997 = vmax.xlane.f32.xlu0 %v5996
      %v5998 = vpop.xlane.xlu0 %5997
      %v5999 = vsel %vm815, %v5888, -inf
      %6000 = vmax.xlane.f32.xlu0 %v5999
      %v6001 = vpop.xlane.xlu0 %6000
      %v6002 = vsel %vm815, %v5912, -inf
      %6003 = vmax.xlane.f32.xlu0 %v6002
      %v6004 = vpop.xlane.xlu0 %6003
      %v6005 = vsel %vm815, %v5936, -inf
      %6006 = vmax.xlane.f32.xlu0 %v6005
      %v6007 = vpop.xlane.xlu0 %6006
      %v6008 = vsel %vm815, %v5960, -inf
      %6009 = vmax.xlane.f32.xlu0 %v6008
      %v6010 = vpop.xlane.xlu0 %6009
      %v6011 = vsub.f32 %v5600, %v5965
      %v6012 = vsub.f32 %v5624, %v5968
      %v6013 = vsub.f32 %v5648, %v5971
      %v6014 = vsub.f32 %v5672, %v5974
      %v6015 = vsub.f32 %v5696, %v5977
      %v6016 = vsub.f32 %v5720, %v5980
      %v6017 = vsub.f32 %v5744, %v5983
      %v6018 = vsub.f32 %v5768, %v5986
      %v6019 = vsub.f32 %v5792, %v5989
      %v6020 = vsub.f32 %v5816, %v5992
      %v6021 = vsub.f32 %v5840, %v5995
      %v6022 = vsub.f32 %v5864, %v5998
      %v6023 = vsub.f32 %v5888, %v6001
      %v6024 = vsub.f32 %v5912, %v6004
      %v6025 = vsub.f32 %v5936, %v6007
      %v6026 = vsub.f32 %v5960, %v6010
      %v6027 = vmul.f32 %v6011, 1.442695
      %v6028 = vpow.pop %v6027
      %v6029 = vmul.f32 %v6012, 1.442695
      %v6030 = vpow.pop %v6029
      %v6031 = vmul.f32 %v6013, 1.442695
      %v6032 = vpow.pop %v6031
      %v6033 = vmul.f32 %v6014, 1.442695
      %v6034 = vpow.pop %v6033
      %v6035 = vmul.f32 %v6015, 1.442695
      %v6036 = vpow.pop %v6035
      %v6037 = vmul.f32 %v6016, 1.442695
      %v6038 = vpow.pop %v6037
      %v6039 = vmul.f32 %v6017, 1.442695
      %v6040 = vpow.pop %v6039
      %v6041 = vmul.f32 %v6018, 1.442695
      %v6042 = vpow.pop %v6041
      %v6043 = vmul.f32 %v6019, 1.442695
      %v6044 = vpow.pop %v6043
      %v6045 = vmul.f32 %v6020, 1.442695
      %v6046 = vpow.pop %v6045
      %v6047 = vmul.f32 %v6021, 1.442695
      %v6048 = vpow.pop %v6047
      %v6049 = vmul.f32 %v6022, 1.442695
      %v6050 = vpow.pop %v6049
      %v6051 = vmul.f32 %v6023, 1.442695
      %v6052 = vpow.pop %v6051
      %v6053 = vmul.f32 %v6024, 1.442695
      %v6054 = vpow.pop %v6053
      %v6055 = vmul.f32 %v6025, 1.442695
      %v6056 = vpow.pop %v6055
      %v6057 = vmul.f32 %v6026, 1.442695
      %v6058 = vpow.pop %v6057
      %v6059 = vsel %vm815, %v6028, 0.0
      %6060 = vadd.xlane.f32.xlu0 %v6059
      %v6061 = vpop.xlane.xlu0 %6060
      %v6062 = vsel %vm815, %v6030, 0.0
      %6063 = vadd.xlane.f32.xlu0 %v6062
      %v6064 = vpop.xlane.xlu0 %6063
      %v6065 = vsel %vm815, %v6032, 0.0
      %6066 = vadd.xlane.f32.xlu0 %v6065
      %v6067 = vpop.xlane.xlu0 %6066
      %v6068 = vsel %vm815, %v6034, 0.0
      %6069 = vadd.xlane.f32.xlu0 %v6068
      %v6070 = vpop.xlane.xlu0 %6069
      %v6071 = vsel %vm815, %v6036, 0.0
      %6072 = vadd.xlane.f32.xlu0 %v6071
      %v6073 = vpop.xlane.xlu0 %6072
      %v6074 = vsel %vm815, %v6038, 0.0
      %6075 = vadd.xlane.f32.xlu0 %v6074
      %v6076 = vpop.xlane.xlu0 %6075
      %v6077 = vsel %vm815, %v6040, 0.0
      %6078 = vadd.xlane.f32.xlu0 %v6077
      %v6079 = vpop.xlane.xlu0 %6078
      %v6080 = vsel %vm815, %v6042, 0.0
      %6081 = vadd.xlane.f32.xlu0 %v6080
      %v6082 = vpop.xlane.xlu0 %6081
      %v6083 = vsel %vm815, %v6044, 0.0
      %6084 = vadd.xlane.f32.xlu0 %v6083
      %v6085 = vpop.xlane.xlu0 %6084
      %v6086 = vsel %vm815, %v6046, 0.0
      %6087 = vadd.xlane.f32.xlu0 %v6086
      %v6088 = vpop.xlane.xlu0 %6087
      %v6089 = vsel %vm815, %v6048, 0.0
      %6090 = vadd.xlane.f32.xlu0 %v6089
      %v6091 = vpop.xlane.xlu0 %6090
      %v6092 = vsel %vm815, %v6050, 0.0
      %6093 = vadd.xlane.f32.xlu0 %v6092
      %v6094 = vpop.xlane.xlu0 %6093
      %v6095 = vsel %vm815, %v6052, 0.0
      %6096 = vadd.xlane.f32.xlu0 %v6095
      %v6097 = vpop.xlane.xlu0 %6096
      %v6098 = vsel %vm815, %v6054, 0.0
      %6099 = vadd.xlane.f32.xlu0 %v6098
      %v6100 = vpop.xlane.xlu0 %6099
      %v6101 = vsel %vm815, %v6056, 0.0
      %6102 = vadd.xlane.f32.xlu0 %v6101
      %v6103 = vpop.xlane.xlu0 %6102
      %v6104 = vsel %vm815, %v6058, 0.0
      %6105 = vadd.xlane.f32.xlu0 %v6104
      %v6106 = vpop.xlane.xlu0 %6105
      %v6107 = vrcp.pop %v6061
      %v6108 = vmul.f32 %v6061, %v6107
      %v6109 = vsub.f32 1.0, %v6108
      %v6110 = vmul.f32 %v6107, %v6109
      %v6111 = vadd.f32 %v6107, %v6110
      %vm6112 = vweird.f32 %v6061
      %vm6113 = vweird.f32 %v6107
      %vm6114 = vmor %vm6112, %vm6113
      %v6115 = vsel %vm6114, %v6107, %v6111
      %v6116 = vand.u32 2147483647, %v6061
      %vm6117 = vcmp.eq.f32.partialorder %v6116, 8.507059e+37
      %v6118 = vand.u32 %v6061, 2147483648
      %v6119 = vor.u32 1.1754944e-38, %v6118
      %v6120 = vsel %vm6117, %v6119, %v6115
      %v6121 = vrcp.pop %v6064
      %v6122 = vmul.f32 %v6064, %v6121
      %v6123 = vsub.f32 1.0, %v6122
      %v6124 = vmul.f32 %v6121, %v6123
      %v6125 = vadd.f32 %v6121, %v6124
      %vm6126 = vweird.f32 %v6064
      %vm6127 = vweird.f32 %v6121
      %vm6128 = vmor %vm6126, %vm6127
      %v6129 = vsel %vm6128, %v6121, %v6125
      %v6130 = vand.u32 2147483647, %v6064
      %vm6131 = vcmp.eq.f32.partialorder %v6130, 8.507059e+37
      %v6132 = vand.u32 %v6064, 2147483648
      %v6133 = vor.u32 1.1754944e-38, %v6132
      %v6134 = vsel %vm6131, %v6133, %v6129
      %v6135 = vrcp.pop %v6067
      %v6136 = vmul.f32 %v6067, %v6135
      %v6137 = vsub.f32 1.0, %v6136
      %v6138 = vmul.f32 %v6135, %v6137
      %v6139 = vadd.f32 %v6135, %v6138
      %vm6140 = vweird.f32 %v6067
      %vm6141 = vweird.f32 %v6135
      %vm6142 = vmor %vm6140, %vm6141
      %v6143 = vsel %vm6142, %v6135, %v6139
      %v6144 = vand.u32 2147483647, %v6067
      %vm6145 = vcmp.eq.f32.partialorder %v6144, 8.507059e+37
      %v6146 = vand.u32 %v6067, 2147483648
      %v6147 = vor.u32 1.1754944e-38, %v6146
      %v6148 = vsel %vm6145, %v6147, %v6143
      %v6149 = vrcp.pop %v6070
      %v6150 = vmul.f32 %v6070, %v6149
      %v6151 = vsub.f32 1.0, %v6150
      %v6152 = vmul.f32 %v6149, %v6151
      %v6153 = vadd.f32 %v6149, %v6152
      %vm6154 = vweird.f32 %v6070
      %vm6155 = vweird.f32 %v6149
      %vm6156 = vmor %vm6154, %vm6155
      %v6157 = vsel %vm6156, %v6149, %v6153
      %v6158 = vand.u32 2147483647, %v6070
      %vm6159 = vcmp.eq.f32.partialorder %v6158, 8.507059e+37
      %v6160 = vand.u32 %v6070, 2147483648
      %v6161 = vor.u32 1.1754944e-38, %v6160
      %v6162 = vsel %vm6159, %v6161, %v6157
      %v6163 = vrcp.pop %v6073
      %v6164 = vmul.f32 %v6073, %v6163
      %v6165 = vsub.f32 1.0, %v6164
      %v6166 = vmul.f32 %v6163, %v6165
      %v6167 = vadd.f32 %v6163, %v6166
      %vm6168 = vweird.f32 %v6073
      %vm6169 = vweird.f32 %v6163
      %vm6170 = vmor %vm6168, %vm6169
      %v6171 = vsel %vm6170, %v6163, %v6167
      %v6172 = vand.u32 2147483647, %v6073
      %vm6173 = vcmp.eq.f32.partialorder %v6172, 8.507059e+37
      %v6174 = vand.u32 %v6073, 2147483648
      %v6175 = vor.u32 1.1754944e-38, %v6174
      %v6176 = vsel %vm6173, %v6175, %v6171
      %v6177 = vrcp.pop %v6076
      %v6178 = vmul.f32 %v6076, %v6177
      %v6179 = vsub.f32 1.0, %v6178
      %v6180 = vmul.f32 %v6177, %v6179
      %v6181 = vadd.f32 %v6177, %v6180
      %vm6182 = vweird.f32 %v6076
      %vm6183 = vweird.f32 %v6177
      %vm6184 = vmor %vm6182, %vm6183
      %v6185 = vsel %vm6184, %v6177, %v6181
      %v6186 = vand.u32 2147483647, %v6076
      %vm6187 = vcmp.eq.f32.partialorder %v6186, 8.507059e+37
      %v6188 = vand.u32 %v6076, 2147483648
      %v6189 = vor.u32 1.1754944e-38, %v6188
      %v6190 = vsel %vm6187, %v6189, %v6185
      %v6191 = vrcp.pop %v6079
      %v6192 = vmul.f32 %v6079, %v6191
      %v6193 = vsub.f32 1.0, %v6192
      %v6194 = vmul.f32 %v6191, %v6193
      %v6195 = vadd.f32 %v6191, %v6194
      %vm6196 = vweird.f32 %v6079
      %vm6197 = vweird.f32 %v6191
      %vm6198 = vmor %vm6196, %vm6197
      %v6199 = vsel %vm6198, %v6191, %v6195
      %v6200 = vand.u32 2147483647, %v6079
      %vm6201 = vcmp.eq.f32.partialorder %v6200, 8.507059e+37
      %v6202 = vand.u32 %v6079, 2147483648
      %v6203 = vor.u32 1.1754944e-38, %v6202
      %v6204 = vsel %vm6201, %v6203, %v6199
      %v6205 = vrcp.pop %v6082
      %v6206 = vmul.f32 %v6082, %v6205
      %v6207 = vsub.f32 1.0, %v6206
      %v6208 = vmul.f32 %v6205, %v6207
      %v6209 = vadd.f32 %v6205, %v6208
      %vm6210 = vweird.f32 %v6082
      %vm6211 = vweird.f32 %v6205
      %vm6212 = vmor %vm6210, %vm6211
      %v6213 = vsel %vm6212, %v6205, %v6209
      %v6214 = vand.u32 2147483647, %v6082
      %vm6215 = vcmp.eq.f32.partialorder %v6214, 8.507059e+37
      %v6216 = vand.u32 %v6082, 2147483648
      %v6217 = vor.u32 1.1754944e-38, %v6216
      %v6218 = vsel %vm6215, %v6217, %v6213
      %v6219 = vrcp.pop %v6085
      %v6220 = vmul.f32 %v6085, %v6219
      %v6221 = vsub.f32 1.0, %v6220
      %v6222 = vmul.f32 %v6219, %v6221
      %v6223 = vadd.f32 %v6219, %v6222
      %vm6224 = vweird.f32 %v6085
      %vm6225 = vweird.f32 %v6219
      %vm6226 = vmor %vm6224, %vm6225
      %v6227 = vsel %vm6226, %v6219, %v6223
      %v6228 = vand.u32 2147483647, %v6085
      %vm6229 = vcmp.eq.f32.partialorder %v6228, 8.507059e+37
      %v6230 = vand.u32 %v6085, 2147483648
      %v6231 = vor.u32 1.1754944e-38, %v6230
      %v6232 = vsel %vm6229, %v6231, %v6227
      %v6233 = vrcp.pop %v6088
      %v6234 = vmul.f32 %v6088, %v6233
      %v6235 = vsub.f32 1.0, %v6234
      %v6236 = vmul.f32 %v6233, %v6235
      %v6237 = vadd.f32 %v6233, %v6236
      %vm6238 = vweird.f32 %v6088
      %vm6239 = vweird.f32 %v6233
      %vm6240 = vmor %vm6238, %vm6239
      %v6241 = vsel %vm6240, %v6233, %v6237
      %v6242 = vand.u32 2147483647, %v6088
      %vm6243 = vcmp.eq.f32.partialorder %v6242, 8.507059e+37
      %v6244 = vand.u32 %v6088, 2147483648
      %v6245 = vor.u32 1.1754944e-38, %v6244
      %v6246 = vsel %vm6243, %v6245, %v6241
      %v6247 = vrcp.pop %v6091
      %v6248 = vmul.f32 %v6091, %v6247
      %v6249 = vsub.f32 1.0, %v6248
      %v6250 = vmul.f32 %v6247, %v6249
      %v6251 = vadd.f32 %v6247, %v6250
      %vm6252 = vweird.f32 %v6091
      %vm6253 = vweird.f32 %v6247
      %vm6254 = vmor %vm6252, %vm6253
      %v6255 = vsel %vm6254, %v6247, %v6251
      %v6256 = vand.u32 2147483647, %v6091
      %vm6257 = vcmp.eq.f32.partialorder %v6256, 8.507059e+37
      %v6258 = vand.u32 %v6091, 2147483648
      %v6259 = vor.u32 1.1754944e-38, %v6258
      %v6260 = vsel %vm6257, %v6259, %v6255
      %v6261 = vrcp.pop %v6094
      %v6262 = vmul.f32 %v6094, %v6261
      %v6263 = vsub.f32 1.0, %v6262
      %v6264 = vmul.f32 %v6261, %v6263
      %v6265 = vadd.f32 %v6261, %v6264
      %vm6266 = vweird.f32 %v6094
      %vm6267 = vweird.f32 %v6261
      %vm6268 = vmor %vm6266, %vm6267
      %v6269 = vsel %vm6268, %v6261, %v6265
      %v6270 = vand.u32 2147483647, %v6094
      %vm6271 = vcmp.eq.f32.partialorder %v6270, 8.507059e+37
      %v6272 = vand.u32 %v6094, 2147483648
      %v6273 = vor.u32 1.1754944e-38, %v6272
      %v6274 = vsel %vm6271, %v6273, %v6269
      %v6275 = vrcp.pop %v6097
      %v6276 = vmul.f32 %v6097, %v6275
      %v6277 = vsub.f32 1.0, %v6276
      %v6278 = vmul.f32 %v6275, %v6277
      %v6279 = vadd.f32 %v6275, %v6278
      %vm6280 = vweird.f32 %v6097
      %vm6281 = vweird.f32 %v6275
      %vm6282 = vmor %vm6280, %vm6281
      %v6283 = vsel %vm6282, %v6275, %v6279
      %v6284 = vand.u32 2147483647, %v6097
      %vm6285 = vcmp.eq.f32.partialorder %v6284, 8.507059e+37
      %v6286 = vand.u32 %v6097, 2147483648
      %v6287 = vor.u32 1.1754944e-38, %v6286
      %v6288 = vsel %vm6285, %v6287, %v6283
      %v6289 = vrcp.pop %v6100
      %v6290 = vmul.f32 %v6100, %v6289
      %v6291 = vsub.f32 1.0, %v6290
      %v6292 = vmul.f32 %v6289, %v6291
      %v6293 = vadd.f32 %v6289, %v6292
      %vm6294 = vweird.f32 %v6100
      %vm6295 = vweird.f32 %v6289
      %vm6296 = vmor %vm6294, %vm6295
      %v6297 = vsel %vm6296, %v6289, %v6293
      %v6298 = vand.u32 2147483647, %v6100
      %vm6299 = vcmp.eq.f32.partialorder %v6298, 8.507059e+37
      %v6300 = vand.u32 %v6100, 2147483648
      %v6301 = vor.u32 1.1754944e-38, %v6300
      %v6302 = vsel %vm6299, %v6301, %v6297
      %v6303 = vrcp.pop %v6103
      %v6304 = vmul.f32 %v6103, %v6303
      %v6305 = vsub.f32 1.0, %v6304
      %v6306 = vmul.f32 %v6303, %v6305
      %v6307 = vadd.f32 %v6303, %v6306
      %vm6308 = vweird.f32 %v6103
      %vm6309 = vweird.f32 %v6303
      %vm6310 = vmor %vm6308, %vm6309
      %v6311 = vsel %vm6310, %v6303, %v6307
      %v6312 = vand.u32 2147483647, %v6103
      %vm6313 = vcmp.eq.f32.partialorder %v6312, 8.507059e+37
      %v6314 = vand.u32 %v6103, 2147483648
      %v6315 = vor.u32 1.1754944e-38, %v6314
      %v6316 = vsel %vm6313, %v6315, %v6311
      %v6317 = vrcp.pop %v6106
      %v6318 = vmul.f32 %v6106, %v6317
      %v6319 = vsub.f32 1.0, %v6318
      %v6320 = vmul.f32 %v6317, %v6319
      %v6321 = vadd.f32 %v6317, %v6320
      %vm6322 = vweird.f32 %v6106
      %vm6323 = vweird.f32 %v6317
      %vm6324 = vmor %vm6322, %vm6323
      %v6325 = vsel %vm6324, %v6317, %v6321
      %v6326 = vand.u32 2147483647, %v6106
      %vm6327 = vcmp.eq.f32.partialorder %v6326, 8.507059e+37
      %v6328 = vand.u32 %v6106, 2147483648
      %v6329 = vor.u32 1.1754944e-38, %v6328
      %v6330 = vsel %vm6327, %v6329, %v6325
      %v6331 = vmul.f32 %v6028, %v6120
      %v6332 = vmul.f32 %v6030, %v6134
      %v6333 = vmul.f32 %v6032, %v6148
      %v6334 = vmul.f32 %v6034, %v6162
      %v6335 = vmul.f32 %v6036, %v6176
      %v6336 = vmul.f32 %v6038, %v6190
      %v6337 = vmul.f32 %v6040, %v6204
      %v6338 = vmul.f32 %v6042, %v6218
      %v6339 = vmul.f32 %v6044, %v6232
      %v6340 = vmul.f32 %v6046, %v6246
      %v6341 = vmul.f32 %v6048, %v6260
      %v6342 = vmul.f32 %v6050, %v6274
      %v6343 = vmul.f32 %v6052, %v6288
      %v6344 = vmul.f32 %v6054, %v6302
      %v6345 = vmul.f32 %v6056, %v6316
      %v6346 = vmul.f32 %v6058, %v6330
      %v6347 = vpack.c.bf16 %v6331, %v6331
      %v6348 = vpack.c.bf16 %v6332, %v6332
      %v6349 = vpack.c.bf16 %v6333, %v6333
      %v6350 = vpack.c.bf16 %v6334, %v6334
      %v6351 = vpack.c.bf16 %v6335, %v6335
      %v6352 = vpack.c.bf16 %v6336, %v6336
      %v6353 = vpack.c.bf16 %v6337, %v6337
      %v6354 = vpack.c.bf16 %v6338, %v6338
      %v6355 = vpack.c.bf16 %v6339, %v6339
      %v6356 = vpack.c.bf16 %v6340, %v6340
      %v6357 = vpack.c.bf16 %v6341, %v6341
      %v6358 = vpack.c.bf16 %v6342, %v6342
      %v6359 = vpack.c.bf16 %v6343, %v6343
      %v6360 = vpack.c.bf16 %v6344, %v6344
      %v6361 = vpack.c.bf16 %v6345, %v6345
      %v6362 = vpack.c.bf16 %v6346, %v6346
      %v6365 = vunpack.c.l.b16 %v5547
      %v6366 = vunpack.c.l.b16 %v5548
      %v6367 = vpack.c.b16 %v6366, %v6365
      %v6370 = vsel %vm815, %v6347, 0
      %6372 = vmatpush.bf16.msra.mxu0 0
      %6373 = vmatpush.bf16.msra.mxu0 0
      %6374 = vmatpush.bf16.msra.mxu0 0
      %6375 = vmatpush.bf16.msra.mxu0 0
      %6376 = vmatpush.bf16.msra.mxu0 0
      %6377 = vmatpush.bf16.msra.mxu0 0
      %6378 = vmatpush.bf16.msra.mxu0 0
      %6379 = vmatpush.bf16.msra.mxu0 %v6367
      %6380 = vmatmul.bf16.gmra.mxu0 %v6370
      %v6381 = vpop.f32.mrf.mxu0
      %v6382 = vadd.f32 0.0, %v6381
      %v6383 = vpop.f32.mrf.mxu0
      %6384 = vdwg.mxu0
      %v6387 = vunpack.c.l.b16 %v5549
      %v6388 = vunpack.c.l.b16 %v5550
      %v6389 = vpack.c.b16 %v6388, %v6387
      %v6392 = vsel %vm815, %v6348, 0
      %6394 = vmatpush.bf16.msra.mxu0 0
      %6395 = vmatpush.bf16.msra.mxu0 0
      %6396 = vmatpush.bf16.msra.mxu0 0
      %6397 = vmatpush.bf16.msra.mxu0 0
      %6398 = vmatpush.bf16.msra.mxu0 0
      %6399 = vmatpush.bf16.msra.mxu0 0
      %6400 = vmatpush.bf16.msra.mxu0 0
      %6401 = vmatpush.bf16.msra.mxu0 %v6389
      %6402 = vmatmul.bf16.gmra.mxu0 %v6392
      %v6403 = vpop.f32.mrf.mxu0
      %v6404 = vadd.f32 0.0, %v6403
      %v6405 = vpop.f32.mrf.mxu0
      %6406 = vdwg.mxu0
      %v6409 = vunpack.c.l.b16 %v5551
      %v6410 = vunpack.c.l.b16 %v5552
      %v6411 = vpack.c.b16 %v6410, %v6409
      %v6414 = vsel %vm815, %v6349, 0
      %6416 = vmatpush.bf16.msra.mxu0 0
      %6417 = vmatpush.bf16.msra.mxu0 0
      %6418 = vmatpush.bf16.msra.mxu0 0
      %6419 = vmatpush.bf16.msra.mxu0 0
      %6420 = vmatpush.bf16.msra.mxu0 0
      %6421 = vmatpush.bf16.msra.mxu0 0
      %6422 = vmatpush.bf16.msra.mxu0 0
      %6423 = vmatpush.bf16.msra.mxu0 %v6411
      %6424 = vmatmul.bf16.gmra.mxu0 %v6414
      %v6425 = vpop.f32.mrf.mxu0
      %v6426 = vadd.f32 0.0, %v6425
      %v6427 = vpop.f32.mrf.mxu0
      %6428 = vdwg.mxu0
      %v6431 = vunpack.c.l.b16 %v5553
      %v6432 = vunpack.c.l.b16 %v5554
      %v6433 = vpack.c.b16 %v6432, %v6431
      %v6436 = vsel %vm815, %v6350, 0
      %6438 = vmatpush.bf16.msra.mxu0 0
      %6439 = vmatpush.bf16.msra.mxu0 0
      %6440 = vmatpush.bf16.msra.mxu0 0
      %6441 = vmatpush.bf16.msra.mxu0 0
      %6442 = vmatpush.bf16.msra.mxu0 0
      %6443 = vmatpush.bf16.msra.mxu0 0
      %6444 = vmatpush.bf16.msra.mxu0 0
      %6445 = vmatpush.bf16.msra.mxu0 %v6433
      %6446 = vmatmul.bf16.gmra.mxu0 %v6436
      %v6447 = vpop.f32.mrf.mxu0
      %v6448 = vadd.f32 0.0, %v6447
      %v6449 = vpop.f32.mrf.mxu0
      %6450 = vdwg.mxu0
      %v6453 = vunpack.c.l.b16 %v5555
      %v6454 = vunpack.c.l.b16 %v5556
      %v6455 = vpack.c.b16 %v6454, %v6453
      %v6458 = vsel %vm815, %v6351, 0
      %6460 = vmatpush.bf16.msra.mxu0 0
      %6461 = vmatpush.bf16.msra.mxu0 0
      %6462 = vmatpush.bf16.msra.mxu0 0
      %6463 = vmatpush.bf16.msra.mxu0 0
      %6464 = vmatpush.bf16.msra.mxu0 0
      %6465 = vmatpush.bf16.msra.mxu0 0
      %6466 = vmatpush.bf16.msra.mxu0 0
      %6467 = vmatpush.bf16.msra.mxu0 %v6455
      %6468 = vmatmul.bf16.gmra.mxu0 %v6458
      %v6469 = vpop.f32.mrf.mxu0
      %v6470 = vadd.f32 0.0, %v6469
      %v6471 = vpop.f32.mrf.mxu0
      %6472 = vdwg.mxu0
      %v6475 = vunpack.c.l.b16 %v5557
      %v6476 = vunpack.c.l.b16 %v5558
      %v6477 = vpack.c.b16 %v6476, %v6475
      %v6480 = vsel %vm815, %v6352, 0
      %6482 = vmatpush.bf16.msra.mxu0 0
      %6483 = vmatpush.bf16.msra.mxu0 0
      %6484 = vmatpush.bf16.msra.mxu0 0
      %6485 = vmatpush.bf16.msra.mxu0 0
      %6486 = vmatpush.bf16.msra.mxu0 0
      %6487 = vmatpush.bf16.msra.mxu0 0
      %6488 = vmatpush.bf16.msra.mxu0 0
      %6489 = vmatpush.bf16.msra.mxu0 %v6477
      %6490 = vmatmul.bf16.gmra.mxu0 %v6480
      %v6491 = vpop.f32.mrf.mxu0
      %v6492 = vadd.f32 0.0, %v6491
      %v6493 = vpop.f32.mrf.mxu0
      %6494 = vdwg.mxu0
      %v6497 = vunpack.c.l.b16 %v5559
      %v6498 = vunpack.c.l.b16 %v5560
      %v6499 = vpack.c.b16 %v6498, %v6497
      %v6502 = vsel %vm815, %v6353, 0
      %6504 = vmatpush.bf16.msra.mxu0 0
      %6505 = vmatpush.bf16.msra.mxu0 0
      %6506 = vmatpush.bf16.msra.mxu0 0
      %6507 = vmatpush.bf16.msra.mxu0 0
      %6508 = vmatpush.bf16.msra.mxu0 0
      %6509 = vmatpush.bf16.msra.mxu0 0
      %6510 = vmatpush.bf16.msra.mxu0 0
      %6511 = vmatpush.bf16.msra.mxu0 %v6499
      %6512 = vmatmul.bf16.gmra.mxu0 %v6502
      %v6513 = vpop.f32.mrf.mxu0
      %v6514 = vadd.f32 0.0, %v6513
      %v6515 = vpop.f32.mrf.mxu0
      %6516 = vdwg.mxu0
      %v6519 = vunpack.c.l.b16 %v5561
      %v6520 = vunpack.c.l.b16 %v5562
      %v6521 = vpack.c.b16 %v6520, %v6519
      %v6524 = vsel %vm815, %v6354, 0
      %6526 = vmatpush.bf16.msra.mxu0 0
      %6527 = vmatpush.bf16.msra.mxu0 0
      %6528 = vmatpush.bf16.msra.mxu0 0
      %6529 = vmatpush.bf16.msra.mxu0 0
      %6530 = vmatpush.bf16.msra.mxu0 0
      %6531 = vmatpush.bf16.msra.mxu0 0
      %6532 = vmatpush.bf16.msra.mxu0 0
      %6533 = vmatpush.bf16.msra.mxu0 %v6521
      %6534 = vmatmul.bf16.gmra.mxu0 %v6524
      %v6535 = vpop.f32.mrf.mxu0
      %v6536 = vadd.f32 0.0, %v6535
      %v6537 = vpop.f32.mrf.mxu0
      %6538 = vdwg.mxu0
      %v6541 = vunpack.c.l.b16 %v5563
      %v6542 = vunpack.c.l.b16 %v5564
      %v6543 = vpack.c.b16 %v6542, %v6541
      %v6546 = vsel %vm815, %v6355, 0
      %6548 = vmatpush.bf16.msra.mxu0 0
      %6549 = vmatpush.bf16.msra.mxu0 0
      %6550 = vmatpush.bf16.msra.mxu0 0
      %6551 = vmatpush.bf16.msra.mxu0 0
      %6552 = vmatpush.bf16.msra.mxu0 0
      %6553 = vmatpush.bf16.msra.mxu0 0
      %6554 = vmatpush.bf16.msra.mxu0 0
      %6555 = vmatpush.bf16.msra.mxu0 %v6543
      %6556 = vmatmul.bf16.gmra.mxu0 %v6546
      %v6557 = vpop.f32.mrf.mxu0
      %v6558 = vadd.f32 0.0, %v6557
      %v6559 = vpop.f32.mrf.mxu0
      %6560 = vdwg.mxu0
      %v6563 = vunpack.c.l.b16 %v5565
      %v6564 = vunpack.c.l.b16 %v5566
      %v6565 = vpack.c.b16 %v6564, %v6563
      %v6568 = vsel %vm815, %v6356, 0
      %6570 = vmatpush.bf16.msra.mxu0 0
      %6571 = vmatpush.bf16.msra.mxu0 0
      %6572 = vmatpush.bf16.msra.mxu0 0
      %6573 = vmatpush.bf16.msra.mxu0 0
      %6574 = vmatpush.bf16.msra.mxu0 0
      %6575 = vmatpush.bf16.msra.mxu0 0
      %6576 = vmatpush.bf16.msra.mxu0 0
      %6577 = vmatpush.bf16.msra.mxu0 %v6565
      %6578 = vmatmul.bf16.gmra.mxu0 %v6568
      %v6579 = vpop.f32.mrf.mxu0
      %v6580 = vadd.f32 0.0, %v6579
      %v6581 = vpop.f32.mrf.mxu0
      %6582 = vdwg.mxu0
      %v6585 = vunpack.c.l.b16 %v5567
      %v6586 = vunpack.c.l.b16 %v5568
      %v6587 = vpack.c.b16 %v6586, %v6585
      %v6590 = vsel %vm815, %v6357, 0
      %6592 = vmatpush.bf16.msra.mxu0 0
      %6593 = vmatpush.bf16.msra.mxu0 0
      %6594 = vmatpush.bf16.msra.mxu0 0
      %6595 = vmatpush.bf16.msra.mxu0 0
      %6596 = vmatpush.bf16.msra.mxu0 0
      %6597 = vmatpush.bf16.msra.mxu0 0
      %6598 = vmatpush.bf16.msra.mxu0 0
      %6599 = vmatpush.bf16.msra.mxu0 %v6587
      %6600 = vmatmul.bf16.gmra.mxu0 %v6590
      %v6601 = vpop.f32.mrf.mxu0
      %v6602 = vadd.f32 0.0, %v6601
      %v6603 = vpop.f32.mrf.mxu0
      %6604 = vdwg.mxu0
      %v6607 = vunpack.c.l.b16 %v5569
      %v6608 = vunpack.c.l.b16 %v5570
      %v6609 = vpack.c.b16 %v6608, %v6607
      %v6612 = vsel %vm815, %v6358, 0
      %6614 = vmatpush.bf16.msra.mxu0 0
      %6615 = vmatpush.bf16.msra.mxu0 0
      %6616 = vmatpush.bf16.msra.mxu0 0
      %6617 = vmatpush.bf16.msra.mxu0 0
      %6618 = vmatpush.bf16.msra.mxu0 0
      %6619 = vmatpush.bf16.msra.mxu0 0
      %6620 = vmatpush.bf16.msra.mxu0 0
      %6621 = vmatpush.bf16.msra.mxu0 %v6609
      %6622 = vmatmul.bf16.gmra.mxu0 %v6612
      %v6623 = vpop.f32.mrf.mxu0
      %v6624 = vadd.f32 0.0, %v6623
      %v6625 = vpop.f32.mrf.mxu0
      %6626 = vdwg.mxu0
      %v6629 = vunpack.c.l.b16 %v5571
      %v6630 = vunpack.c.l.b16 %v5572
      %v6631 = vpack.c.b16 %v6630, %v6629
      %v6634 = vsel %vm815, %v6359, 0
      %6636 = vmatpush.bf16.msra.mxu0 0
      %6637 = vmatpush.bf16.msra.mxu0 0
      %6638 = vmatpush.bf16.msra.mxu0 0
      %6639 = vmatpush.bf16.msra.mxu0 0
      %6640 = vmatpush.bf16.msra.mxu0 0
      %6641 = vmatpush.bf16.msra.mxu0 0
      %6642 = vmatpush.bf16.msra.mxu0 0
      %6643 = vmatpush.bf16.msra.mxu0 %v6631
      %6644 = vmatmul.bf16.gmra.mxu0 %v6634
      %v6645 = vpop.f32.mrf.mxu0
      %v6646 = vadd.f32 0.0, %v6645
      %v6647 = vpop.f32.mrf.mxu0
      %6648 = vdwg.mxu0
      %v6651 = vunpack.c.l.b16 %v5573
      %v6652 = vunpack.c.l.b16 %v5574
      %v6653 = vpack.c.b16 %v6652, %v6651
      %v6656 = vsel %vm815, %v6360, 0
      %6658 = vmatpush.bf16.msra.mxu0 0
      %6659 = vmatpush.bf16.msra.mxu0 0
      %6660 = vmatpush.bf16.msra.mxu0 0
      %6661 = vmatpush.bf16.msra.mxu0 0
      %6662 = vmatpush.bf16.msra.mxu0 0
      %6663 = vmatpush.bf16.msra.mxu0 0
      %6664 = vmatpush.bf16.msra.mxu0 0
      %6665 = vmatpush.bf16.msra.mxu0 %v6653
      %6666 = vmatmul.bf16.gmra.mxu0 %v6656
      %v6667 = vpop.f32.mrf.mxu0
      %v6668 = vadd.f32 0.0, %v6667
      %v6669 = vpop.f32.mrf.mxu0
      %6670 = vdwg.mxu0
      %v6673 = vunpack.c.l.b16 %v5575
      %v6674 = vunpack.c.l.b16 %v5576
      %v6675 = vpack.c.b16 %v6674, %v6673
      %v6678 = vsel %vm815, %v6361, 0
      %6680 = vmatpush.bf16.msra.mxu0 0
      %6681 = vmatpush.bf16.msra.mxu0 0
      %6682 = vmatpush.bf16.msra.mxu0 0
      %6683 = vmatpush.bf16.msra.mxu0 0
      %6684 = vmatpush.bf16.msra.mxu0 0
      %6685 = vmatpush.bf16.msra.mxu0 0
      %6686 = vmatpush.bf16.msra.mxu0 0
      %6687 = vmatpush.bf16.msra.mxu0 %v6675
      %6688 = vmatmul.bf16.gmra.mxu0 %v6678
      %v6689 = vpop.f32.mrf.mxu0
      %v6690 = vadd.f32 0.0, %v6689
      %v6691 = vpop.f32.mrf.mxu0
      %6692 = vdwg.mxu0
      %v6695 = vunpack.c.l.b16 %v5577
      %v6696 = vunpack.c.l.b16 %v5578
      %v6697 = vpack.c.b16 %v6696, %v6695
      %v6700 = vsel %vm815, %v6362, 0
      %6702 = vmatpush.bf16.msra.mxu0 0
      %6703 = vmatpush.bf16.msra.mxu0 0
      %6704 = vmatpush.bf16.msra.mxu0 0
      %6705 = vmatpush.bf16.msra.mxu0 0
      %6706 = vmatpush.bf16.msra.mxu0 0
      %6707 = vmatpush.bf16.msra.mxu0 0
      %6708 = vmatpush.bf16.msra.mxu0 0
      %6709 = vmatpush.bf16.msra.mxu0 %v6697
      %6710 = vmatmul.bf16.gmra.mxu0 %v6700
      %v6711 = vpop.f32.mrf.mxu0
      %v6712 = vadd.f32 0.0, %v6711
      %v6713 = vpop.f32.mrf.mxu0
      %6714 = vdwg.mxu0
      %v6715 = vpack.c.bf16 %v6404, %v6382
      %v6716 = vpack.c.bf16 %v6448, %v6426
      %v6717 = vpack.c.bf16 %v6492, %v6470
      %v6718 = vpack.c.bf16 %v6536, %v6514
      %v6719 = vpack.c.bf16 %v6580, %v6558
      %v6720 = vpack.c.bf16 %v6624, %v6602
      %v6721 = vpack.c.bf16 %v6668, %v6646
      %v6722 = vpack.c.bf16 %v6712, %v6690
      %v6725 = vunpack.c.l.b16 %v5234
      %v6726 = vunpack.c.l.b16 %v5235
      %v6727 = vpack.c.b16 %v6726, %v6725
      %v6730 = vsel %vm815, %v6715, 0
      %v6733 = vsel %vm815, %v6716, 0
      %v6736 = vsel %vm815, %v6717, 0
      %v6739 = vsel %vm815, %v6718, 0
      %v6742 = vsel %vm815, %v6719, 0
      %v6745 = vsel %vm815, %v6720, 0
      %v6748 = vsel %vm815, %v6721, 0
      %v6751 = vsel %vm815, %v6722, 0
      %6753 = vmatpush.bf16.msra.mxu0 0
      %6754 = vmatpush.bf16.msra.mxu0 0
      %6755 = vmatpush.bf16.msra.mxu0 0
      %6756 = vmatpush.bf16.msra.mxu0 0
      %6757 = vmatpush.bf16.msra.mxu0 0
      %6758 = vmatpush.bf16.msra.mxu0 0
      %6759 = vmatpush.bf16.msra.mxu0 0
      %6760 = vmatpush.bf16.msra.mxu0 %v6727
      %6761 = vmatmul.bf16.gmra.mxu0 %v6730
      %v6762 = vpop.f32.mrf.mxu0
      %v6763 = vadd.f32 0.0, %v6762
      %v6764 = vpop.f32.mrf.mxu0
      %v6765 = vadd.f32 0.0, %v6764
      %6766 = vmatmul.bf16.gmra.mxu0 %v6733
      %v6767 = vpop.f32.mrf.mxu0
      %v6768 = vadd.f32 0.0, %v6767
      %v6769 = vpop.f32.mrf.mxu0
      %v6770 = vadd.f32 0.0, %v6769
      %6771 = vmatmul.bf16.gmra.mxu0 %v6736
      %v6772 = vpop.f32.mrf.mxu0
      %v6773 = vadd.f32 0.0, %v6772
      %v6774 = vpop.f32.mrf.mxu0
      %v6775 = vadd.f32 0.0, %v6774
      %6776 = vmatmul.bf16.gmra.mxu0 %v6739
      %v6777 = vpop.f32.mrf.mxu0
      %v6778 = vadd.f32 0.0, %v6777
      %v6779 = vpop.f32.mrf.mxu0
      %v6780 = vadd.f32 0.0, %v6779
      %6781 = vmatmul.bf16.gmra.mxu0 %v6742
      %v6782 = vpop.f32.mrf.mxu0
      %v6783 = vadd.f32 0.0, %v6782
      %v6784 = vpop.f32.mrf.mxu0
      %v6785 = vadd.f32 0.0, %v6784
      %6786 = vmatmul.bf16.gmra.mxu0 %v6745
      %v6787 = vpop.f32.mrf.mxu0
      %v6788 = vadd.f32 0.0, %v6787
      %v6789 = vpop.f32.mrf.mxu0
      %v6790 = vadd.f32 0.0, %v6789
      %6791 = vmatmul.bf16.gmra.mxu0 %v6748
      %v6792 = vpop.f32.mrf.mxu0
      %v6793 = vadd.f32 0.0, %v6792
      %v6794 = vpop.f32.mrf.mxu0
      %v6795 = vadd.f32 0.0, %v6794
      %6796 = vmatmul.bf16.gmra.mxu0 %v6751
      %v6797 = vpop.f32.mrf.mxu0
      %v6798 = vadd.f32 0.0, %v6797
      %v6799 = vpop.f32.mrf.mxu0
      %v6800 = vadd.f32 0.0, %v6799
      %6801 = vdwg.mxu0
      %v6802 = vadd.f32 %v5202, %v6763
      %v6803 = vadd.f32 %v5203, %v6765
      %v6804 = vadd.f32 %v5204, %v6768
      %v6805 = vadd.f32 %v5205, %v6770
      %v6806 = vadd.f32 %v5206, %v6773
      %v6807 = vadd.f32 %v5207, %v6775
      %v6808 = vadd.f32 %v5208, %v6778
      %v6809 = vadd.f32 %v5209, %v6780
      %v6810 = vadd.f32 %v5210, %v6783
      %v6811 = vadd.f32 %v5211, %v6785
      %v6812 = vadd.f32 %v5212, %v6788
      %v6813 = vadd.f32 %v5213, %v6790
      %v6814 = vadd.f32 %v5214, %v6793
      %v6815 = vadd.f32 %v5215, %v6795
      %v6816 = vadd.f32 %v5216, %v6798
      %v6817 = vadd.f32 %v5217, %v6800
      %v6818 = vld [vmem:[%s6] sm:$0x1]
      %v6820 = vperm.slane %v6818, 0
      %v6822 = vadd.f32 %v6802, %v6820
      %v6823 = vadd.f32 %v6803, %v6820
      %v6824 = vadd.f32 %v6804, %v6820
      %v6825 = vadd.f32 %v6805, %v6820
      %v6826 = vadd.f32 %v6806, %v6820
      %v6827 = vadd.f32 %v6807, %v6820
      %v6828 = vadd.f32 %v6808, %v6820
      %v6829 = vadd.f32 %v6809, %v6820
      %v6830 = vadd.f32 %v6810, %v6820
      %v6831 = vadd.f32 %v6811, %v6820
      %v6832 = vadd.f32 %v6812, %v6820
      %v6833 = vadd.f32 %v6813, %v6820
      %v6834 = vadd.f32 %v6814, %v6820
      %v6835 = vadd.f32 %v6815, %v6820
      %v6836 = vadd.f32 %v6816, %v6820
      %v6837 = vadd.f32 %v6817, %v6820
      %6838 = vst.msk [vmem:[%s305] sm:$0xff] %vm406, %v6822
      %6839 = vst.msk [vmem:[%s305 + $0x8] sm:$0xff] %vm406, %v6823
      %6840 = vst.msk [vmem:[%s305 + $0x10] sm:$0xff] %vm406, %v6824
      %6841 = vst.msk [vmem:[%s305 + $0x18] sm:$0xff] %vm406, %v6825
      %6842 = vst.msk [vmem:[%s305 + $0x20] sm:$0xff] %vm406, %v6826
      %6843 = vst.msk [vmem:[%s305 + $0x28] sm:$0xff] %vm406, %v6827
      %6844 = vst.msk [vmem:[%s305 + $0x30] sm:$0xff] %vm406, %v6828
      %6845 = vst.msk [vmem:[%s305 + $0x38] sm:$0xff] %vm406, %v6829
      %6846 = vst.msk [vmem:[%s305 + $0x40] sm:$0xff] %vm406, %v6830
      %6847 = vst.msk [vmem:[%s305 + $0x48] sm:$0xff] %vm406, %v6831
      %6848 = vst.msk [vmem:[%s305 + $0x50] sm:$0xff] %vm406, %v6832
      %6849 = vst.msk [vmem:[%s305 + $0x58] sm:$0xff] %vm406, %v6833
      %6850 = vst.msk [vmem:[%s305 + $0x60] sm:$0xff] %vm406, %v6834
      %6851 = vst.msk [vmem:[%s305 + $0x68] sm:$0xff] %vm406, %v6835
      %6852 = vst.msk [vmem:[%s305 + $0x70] sm:$0xff] %vm406, %v6836
      %6853 = vst.msk [vmem:[%s305 + $0x78] sm:$0xff] %vm406, %v6837
      %s6854 = smul.u32 16, %s18
      %p6855 = scmp.lt.s32.totalorder %s6854, 63
      %s6856 = scalar_select %p6855, %s6854, 63
      %s6857 = smul.addr %s6856, 8
      %s6858 = scalar_lea.vmem %s7, %s6857
      // Predicated region
      $region49: #{tpu_custom_call.1} parent=47 // pred_check
        %p6859 = pneg %p193
      $region50: #{tpu_custom_call.1} parent=47 // pred_check_branch
        %6861 = sbr.rel (%p6859) target = $region52
      $region51: #{tpu_custom_call.1} parent=47 // pred_region
        %s6862 = smul.u32 16, %s18
      $region52: #{tpu_custom_call.1} parent=47 // pred_fallthru
        _
    $region48: #{tpu_custom_call.1} parent=5 // pred_fallthru
      _
    %p6863 = scmp.le.s32.totalorder 2, %s13
    // Predicated region
    $region53: #{tpu_custom_call.1} parent=5 // pred_check
      %p6864 = pneg %p6863
    $region54: #{tpu_custom_call.1} parent=5 // pred_check_branch
      %6866 = sbr.rel (%p6864) target = $region56
    $region55: #{tpu_custom_call.1} parent=5 // pred_region
      %s6867 = ssub.s32 %s13, 2
      // Predicated region
      $region57: #{tpu_custom_call.1} parent=55 // pred_check
        %p6868 = pneg %p199
      $region58: #{tpu_custom_call.1} parent=55 // pred_check_branch
        %6870 = sbr.rel (%p6868) target = $region60
      $region59: #{tpu_custom_call.1} parent=55 // pred_region
        %s6871 = smul.u32 16, %s19
        %p6872 = scmp.lt.s32.totalorder %s6871, 63
        %s6873 = scalar_select %p6872, %s6871, 63
        %s6874 = smul.addr %s6873, 8
        %s6875 = scalar_lea.vmem %s7, %s6874
      $region60: #{tpu_custom_call.1} parent=55 // pred_fallthru
        _
    $region56: #{tpu_custom_call.1} parent=5 // pred_fallthru
      _
  $region6: #{tpu_custom_call.1} parent=0 // loop_footer
    %s17 = sadd.s32 1, %s13
  $region7: #{tpu_custom_call.1} parent=0 // loop_footer_branch
    %12 = sbr.rel target = $region3
  $region8: #{tpu_custom_call.1} parent=0 // loop_exit
    _

</llo_original>
